<compile_context>
chip_gen: v7x
topology: tpu7x:2x2x1
jax: 0.10.0
libtpu: 0.0.40
codegen_flags: <defaults>
</compile_context>

<pallas_src>
import math

import jax
import jax.numpy as jnp
from jax.experimental import pallas as pl
from jax.experimental.pallas import tpu as pltpu

EPS = 1e-5                  # InstanceNorm2d default eps
SLOPE = 0.2                 # LeakyReLU negative slope
MXU_DTYPE = jnp.bfloat16    # MXU operand dtype (f32 accumulation on the MXU)


# ----------------------------- in-kernel helpers ----------------------------

def _leaky_relu(x):
    return jnp.where(x > 0, x, SLOPE * x)


def _instance_norm_rows(acc):
    # acc: (H*W, C) f32 for ONE sample; per-channel normalization over spatial.
    # One-pass statistics: var = E[x^2] - mean^2 (biased var, PyTorch IN).
    mean = jnp.mean(acc, axis=0, keepdims=True)
    msq = jnp.mean(acc * acc, axis=0, keepdims=True)
    var = jnp.maximum(msq - mean * mean, 0.0)
    return (acc - mean) * jax.lax.rsqrt(var + EPS)


# ------------------------------ Pallas kernels ------------------------------

def _conv_s2_in_lrelu_kernel(p00_ref, p01_ref, p10_ref, p11_ref, w_ref, o_ref,
                             tap_ref):
    """EncoderBlock.conv: 3x3/stride-2/pad-1 conv + InstanceNorm + LeakyReLU.

    One batch sample per grid step.  The stride-2 conv is computed from the
    four parity (space-to-depth) planes of the zero-padded input (no im2col
    duplication in HBM).  The 9 taps are gathered into ONE (H*W, 9*Cin) bf16
    VMEM buffer and contracted in a single MXU matmul.  Conv bias is omitted:
    it is exactly cancelled by InstanceNorm(affine=False).
    """
    _, Ho, Wo, Cout = o_ref.shape
    Cin = p00_ref.shape[-1]
    HW = Ho * Wo
    planes = (p00_ref[0], p01_ref[0], p10_ref[0], p11_ref[0])  # (Ho+1,Wo+1,Cin)

    #   o[i,j] = sum_{ky,kx} xpad[2i+ky, 2j+kx] @ w[ky,kx]
    #          = sum_{ky,kx} plane[ky%2, kx%2][i+ky//2, j+kx//2] @ w[ky,kx]
    for t in range(9):
        ky, kx = divmod(t, 3)
        qy, py = divmod(ky, 2)
        qx, px = divmod(kx, 2)
        sl = planes[py * 2 + px][qy:qy + Ho, qx:qx + Wo, :]
        tap_ref[:, t * Cin:(t + 1) * Cin] = sl.reshape(HW, Cin)

    acc = jnp.dot(tap_ref[...], w_ref[...], preferred_element_type=jnp.float32)
    y = _leaky_relu(_instance_norm_rows(acc))
    o_ref[...] = y.reshape(1, Ho, Wo, Cout)


def _residual_block_kernel(y_ref, w1_ref, w2_ref, gate_ref, g_ref, o_ref,
                           xpad_ref, tap_ref, spad_ref):
    """Whole ResidualBlock fused (one sample per grid step, all in VMEM):

        t   = LeakyReLU(IN(conv1(y)))
        o2  = IN(conv2(t))
        pre = o2 * se_gate + y            # SE gate is a per-channel constant
        out = LeakyReLU(gauss5x5_depthwise(pre))

    The intermediate t never touches HBM; the residual is the kernel's own
    input y.  Conv biases omitted (cancelled by InstanceNorm).
    """
    _, Ho, Wo, C = y_ref.shape
    HW = Ho * Wo

    y = y_ref[0]                                          # (Ho, Wo, C) f32

    # --- 1-wide zero halo in a bf16 scratch: zero border strips only --------
    xpad_ref[0:1, :, :] = jnp.zeros((1, Wo + 2, C), MXU_DTYPE)
    xpad_ref[Ho + 1:Ho + 2, :, :] = jnp.zeros((1, Wo + 2, C), MXU_DTYPE)
    xpad_ref[:, 0:1, :] = jnp.zeros((Ho + 2, 1, C), MXU_DTYPE)
    xpad_ref[:, Wo + 1:Wo + 2, :] = jnp.zeros((Ho + 2, 1, C), MXU_DTYPE)
    xpad_ref[1:Ho + 1, 1:Wo + 1, :] = y.astype(MXU_DTYPE)

    def conv3x3(w_ref):
        # Gather the 9 shifted taps into one (HW, 9C) bf16 matrix, then a
        # single MXU matmul with K = 9C (instead of 9 small K=C dots).
        for t in range(9):
            ky, kx = divmod(t, 3)
            tap_ref[:, t * C:(t + 1) * C] = (
                xpad_ref[ky:ky + Ho, kx:kx + Wo, :].reshape(HW, C))
        return jnp.dot(tap_ref[...], w_ref[...],
                       preferred_element_type=jnp.float32)

    # --- conv1 + InstanceNorm + LeakyReLU ------------------------------------
    t1 = _leaky_relu(_instance_norm_rows(conv3x3(w1_ref)))

    # --- conv2 + InstanceNorm (reuse halo scratch; borders are still zero) ---
    xpad_ref[1:Ho + 1, 1:Wo + 1, :] = t1.reshape(Ho, Wo, C).astype(MXU_DTYPE)
    o2 = _instance_norm_rows(conv3x3(w2_ref))

    # --- SE (per-channel constant gate) + residual add -----------------------
    pre = o2 * gate_ref[...] + y.reshape(HW, C)

    # --- separable 5x5 Gaussian depthwise smoothing, 2-wide zero halo --------
    # TODO(synk): arbitrary *trained* per-channel 5x5 depthwise weights need a
    # general 25-tap (C,5,5) path; the separable form is exact for the Gaussian
    # initialization used by SmoothingLayer.
    spad_ref[0:2, :, :] = jnp.zeros((2, Wo + 4, C), jnp.float32)
    spad_ref[Ho + 2:Ho + 4, :, :] = jnp.zeros((2, Wo + 4, C), jnp.float32)
    spad_ref[:, 0:2, :] = jnp.zeros((Ho + 4, 2, C), jnp.float32)
    spad_ref[:, Wo + 2:Wo + 4, :] = jnp.zeros((Ho + 4, 2, C), jnp.float32)
    spad_ref[2:Ho + 2, 2:Wo + 2, :] = pre.reshape(Ho, Wo, C)

    # TODO(synk): for large tiles, process the vertical pass in 8-row strips
    # (lax.fori_loop, unroll=True) to bound vreg pressure.
    v = g_ref[0] * spad_ref[0:Ho, :, :]                   # vertical pass
    for k in range(1, 5):
        v = v + g_ref[k] * spad_ref[k:k + Ho, :, :]       # (Ho, Wo+4, C)
    h = g_ref[0] * v[:, 0:Wo, :]                          # horizontal pass
    for k in range(1, 5):
        h = h + g_ref[k] * v[:, k:k + Wo, :]              # (Ho, Wo, C)

    o_ref[...] = _leaky_relu(h).reshape(1, Ho, Wo, C)     # final LeakyReLU


# ------------------------------ call wrappers --------------------------------

def _vmem_limit_bytes():
    kind = ""
    try:
        kind = jax.devices()[0].device_kind.lower()
    except Exception:
        pass
    if "v7" in kind or "tpu7" in kind:
        return 48 * 1024 * 1024        # v7x: 64 MiB physical -> leave headroom
    if "v5" in kind or "v6" in kind:
        return 100 * 1024 * 1024       # v5e/v6e: 128 MiB physical VMEM
    return 64 * 1024 * 1024            # conservative default


def _mosaic_params():
    # TODO(synk): add a spatial row-tile grid axis + two-pass InstanceNorm so
    # large images fit v7x's 64 MiB VMEM and megacore gets > B grid points.
    return pltpu.CompilerParams(dimension_semantics=("parallel",),
                                vmem_limit_bytes=_vmem_limit_bytes())


def _conv_w_mat(w):
    # PyTorch (Cout, Cin, 3, 3) -> (9*Cin, Cout), K ordered (ky, kx, ci) to
    # match the in-kernel tap buffer layout; bf16 operands for the MXU.
    Cout, Cin, kH, kW = w.shape
    return (jnp.transpose(w, (2, 3, 1, 0))
            .reshape(kH * kW * Cin, Cout).astype(MXU_DTYPE))


def conv_s2_in_lrelu(planes, w_mat, Ho, Wo):
    B = planes[0].shape[0]
    Cin = planes[0].shape[-1]
    Cout = w_mat.shape[-1]
    plane_spec = pl.BlockSpec((1, Ho + 1, Wo + 1, Cin), lambda b: (b, 0, 0, 0))
    return pl.pallas_call(
        _conv_s2_in_lrelu_kernel,
        out_shape=jax.ShapeDtypeStruct((B, Ho, Wo, Cout), jnp.float32),
        grid=(B,),
        in_specs=[plane_spec, plane_spec, plane_spec, plane_spec,
                  pl.BlockSpec((9 * Cin, Cout), lambda b: (0, 0))],
        out_specs=pl.BlockSpec((1, Ho, Wo, Cout), lambda b: (b, 0, 0, 0)),
        scratch_shapes=[pltpu.VMEM((Ho * Wo, 9 * Cin), MXU_DTYPE)],
        compiler_params=_mosaic_params(),
    )(*planes, w_mat)


def residual_block(y, w1_mat, w2_mat, gate, g1d):
    B, Ho, Wo, C = y.shape
    return pl.pallas_call(
        _residual_block_kernel,
        out_shape=jax.ShapeDtypeStruct((B, Ho, Wo, C), jnp.float32),
        grid=(B,),
        in_specs=[pl.BlockSpec((1, Ho, Wo, C), lambda b: (b, 0, 0, 0)),
                  pl.BlockSpec((9 * C, C), lambda b: (0, 0)),
                  pl.BlockSpec((9 * C, C), lambda b: (0, 0)),
                  pl.BlockSpec((1, C), lambda b: (0, 0)),
                  pl.BlockSpec(memory_space=pltpu.MemorySpace.SMEM)],
        out_specs=pl.BlockSpec((1, Ho, Wo, C), lambda b: (b, 0, 0, 0)),
        scratch_shapes=[pltpu.VMEM((Ho + 2, Wo + 2, C), MXU_DTYPE),     # conv halo
                        pltpu.VMEM((Ho * Wo, 9 * C), MXU_DTYPE),        # tap concat
                        pltpu.VMEM((Ho + 4, Wo + 4, C), jnp.float32)],  # smooth halo
        compiler_params=_mosaic_params(),
    )(y, w1_mat, w2_mat, gate, g1d)


# --------------------------------- forward ----------------------------------

def encoder_block_forward(x, p):
    """x: (B, Cin, H, W) NCHW (PyTorch convention). Returns (B, C, H//2, W//2)."""
    B, Cin, H, W = x.shape
    assert H % 2 == 0 and W % 2 == 0, "stride-2 parity split needs even H, W"
    C = p['conv0_w'].shape[0]
    Ho, Wo = H // 2, W // 2

    # Single layout change at block entry (NCHW -> NHWC, channels on lanes);
    # cast to bf16 BEFORE pad + parity split to halve the XLA-side bytes.
    x_nhwc = jnp.transpose(x, (0, 2, 3, 1)).astype(MXU_DTYPE)

    # Parity (space-to-depth) split of the zero-padded input: 4 disjoint
    # planes, total size == padded input (no duplication); each 3x3/s2 tap is
    # a stride-1 slice of one plane.
    xpad = jnp.pad(x_nhwc, ((0, 0), (1, 1), (1, 1), (0, 0)))
    planes = tuple(xpad[:, py::2, px::2, :] for py in (0, 1) for px in (0, 1))

    # --- EncoderBlock.conv: Conv2d(s=2, p=1) + InstanceNorm2d + LeakyReLU ---
    y = conv_s2_in_lrelu(planes, _conv_w_mat(p['conv0_w']), Ho, Wo)

    # SE gate: bn2 output is InstanceNorm(affine=False) -> zero spatial mean
    # per (sample, channel), so AdaptiveAvgPool2d(1) == 0 and the gate reduces
    # to the per-channel constant sigmoid(w2 @ relu(0 @ w1 + b1) + b2).
    h = jax.nn.relu(p['se_b1'].astype(jnp.float32))
    gate = jax.nn.sigmoid(h @ p['se_w2'].astype(jnp.float32)
                          + p['se_b2'].astype(jnp.float32))

    # --- ResidualBlock, fully fused in a single kernel ------------------------
    out = residual_block(y, _conv_w_mat(p['rconv1_w']),
                         _conv_w_mat(p['rconv2_w']),
                         gate.reshape(1, C).astype(jnp.float32),
                         p['gauss1d'].astype(jnp.float32))

    # single layout change at block exit: NHWC -> NCHW
    # TODO(synk): if production C < 128, repack epilogue/output to a lane-dense
    # (multiple-of-128) last dim for unmasked stores.
    return jnp.transpose(out, (0, 3, 1, 2))


# ------------------------- deterministic parameters -------------------------

def gaussian_kernel_1d(k=5, sigma=1.5):
    # outer(g1d, g1d) == SmoothingLayer's normalized 2D Gaussian (exactly).
    c = k // 2
    vals = [math.exp(-((i - c) ** 2) / (2.0 * sigma ** 2)) for i in range(k)]
    s = sum(vals)
    return jnp.array([v / s for v in vals], dtype=jnp.float32)


def init_params(key, in_ch, out_ch):
    ks = jax.random.split(key, 10)

    def w(k, shape, scale=0.05):
        return (scale * jax.random.normal(k, shape)).astype(jnp.float32)

    Cr = out_ch // 16
    return dict(
        conv0_w=w(ks[0], (out_ch, in_ch, 3, 3)),
        # Conv biases kept for module fidelity but mathematically inert: every
        # conv feeds InstanceNorm2d(affine=False), whose mean subtraction
        # cancels a per-channel constant exactly, so they are not DMA'd.
        conv0_b=w(ks[1], (out_ch,)),
        rconv1_w=w(ks[2], (out_ch, out_ch, 3, 3)),
        rconv1_b=w(ks[3], (out_ch,)),
        rconv2_w=w(ks[4], (out_ch, out_ch, 3, 3)),
        rconv2_b=w(ks[5], (out_ch,)),
        se_w1=w(ks[6], (out_ch, Cr)),   # Conv2d(C, C//16, 1) as matmul (acts on
                                        # an exactly-zero pooled vector)
        se_b1=w(ks[7], (Cr,)),
        se_w2=w(ks[8], (Cr, out_ch)),   # Conv2d(C//16, C, 1) as matmul
        se_b2=w(ks[9], (out_ch,)),
        gauss1d=gaussian_kernel_1d(),   # separable factor of the Gaussian init
    )


if __name__ == "__main__":
    key = jax.random.PRNGKey(0)
    kx, kp = jax.random.split(key)
    B, Cin, H, W = 2, 4, 16, 16
    Cout = 16                            # >= 16 so C//16 >= 1 (SE block)
    x = jax.random.normal(kx, (B, Cin, H, W), dtype=jnp.float32)
    params = init_params(kp, Cin, Cout)

    out = jax.jit(encoder_block_forward)(x, params)
    jax.block_until_ready(out)
    assert out.shape == (B, Cout, H // 2, W // 2)
    assert out.dtype == jnp.float32
    assert bool(jnp.all(jnp.isfinite(out)))
    print("KERNEL_OK")
</pallas_src>

<mosaic_0001>
module attributes {stable_mosaic.version = 11 : i64} {
  func.func @_conv_s2_in_lrelu_kernel(%arg0: i32, %arg1: memref<1x9x9x4xbf16, #tpu.memory_space<vmem>>, %arg2: memref<1x9x9x4xbf16, #tpu.memory_space<vmem>>, %arg3: memref<1x9x9x4xbf16, #tpu.memory_space<vmem>>, %arg4: memref<1x9x9x4xbf16, #tpu.memory_space<vmem>>, %arg5: memref<36x16xbf16, #tpu.memory_space<vmem>>, %arg6: memref<1x8x8x16xf32, #tpu.memory_space<vmem>>, %arg7: memref<64x36xbf16, #tpu.memory_space<vmem>>) attributes {dimension_semantics = [#tpu.dimension_semantics<parallel>], iteration_bounds = array<i64: 2>, scalar_prefetch = 0 : i64, scratch_operands = 1 : i64, tpu.core_type = #tpu.core_type<tc>, window_params = [{transform_indices = @transform_0, window_bounds = array<i64: 1, 9, 9, 4>}, {transform_indices = @transform_1, window_bounds = array<i64: 1, 9, 9, 4>}, {transform_indices = @transform_2, window_bounds = array<i64: 1, 9, 9, 4>}, {transform_indices = @transform_3, window_bounds = array<i64: 1, 9, 9, 4>}, {pipeline_mode = #tpu.pipeline_mode<synchronous>, transform_indices = @transform_4, window_bounds = array<i64: 36, 16>}, {transform_indices = @transform_5, window_bounds = array<i64: 1, 8, 8, 16>}]} {
    %c0 = arith.constant 0 : index
    %c0_0 = arith.constant 0 : index
    %c0_1 = arith.constant 0 : index
    %c0_2 = arith.constant 0 : index
    %0 = vector.load %arg1[%c0, %c0_0, %c0_1, %c0_2] : memref<1x9x9x4xbf16, #tpu.memory_space<vmem>>, vector<1x9x9x4xbf16>
    %1 = vector.shape_cast %0 : vector<1x9x9x4xbf16> to vector<9x9x4xbf16>
    %c0_3 = arith.constant 0 : index
    %c0_4 = arith.constant 0 : index
    %c0_5 = arith.constant 0 : index
    %c0_6 = arith.constant 0 : index
    %2 = vector.load %arg2[%c0_3, %c0_4, %c0_5, %c0_6] : memref<1x9x9x4xbf16, #tpu.memory_space<vmem>>, vector<1x9x9x4xbf16>
    %3 = vector.shape_cast %2 : vector<1x9x9x4xbf16> to vector<9x9x4xbf16>
    %c0_7 = arith.constant 0 : index
    %c0_8 = arith.constant 0 : index
    %c0_9 = arith.constant 0 : index
    %c0_10 = arith.constant 0 : index
    %4 = vector.load %arg3[%c0_7, %c0_8, %c0_9, %c0_10] : memref<1x9x9x4xbf16, #tpu.memory_space<vmem>>, vector<1x9x9x4xbf16>
    %5 = vector.shape_cast %4 : vector<1x9x9x4xbf16> to vector<9x9x4xbf16>
    %c0_11 = arith.constant 0 : index
    %c0_12 = arith.constant 0 : index
    %c0_13 = arith.constant 0 : index
    %c0_14 = arith.constant 0 : index
    %6 = vector.load %arg4[%c0_11, %c0_12, %c0_13, %c0_14] : memref<1x9x9x4xbf16, #tpu.memory_space<vmem>>, vector<1x9x9x4xbf16>
    %7 = vector.shape_cast %6 : vector<1x9x9x4xbf16> to vector<9x9x4xbf16>
    %8 = vector.extract_strided_slice %1 {offsets = [0, 0, 0], sizes = [8, 8, 4], strides = [1, 1, 1]} : vector<9x9x4xbf16> to vector<8x8x4xbf16>
    %9 = vector.shape_cast %8 : vector<8x8x4xbf16> to vector<64x4xbf16>
    %c0_15 = arith.constant 0 : index
    %c0_16 = arith.constant 0 : index
    %10 = vector.load %arg7[%c0_15, %c0_16] : memref<64x36xbf16, #tpu.memory_space<vmem>>, vector<64x4xbf16>
    tpu.vector_store %arg7[%c0_15, %c0_16], %9 {strides = array<i32>} : memref<64x36xbf16, #tpu.memory_space<vmem>>, vector<64x4xbf16>,
    %11 = vector.extract_strided_slice %3 {offsets = [0, 0, 0], sizes = [8, 8, 4], strides = [1, 1, 1]} : vector<9x9x4xbf16> to vector<8x8x4xbf16>
    %12 = vector.shape_cast %11 : vector<8x8x4xbf16> to vector<64x4xbf16>
    %c0_17 = arith.constant 0 : index
    %c4 = arith.constant 4 : index
    %13 = vector.load %arg7[%c0_17, %c4] : memref<64x36xbf16, #tpu.memory_space<vmem>>, vector<64x4xbf16>
    tpu.vector_store %arg7[%c0_17, %c4], %12 {strides = array<i32>} : memref<64x36xbf16, #tpu.memory_space<vmem>>, vector<64x4xbf16>,
    %14 = vector.extract_strided_slice %1 {offsets = [0, 1, 0], sizes = [8, 8, 4], strides = [1, 1, 1]} : vector<9x9x4xbf16> to vector<8x8x4xbf16>
    %15 = vector.shape_cast %14 : vector<8x8x4xbf16> to vector<64x4xbf16>
    %c0_18 = arith.constant 0 : index
    %c8 = arith.constant 8 : index
    %16 = vector.load %arg7[%c0_18, %c8] : memref<64x36xbf16, #tpu.memory_space<vmem>>, vector<64x4xbf16>
    tpu.vector_store %arg7[%c0_18, %c8], %15 {strides = array<i32>} : memref<64x36xbf16, #tpu.memory_space<vmem>>, vector<64x4xbf16>,
    %17 = vector.extract_strided_slice %5 {offsets = [0, 0, 0], sizes = [8, 8, 4], strides = [1, 1, 1]} : vector<9x9x4xbf16> to vector<8x8x4xbf16>
    %18 = vector.shape_cast %17 : vector<8x8x4xbf16> to vector<64x4xbf16>
    %c0_19 = arith.constant 0 : index
    %c12 = arith.constant 12 : index
    %19 = vector.load %arg7[%c0_19, %c12] : memref<64x36xbf16, #tpu.memory_space<vmem>>, vector<64x4xbf16>
    tpu.vector_store %arg7[%c0_19, %c12], %18 {strides = array<i32>} : memref<64x36xbf16, #tpu.memory_space<vmem>>, vector<64x4xbf16>,
    %20 = vector.extract_strided_slice %7 {offsets = [0, 0, 0], sizes = [8, 8, 4], strides = [1, 1, 1]} : vector<9x9x4xbf16> to vector<8x8x4xbf16>
    %21 = vector.shape_cast %20 : vector<8x8x4xbf16> to vector<64x4xbf16>
    %c0_20 = arith.constant 0 : index
    %c16 = arith.constant 16 : index
    %22 = vector.load %arg7[%c0_20, %c16] : memref<64x36xbf16, #tpu.memory_space<vmem>>, vector<64x4xbf16>
    tpu.vector_store %arg7[%c0_20, %c16], %21 {strides = array<i32>} : memref<64x36xbf16, #tpu.memory_space<vmem>>, vector<64x4xbf16>,
    %23 = vector.extract_strided_slice %5 {offsets = [0, 1, 0], sizes = [8, 8, 4], strides = [1, 1, 1]} : vector<9x9x4xbf16> to vector<8x8x4xbf16>
    %24 = vector.shape_cast %23 : vector<8x8x4xbf16> to vector<64x4xbf16>
    %c0_21 = arith.constant 0 : index
    %c20 = arith.constant 20 : index
    %25 = vector.load %arg7[%c0_21, %c20] : memref<64x36xbf16, #tpu.memory_space<vmem>>, vector<64x4xbf16>
    tpu.vector_store %arg7[%c0_21, %c20], %24 {strides = array<i32>} : memref<64x36xbf16, #tpu.memory_space<vmem>>, vector<64x4xbf16>,
    %26 = vector.extract_strided_slice %1 {offsets = [1, 0, 0], sizes = [8, 8, 4], strides = [1, 1, 1]} : vector<9x9x4xbf16> to vector<8x8x4xbf16>
    %27 = vector.shape_cast %26 : vector<8x8x4xbf16> to vector<64x4xbf16>
    %c0_22 = arith.constant 0 : index
    %c24 = arith.constant 24 : index
    %28 = vector.load %arg7[%c0_22, %c24] : memref<64x36xbf16, #tpu.memory_space<vmem>>, vector<64x4xbf16>
    tpu.vector_store %arg7[%c0_22, %c24], %27 {strides = array<i32>} : memref<64x36xbf16, #tpu.memory_space<vmem>>, vector<64x4xbf16>,
    %29 = vector.extract_strided_slice %3 {offsets = [1, 0, 0], sizes = [8, 8, 4], strides = [1, 1, 1]} : vector<9x9x4xbf16> to vector<8x8x4xbf16>
    %30 = vector.shape_cast %29 : vector<8x8x4xbf16> to vector<64x4xbf16>
    %c0_23 = arith.constant 0 : index
    %c28 = arith.constant 28 : index
    %31 = vector.load %arg7[%c0_23, %c28] : memref<64x36xbf16, #tpu.memory_space<vmem>>, vector<64x4xbf16>
    tpu.vector_store %arg7[%c0_23, %c28], %30 {strides = array<i32>} : memref<64x36xbf16, #tpu.memory_space<vmem>>, vector<64x4xbf16>,
    %32 = vector.extract_strided_slice %1 {offsets = [1, 1, 0], sizes = [8, 8, 4], strides = [1, 1, 1]} : vector<9x9x4xbf16> to vector<8x8x4xbf16>
    %33 = vector.shape_cast %32 : vector<8x8x4xbf16> to vector<64x4xbf16>
    %c0_24 = arith.constant 0 : index
    %c32 = arith.constant 32 : index
    %34 = vector.load %arg7[%c0_24, %c32] : memref<64x36xbf16, #tpu.memory_space<vmem>>, vector<64x4xbf16>
    tpu.vector_store %arg7[%c0_24, %c32], %33 {strides = array<i32>} : memref<64x36xbf16, #tpu.memory_space<vmem>>, vector<64x4xbf16>,
    %c0_25 = arith.constant 0 : index
    %c0_26 = arith.constant 0 : index
    %35 = vector.load %arg7[%c0_25, %c0_26] : memref<64x36xbf16, #tpu.memory_space<vmem>>, vector<64x36xbf16>
    %c0_27 = arith.constant 0 : index
    %c0_28 = arith.constant 0 : index
    %36 = vector.load %arg5[%c0_27, %c0_28] : memref<36x16xbf16, #tpu.memory_space<vmem>>, vector<36x16xbf16>
    %cst = arith.constant dense<0.000000e+00> : vector<64x16xf32>
    %37 = tpu.matmul %35, %36, %cst {dimension_numbers = #tpu.dot_dimension_numbers<[1], [0], [0], [1], [0, 0, 1, 1], [], []>} : vector<64x36xbf16>, vector<36x16xbf16>, vector<64x16xf32> -> vector<64x16xf32>
    %cst_29 = arith.constant dense<0.000000e+00> : vector<16xf32>
    %38 = vector.multi_reduction <add>, %37, %cst_29 [0] : vector<64x16xf32> to vector<16xf32>
    %39 = vector.shape_cast %38 : vector<16xf32> to vector<1x16xf32>
    %cst_30 = arith.constant 6.400000e+01 : f32
    %40 = vector.broadcast %cst_30 : f32 to vector<1x16xf32>
    %41 = arith.divf %39, %40 : vector<1x16xf32>
    %42 = arith.mulf %37, %37 : vector<64x16xf32>
    %cst_31 = arith.constant dense<0.000000e+00> : vector<16xf32>
    %43 = vector.multi_reduction <add>, %42, %cst_31 [0] : vector<64x16xf32> to vector<16xf32>
    %44 = vector.shape_cast %43 : vector<16xf32> to vector<1x16xf32>
    %cst_32 = arith.constant 6.400000e+01 : f32
    %45 = vector.broadcast %cst_32 : f32 to vector<1x16xf32>
    %46 = arith.divf %44, %45 : vector<1x16xf32>
    %47 = arith.mulf %41, %41 : vector<1x16xf32>
    %48 = arith.subf %46, %47 : vector<1x16xf32>
    %cst_33 = arith.constant 0.000000e+00 : f32
    %49 = vector.broadcast %cst_33 : f32 to vector<1x16xf32>
    %50 = arith.maximumf %48, %49 : vector<1x16xf32>
    %51 = vector.broadcast %41 : vector<1x16xf32> to vector<64x16xf32>
    %52 = arith.subf %37, %51 : vector<64x16xf32>
    %cst_34 = arith.constant 9.99999974E-6 : f32
    %53 = vector.broadcast %cst_34 : f32 to vector<1x16xf32>
    %54 = arith.addf %50, %53 : vector<1x16xf32>
    %55 = math.rsqrt %54 : vector<1x16xf32>
    %56 = vector.broadcast %55 : vector<1x16xf32> to vector<64x16xf32>
    %57 = arith.mulf %52, %56 : vector<64x16xf32>
    %cst_35 = arith.constant 0.000000e+00 : f32
    %58 = vector.broadcast %cst_35 : f32 to vector<64x16xf32>
    %59 = arith.cmpf ogt, %57, %58 : vector<64x16xf32>
    %cst_36 = arith.constant 2.000000e-01 : f32
    %60 = vector.broadcast %cst_36 : f32 to vector<64x16xf32>
    %61 = arith.mulf %60, %57 : vector<64x16xf32>
    %62 = arith.select %59, %57, %61 : vector<64x16xi1>, vector<64x16xf32>
    %63 = vector.shape_cast %62 : vector<64x16xf32> to vector<1x8x8x16xf32>
    %c0_37 = arith.constant 0 : index
    %c0_38 = arith.constant 0 : index
    %c0_39 = arith.constant 0 : index
    %c0_40 = arith.constant 0 : index
    %64 = vector.load %arg6[%c0_37, %c0_38, %c0_39, %c0_40] : memref<1x8x8x16xf32, #tpu.memory_space<vmem>>, vector<1x8x8x16xf32>
    tpu.vector_store %arg6[%c0_37, %c0_38, %c0_39, %c0_40], %63 {strides = array<i32>} : memref<1x8x8x16xf32, #tpu.memory_space<vmem>>, vector<1x8x8x16xf32>,
    return
  }
  func.func @transform_0(%arg0: i32) -> (i32, i32, i32, i32) {
    %c0_i32 = arith.constant 0 : i32
    %c0_i32_0 = arith.constant 0 : i32
    %c0_i32_1 = arith.constant 0 : i32
    %c0_i32_2 = arith.constant 0 : i32
    return %arg0, %c0_i32, %c0_i32_0, %c0_i32_1 : i32, i32, i32, i32
  }
  func.func @transform_1(%arg0: i32) -> (i32, i32, i32, i32) {
    %c0_i32 = arith.constant 0 : i32
    %c0_i32_0 = arith.constant 0 : i32
    %c0_i32_1 = arith.constant 0 : i32
    %c0_i32_2 = arith.constant 0 : i32
    return %arg0, %c0_i32, %c0_i32_0, %c0_i32_1 : i32, i32, i32, i32
  }
  func.func @transform_2(%arg0: i32) -> (i32, i32, i32, i32) {
    %c0_i32 = arith.constant 0 : i32
    %c0_i32_0 = arith.constant 0 : i32
    %c0_i32_1 = arith.constant 0 : i32
    %c0_i32_2 = arith.constant 0 : i32
    return %arg0, %c0_i32, %c0_i32_0, %c0_i32_1 : i32, i32, i32, i32
  }
  func.func @transform_3(%arg0: i32) -> (i32, i32, i32, i32) {
    %c0_i32 = arith.constant 0 : i32
    %c0_i32_0 = arith.constant 0 : i32
    %c0_i32_1 = arith.constant 0 : i32
    %c0_i32_2 = arith.constant 0 : i32
    return %arg0, %c0_i32, %c0_i32_0, %c0_i32_1 : i32, i32, i32, i32
  }
  func.func @transform_4(%arg0: i32) -> (i32, i32) {
    %c0_i32 = arith.constant 0 : i32
    %c0_i32_0 = arith.constant 0 : i32
    %c0_i32_1 = arith.constant 0 : i32
    return %c0_i32, %c0_i32_0 : i32, i32
  }
  func.func @transform_5(%arg0: i32) -> (i32, i32, i32, i32) {
    %c0_i32 = arith.constant 0 : i32
    %c0_i32_0 = arith.constant 0 : i32
    %c0_i32_1 = arith.constant 0 : i32
    %c0_i32_2 = arith.constant 0 : i32
    return %arg0, %c0_i32, %c0_i32_0, %c0_i32_1 : i32, i32, i32, i32
  }
}

module attributes {stable_mosaic.version = 11 : i64} {
  func.func @_residual_block_kernel(%arg0: i32, %arg1: memref<1x8x8x16xf32, #tpu.memory_space<vmem>>, %arg2: memref<144x16xbf16, #tpu.memory_space<vmem>>, %arg3: memref<144x16xbf16, #tpu.memory_space<vmem>>, %arg4: memref<1x16xf32, #tpu.memory_space<vmem>>, %arg5: memref<5xf32, #tpu.memory_space<smem>>, %arg6: memref<1x8x8x16xf32, #tpu.memory_space<vmem>>, %arg7: memref<10x10x16xbf16, #tpu.memory_space<vmem>>, %arg8: memref<64x144xbf16, #tpu.memory_space<vmem>>, %arg9: memref<12x12x16xf32, #tpu.memory_space<vmem>>) attributes {dimension_semantics = [#tpu.dimension_semantics<parallel>], iteration_bounds = array<i64: 2>, scalar_prefetch = 0 : i64, scratch_operands = 3 : i64, tpu.core_type = #tpu.core_type<tc>, window_params = [{transform_indices = @transform_0, window_bounds = array<i64: 1, 8, 8, 16>}, {pipeline_mode = #tpu.pipeline_mode<synchronous>, transform_indices = @transform_1, window_bounds = array<i64: 144, 16>}, {pipeline_mode = #tpu.pipeline_mode<synchronous>, transform_indices = @transform_2, window_bounds = array<i64: 144, 16>}, {pipeline_mode = #tpu.pipeline_mode<synchronous>, transform_indices = @transform_3, window_bounds = array<i64: 1, 16>}, {transform_indices = @transform_4, window_bounds = array<i64: 5>}, {transform_indices = @transform_5, window_bounds = array<i64: 1, 8, 8, 16>}]} {
    %c0 = arith.constant 0 : index
    %c0_0 = arith.constant 0 : index
    %c0_1 = arith.constant 0 : index
    %c0_2 = arith.constant 0 : index
    %0 = vector.load %arg1[%c0, %c0_0, %c0_1, %c0_2] : memref<1x8x8x16xf32, #tpu.memory_space<vmem>>, vector<1x8x8x16xf32>
    %1 = vector.shape_cast %0 : vector<1x8x8x16xf32> to vector<8x8x16xf32>
    %cst = arith.constant 0.000000e+00 : bf16
    %2 = vector.broadcast %cst : bf16 to vector<1x10x16xbf16>
    %c0_3 = arith.constant 0 : index
    %c0_4 = arith.constant 0 : index
    %c0_5 = arith.constant 0 : index
    %3 = vector.load %arg7[%c0_3, %c0_4, %c0_5] : memref<10x10x16xbf16, #tpu.memory_space<vmem>>, vector<1x10x16xbf16>
    tpu.vector_store %arg7[%c0_3, %c0_4, %c0_5], %2 {strides = array<i32>} : memref<10x10x16xbf16, #tpu.memory_space<vmem>>, vector<1x10x16xbf16>,
    %cst_6 = arith.constant 0.000000e+00 : bf16
    %4 = vector.broadcast %cst_6 : bf16 to vector<1x10x16xbf16>
    %c9 = arith.constant 9 : index
    %c0_7 = arith.constant 0 : index
    %c0_8 = arith.constant 0 : index
    %5 = vector.load %arg7[%c9, %c0_7, %c0_8] : memref<10x10x16xbf16, #tpu.memory_space<vmem>>, vector<1x10x16xbf16>
    tpu.vector_store %arg7[%c9, %c0_7, %c0_8], %4 {strides = array<i32>} : memref<10x10x16xbf16, #tpu.memory_space<vmem>>, vector<1x10x16xbf16>,
    %cst_9 = arith.constant 0.000000e+00 : bf16
    %6 = vector.broadcast %cst_9 : bf16 to vector<10x1x16xbf16>
    %c0_10 = arith.constant 0 : index
    %c0_11 = arith.constant 0 : index
    %c0_12 = arith.constant 0 : index
    %7 = vector.load %arg7[%c0_10, %c0_11, %c0_12] : memref<10x10x16xbf16, #tpu.memory_space<vmem>>, vector<10x1x16xbf16>
    tpu.vector_store %arg7[%c0_10, %c0_11, %c0_12], %6 {strides = array<i32>} : memref<10x10x16xbf16, #tpu.memory_space<vmem>>, vector<10x1x16xbf16>,
    %cst_13 = arith.constant 0.000000e+00 : bf16
    %8 = vector.broadcast %cst_13 : bf16 to vector<10x1x16xbf16>
    %c0_14 = arith.constant 0 : index
    %c9_15 = arith.constant 9 : index
    %c0_16 = arith.constant 0 : index
    %9 = vector.load %arg7[%c0_14, %c9_15, %c0_16] : memref<10x10x16xbf16, #tpu.memory_space<vmem>>, vector<10x1x16xbf16>
    tpu.vector_store %arg7[%c0_14, %c9_15, %c0_16], %8 {strides = array<i32>} : memref<10x10x16xbf16, #tpu.memory_space<vmem>>, vector<10x1x16xbf16>,
    %10 = arith.truncf %1 : vector<8x8x16xf32> to vector<8x8x16xbf16>
    %c1 = arith.constant 1 : index
    %c1_17 = arith.constant 1 : index
    %c0_18 = arith.constant 0 : index
    %11 = vector.load %arg7[%c1, %c1_17, %c0_18] : memref<10x10x16xbf16, #tpu.memory_space<vmem>>, vector<8x8x16xbf16>
    tpu.vector_store %arg7[%c1, %c1_17, %c0_18], %10 {strides = array<i32>} : memref<10x10x16xbf16, #tpu.memory_space<vmem>>, vector<8x8x16xbf16>,
    %c0_19 = arith.constant 0 : index
    %c0_20 = arith.constant 0 : index
    %c0_21 = arith.constant 0 : index
    %12 = vector.load %arg7[%c0_19, %c0_20, %c0_21] : memref<10x10x16xbf16, #tpu.memory_space<vmem>>, vector<8x8x16xbf16>
    %13 = vector.shape_cast %12 : vector<8x8x16xbf16> to vector<64x16xbf16>
    %c0_22 = arith.constant 0 : index
    %c0_23 = arith.constant 0 : index
    %14 = vector.load %arg8[%c0_22, %c0_23] : memref<64x144xbf16, #tpu.memory_space<vmem>>, vector<64x16xbf16>
    tpu.vector_store %arg8[%c0_22, %c0_23], %13 {strides = array<i32>} : memref<64x144xbf16, #tpu.memory_space<vmem>>, vector<64x16xbf16>,
    %c0_24 = arith.constant 0 : index
    %c1_25 = arith.constant 1 : index
    %c0_26 = arith.constant 0 : index
    %15 = vector.load %arg7[%c0_24, %c1_25, %c0_26] : memref<10x10x16xbf16, #tpu.memory_space<vmem>>, vector<8x8x16xbf16>
    %16 = vector.shape_cast %15 : vector<8x8x16xbf16> to vector<64x16xbf16>
    %c0_27 = arith.constant 0 : index
    %c16 = arith.constant 16 : index
    %17 = vector.load %arg8[%c0_27, %c16] : memref<64x144xbf16, #tpu.memory_space<vmem>>, vector<64x16xbf16>
    tpu.vector_store %arg8[%c0_27, %c16], %16 {strides = array<i32>} : memref<64x144xbf16, #tpu.memory_space<vmem>>, vector<64x16xbf16>,
    %c0_28 = arith.constant 0 : index
    %c2 = arith.constant 2 : index
    %c0_29 = arith.constant 0 : index
    %18 = vector.load %arg7[%c0_28, %c2, %c0_29] : memref<10x10x16xbf16, #tpu.memory_space<vmem>>, vector<8x8x16xbf16>
    %19 = vector.shape_cast %18 : vector<8x8x16xbf16> to vector<64x16xbf16>
    %c0_30 = arith.constant 0 : index
    %c32 = arith.constant 32 : index
    %20 = vector.load %arg8[%c0_30, %c32] : memref<64x144xbf16, #tpu.memory_space<vmem>>, vector<64x16xbf16>
    tpu.vector_store %arg8[%c0_30, %c32], %19 {strides = array<i32>} : memref<64x144xbf16, #tpu.memory_space<vmem>>, vector<64x16xbf16>,
    %c1_31 = arith.constant 1 : index
    %c0_32 = arith.constant 0 : index
    %c0_33 = arith.constant 0 : index
    %21 = vector.load %arg7[%c1_31, %c0_32, %c0_33] : memref<10x10x16xbf16, #tpu.memory_space<vmem>>, vector<8x8x16xbf16>
    %22 = vector.shape_cast %21 : vector<8x8x16xbf16> to vector<64x16xbf16>
    %c0_34 = arith.constant 0 : index
    %c48 = arith.constant 48 : index
    %23 = vector.load %arg8[%c0_34, %c48] : memref<64x144xbf16, #tpu.memory_space<vmem>>, vector<64x16xbf16>
    tpu.vector_store %arg8[%c0_34, %c48], %22 {strides = array<i32>} : memref<64x144xbf16, #tpu.memory_space<vmem>>, vector<64x16xbf16>,
    %c1_35 = arith.constant 1 : index
    %c1_36 = arith.constant 1 : index
    %c0_37 = arith.constant 0 : index
    %24 = vector.load %arg7[%c1_35, %c1_36, %c0_37] : memref<10x10x16xbf16, #tpu.memory_space<vmem>>, vector<8x8x16xbf16>
    %25 = vector.shape_cast %24 : vector<8x8x16xbf16> to vector<64x16xbf16>
    %c0_38 = arith.constant 0 : index
    %c64 = arith.constant 64 : index
    %26 = vector.load %arg8[%c0_38, %c64] : memref<64x144xbf16, #tpu.memory_space<vmem>>, vector<64x16xbf16>
    tpu.vector_store %arg8[%c0_38, %c64], %25 {strides = array<i32>} : memref<64x144xbf16, #tpu.memory_space<vmem>>, vector<64x16xbf16>,
    %c1_39 = arith.constant 1 : index
    %c2_40 = arith.constant 2 : index
    %c0_41 = arith.constant 0 : index
    %27 = vector.load %arg7[%c1_39, %c2_40, %c0_41] : memref<10x10x16xbf16, #tpu.memory_space<vmem>>, vector<8x8x16xbf16>
    %28 = vector.shape_cast %27 : vector<8x8x16xbf16> to vector<64x16xbf16>
    %c0_42 = arith.constant 0 : index
    %c80 = arith.constant 80 : index
    %29 = vector.load %arg8[%c0_42, %c80] : memref<64x144xbf16, #tpu.memory_space<vmem>>, vector<64x16xbf16>
    tpu.vector_store %arg8[%c0_42, %c80], %28 {strides = array<i32>} : memref<64x144xbf16, #tpu.memory_space<vmem>>, vector<64x16xbf16>,
    %c2_43 = arith.constant 2 : index
    %c0_44 = arith.constant 0 : index
    %c0_45 = arith.constant 0 : index
    %30 = vector.load %arg7[%c2_43, %c0_44, %c0_45] : memref<10x10x16xbf16, #tpu.memory_space<vmem>>, vector<8x8x16xbf16>
    %31 = vector.shape_cast %30 : vector<8x8x16xbf16> to vector<64x16xbf16>
    %c0_46 = arith.constant 0 : index
    %c96 = arith.constant 96 : index
    %32 = vector.load %arg8[%c0_46, %c96] : memref<64x144xbf16, #tpu.memory_space<vmem>>, vector<64x16xbf16>
    tpu.vector_store %arg8[%c0_46, %c96], %31 {strides = array<i32>} : memref<64x144xbf16, #tpu.memory_space<vmem>>, vector<64x16xbf16>,
    %c2_47 = arith.constant 2 : index
    %c1_48 = arith.constant 1 : index
    %c0_49 = arith.constant 0 : index
    %33 = vector.load %arg7[%c2_47, %c1_48, %c0_49] : memref<10x10x16xbf16, #tpu.memory_space<vmem>>, vector<8x8x16xbf16>
    %34 = vector.shape_cast %33 : vector<8x8x16xbf16> to vector<64x16xbf16>
    %c0_50 = arith.constant 0 : index
    %c112 = arith.constant 112 : index
    %35 = vector.load %arg8[%c0_50, %c112] : memref<64x144xbf16, #tpu.memory_space<vmem>>, vector<64x16xbf16>
    tpu.vector_store %arg8[%c0_50, %c112], %34 {strides = array<i32>} : memref<64x144xbf16, #tpu.memory_space<vmem>>, vector<64x16xbf16>,
    %c2_51 = arith.constant 2 : index
    %c2_52 = arith.constant 2 : index
    %c0_53 = arith.constant 0 : index
    %36 = vector.load %arg7[%c2_51, %c2_52, %c0_53] : memref<10x10x16xbf16, #tpu.memory_space<vmem>>, vector<8x8x16xbf16>
    %37 = vector.shape_cast %36 : vector<8x8x16xbf16> to vector<64x16xbf16>
    %c0_54 = arith.constant 0 : index
    %c128 = arith.constant 128 : index
    %38 = vector.load %arg8[%c0_54, %c128] : memref<64x144xbf16, #tpu.memory_space<vmem>>, vector<64x16xbf16>
    tpu.vector_store %arg8[%c0_54, %c128], %37 {strides = array<i32>} : memref<64x144xbf16, #tpu.memory_space<vmem>>, vector<64x16xbf16>,
    %c0_55 = arith.constant 0 : index
    %c0_56 = arith.constant 0 : index
    %39 = vector.load %arg8[%c0_55, %c0_56] : memref<64x144xbf16, #tpu.memory_space<vmem>>, vector<64x144xbf16>
    %c0_57 = arith.constant 0 : index
    %c0_58 = arith.constant 0 : index
    %40 = vector.load %arg2[%c0_57, %c0_58] : memref<144x16xbf16, #tpu.memory_space<vmem>>, vector<144x16xbf16>
    %cst_59 = arith.constant dense<0.000000e+00> : vector<64x16xf32>
    %41 = tpu.matmul %39, %40, %cst_59 {dimension_numbers = #tpu.dot_dimension_numbers<[1], [0], [0], [1], [0, 0, 1, 1], [], []>} : vector<64x144xbf16>, vector<144x16xbf16>, vector<64x16xf32> -> vector<64x16xf32>
    %cst_60 = arith.constant dense<0.000000e+00> : vector<16xf32>
    %42 = vector.multi_reduction <add>, %41, %cst_60 [0] : vector<64x16xf32> to vector<16xf32>
    %43 = vector.shape_cast %42 : vector<16xf32> to vector<1x16xf32>
    %cst_61 = arith.constant 6.400000e+01 : f32
    %44 = vector.broadcast %cst_61 : f32 to vector<1x16xf32>
    %45 = arith.divf %43, %44 : vector<1x16xf32>
    %46 = arith.mulf %41, %41 : vector<64x16xf32>
    %cst_62 = arith.constant dense<0.000000e+00> : vector<16xf32>
    %47 = vector.multi_reduction <add>, %46, %cst_62 [0] : vector<64x16xf32> to vector<16xf32>
    %48 = vector.shape_cast %47 : vector<16xf32> to vector<1x16xf32>
    %cst_63 = arith.constant 6.400000e+01 : f32
    %49 = vector.broadcast %cst_63 : f32 to vector<1x16xf32>
    %50 = arith.divf %48, %49 : vector<1x16xf32>
    %51 = arith.mulf %45, %45 : vector<1x16xf32>
    %52 = arith.subf %50, %51 : vector<1x16xf32>
    %cst_64 = arith.constant 0.000000e+00 : f32
    %53 = vector.broadcast %cst_64 : f32 to vector<1x16xf32>
    %54 = arith.maximumf %52, %53 : vector<1x16xf32>
    %55 = vector.broadcast %45 : vector<1x16xf32> to vector<64x16xf32>
    %56 = arith.subf %41, %55 : vector<64x16xf32>
    %cst_65 = arith.constant 9.99999974E-6 : f32
    %57 = vector.broadcast %cst_65 : f32 to vector<1x16xf32>
    %58 = arith.addf %54, %57 : vector<1x16xf32>
    %59 = math.rsqrt %58 : vector<1x16xf32>
    %60 = vector.broadcast %59 : vector<1x16xf32> to vector<64x16xf32>
    %61 = arith.mulf %56, %60 : vector<64x16xf32>
    %cst_66 = arith.constant 0.000000e+00 : f32
    %62 = vector.broadcast %cst_66 : f32 to vector<64x16xf32>
    %63 = arith.cmpf ogt, %61, %62 : vector<64x16xf32>
    %cst_67 = arith.constant 2.000000e-01 : f32
    %64 = vector.broadcast %cst_67 : f32 to vector<64x16xf32>
    %65 = arith.mulf %64, %61 : vector<64x16xf32>
    %66 = arith.select %63, %61, %65 : vector<64x16xi1>, vector<64x16xf32>
    %67 = vector.shape_cast %66 : vector<64x16xf32> to vector<8x8x16xf32>
    %68 = arith.truncf %67 : vector<8x8x16xf32> to vector<8x8x16xbf16>
    %c1_68 = arith.constant 1 : index
    %c1_69 = arith.constant 1 : index
    %c0_70 = arith.constant 0 : index
    %69 = vector.load %arg7[%c1_68, %c1_69, %c0_70] : memref<10x10x16xbf16, #tpu.memory_space<vmem>>, vector<8x8x16xbf16>
    tpu.vector_store %arg7[%c1_68, %c1_69, %c0_70], %68 {strides = array<i32>} : memref<10x10x16xbf16, #tpu.memory_space<vmem>>, vector<8x8x16xbf16>,
    %c0_71 = arith.constant 0 : index
    %c0_72 = arith.constant 0 : index
    %c0_73 = arith.constant 0 : index
    %70 = vector.load %arg7[%c0_71, %c0_72, %c0_73] : memref<10x10x16xbf16, #tpu.memory_space<vmem>>, vector<8x8x16xbf16>
    %71 = vector.shape_cast %70 : vector<8x8x16xbf16> to vector<64x16xbf16>
    %c0_74 = arith.constant 0 : index
    %c0_75 = arith.constant 0 : index
    %72 = vector.load %arg8[%c0_74, %c0_75] : memref<64x144xbf16, #tpu.memory_space<vmem>>, vector<64x16xbf16>
    tpu.vector_store %arg8[%c0_74, %c0_75], %71 {strides = array<i32>} : memref<64x144xbf16, #tpu.memory_space<vmem>>, vector<64x16xbf16>,
    %c0_76 = arith.constant 0 : index
    %c1_77 = arith.constant 1 : index
    %c0_78 = arith.constant 0 : index
    %73 = vector.load %arg7[%c0_76, %c1_77, %c0_78] : memref<10x10x16xbf16, #tpu.memory_space<vmem>>, vector<8x8x16xbf16>
    %74 = vector.shape_cast %73 : vector<8x8x16xbf16> to vector<64x16xbf16>
    %c0_79 = arith.constant 0 : index
    %c16_80 = arith.constant 16 : index
    %75 = vector.load %arg8[%c0_79, %c16_80] : memref<64x144xbf16, #tpu.memory_space<vmem>>, vector<64x16xbf16>
    tpu.vector_store %arg8[%c0_79, %c16_80], %74 {strides = array<i32>} : memref<64x144xbf16, #tpu.memory_space<vmem>>, vector<64x16xbf16>,
    %c0_81 = arith.constant 0 : index
    %c2_82 = arith.constant 2 : index
    %c0_83 = arith.constant 0 : index
    %76 = vector.load %arg7[%c0_81, %c2_82, %c0_83] : memref<10x10x16xbf16, #tpu.memory_space<vmem>>, vector<8x8x16xbf16>
    %77 = vector.shape_cast %76 : vector<8x8x16xbf16> to vector<64x16xbf16>
    %c0_84 = arith.constant 0 : index
    %c32_85 = arith.constant 32 : index
    %78 = vector.load %arg8[%c0_84, %c32_85] : memref<64x144xbf16, #tpu.memory_space<vmem>>, vector<64x16xbf16>
    tpu.vector_store %arg8[%c0_84, %c32_85], %77 {strides = array<i32>} : memref<64x144xbf16, #tpu.memory_space<vmem>>, vector<64x16xbf16>,
    %c1_86 = arith.constant 1 : index
    %c0_87 = arith.constant 0 : index
    %c0_88 = arith.constant 0 : index
    %79 = vector.load %arg7[%c1_86, %c0_87, %c0_88] : memref<10x10x16xbf16, #tpu.memory_space<vmem>>, vector<8x8x16xbf16>
    %80 = vector.shape_cast %79 : vector<8x8x16xbf16> to vector<64x16xbf16>
    %c0_89 = arith.constant 0 : index
    %c48_90 = arith.constant 48 : index
    %81 = vector.load %arg8[%c0_89, %c48_90] : memref<64x144xbf16, #tpu.memory_space<vmem>>, vector<64x16xbf16>
    tpu.vector_store %arg8[%c0_89, %c48_90], %80 {strides = array<i32>} : memref<64x144xbf16, #tpu.memory_space<vmem>>, vector<64x16xbf16>,
    %c1_91 = arith.constant 1 : index
    %c1_92 = arith.constant 1 : index
    %c0_93 = arith.constant 0 : index
    %82 = vector.load %arg7[%c1_91, %c1_92, %c0_93] : memref<10x10x16xbf16, #tpu.memory_space<vmem>>, vector<8x8x16xbf16>
    %83 = vector.shape_cast %82 : vector<8x8x16xbf16> to vector<64x16xbf16>
    %c0_94 = arith.constant 0 : index
    %c64_95 = arith.constant 64 : index
    %84 = vector.load %arg8[%c0_94, %c64_95] : memref<64x144xbf16, #tpu.memory_space<vmem>>, vector<64x16xbf16>
    tpu.vector_store %arg8[%c0_94, %c64_95], %83 {strides = array<i32>} : memref<64x144xbf16, #tpu.memory_space<vmem>>, vector<64x16xbf16>,
    %c1_96 = arith.constant 1 : index
    %c2_97 = arith.constant 2 : index
    %c0_98 = arith.constant 0 : index
    %85 = vector.load %arg7[%c1_96, %c2_97, %c0_98] : memref<10x10x16xbf16, #tpu.memory_space<vmem>>, vector<8x8x16xbf16>
    %86 = vector.shape_cast %85 : vector<8x8x16xbf16> to vector<64x16xbf16>
    %c0_99 = arith.constant 0 : index
    %c80_100 = arith.constant 80 : index
    %87 = vector.load %arg8[%c0_99, %c80_100] : memref<64x144xbf16, #tpu.memory_space<vmem>>, vector<64x16xbf16>
    tpu.vector_store %arg8[%c0_99, %c80_100], %86 {strides = array<i32>} : memref<64x144xbf16, #tpu.memory_space<vmem>>, vector<64x16xbf16>,
    %c2_101 = arith.constant 2 : index
    %c0_102 = arith.constant 0 : index
    %c0_103 = arith.constant 0 : index
    %88 = vector.load %arg7[%c2_101, %c0_102, %c0_103] : memref<10x10x16xbf16, #tpu.memory_space<vmem>>, vector<8x8x16xbf16>
    %89 = vector.shape_cast %88 : vector<8x8x16xbf16> to vector<64x16xbf16>
    %c0_104 = arith.constant 0 : index
    %c96_105 = arith.constant 96 : index
    %90 = vector.load %arg8[%c0_104, %c96_105] : memref<64x144xbf16, #tpu.memory_space<vmem>>, vector<64x16xbf16>
    tpu.vector_store %arg8[%c0_104, %c96_105], %89 {strides = array<i32>} : memref<64x144xbf16, #tpu.memory_space<vmem>>, vector<64x16xbf16>,
    %c2_106 = arith.constant 2 : index
    %c1_107 = arith.constant 1 : index
    %c0_108 = arith.constant 0 : index
    %91 = vector.load %arg7[%c2_106, %c1_107, %c0_108] : memref<10x10x16xbf16, #tpu.memory_space<vmem>>, vector<8x8x16xbf16>
    %92 = vector.shape_cast %91 : vector<8x8x16xbf16> to vector<64x16xbf16>
    %c0_109 = arith.constant 0 : index
    %c112_110 = arith.constant 112 : index
    %93 = vector.load %arg8[%c0_109, %c112_110] : memref<64x144xbf16, #tpu.memory_space<vmem>>, vector<64x16xbf16>
    tpu.vector_store %arg8[%c0_109, %c112_110], %92 {strides = array<i32>} : memref<64x144xbf16, #tpu.memory_space<vmem>>, vector<64x16xbf16>,
    %c2_111 = arith.constant 2 : index
    %c2_112 = arith.constant 2 : index
    %c0_113 = arith.constant 0 : index
    %94 = vector.load %arg7[%c2_111, %c2_112, %c0_113] : memref<10x10x16xbf16, #tpu.memory_space<vmem>>, vector<8x8x16xbf16>
    %95 = vector.shape_cast %94 : vector<8x8x16xbf16> to vector<64x16xbf16>
    %c0_114 = arith.constant 0 : index
    %c128_115 = arith.constant 128 : index
    %96 = vector.load %arg8[%c0_114, %c128_115] : memref<64x144xbf16, #tpu.memory_space<vmem>>, vector<64x16xbf16>
    tpu.vector_store %arg8[%c0_114, %c128_115], %95 {strides = array<i32>} : memref<64x144xbf16, #tpu.memory_space<vmem>>, vector<64x16xbf16>,
    %c0_116 = arith.constant 0 : index
    %c0_117 = arith.constant 0 : index
    %97 = vector.load %arg8[%c0_116, %c0_117] : memref<64x144xbf16, #tpu.memory_space<vmem>>, vector<64x144xbf16>
    %c0_118 = arith.constant 0 : index
    %c0_119 = arith.constant 0 : index
    %98 = vector.load %arg3[%c0_118, %c0_119] : memref<144x16xbf16, #tpu.memory_space<vmem>>, vector<144x16xbf16>
    %cst_120 = arith.constant dense<0.000000e+00> : vector<64x16xf32>
    %99 = tpu.matmul %97, %98, %cst_120 {dimension_numbers = #tpu.dot_dimension_numbers<[1], [0], [0], [1], [0, 0, 1, 1], [], []>} : vector<64x144xbf16>, vector<144x16xbf16>, vector<64x16xf32> -> vector<64x16xf32>
    %cst_121 = arith.constant dense<0.000000e+00> : vector<16xf32>
    %100 = vector.multi_reduction <add>, %99, %cst_121 [0] : vector<64x16xf32> to vector<16xf32>
    %101 = vector.shape_cast %100 : vector<16xf32> to vector<1x16xf32>
    %cst_122 = arith.constant 6.400000e+01 : f32
    %102 = vector.broadcast %cst_122 : f32 to vector<1x16xf32>
    %103 = arith.divf %101, %102 : vector<1x16xf32>
    %104 = arith.mulf %99, %99 : vector<64x16xf32>
    %cst_123 = arith.constant dense<0.000000e+00> : vector<16xf32>
    %105 = vector.multi_reduction <add>, %104, %cst_123 [0] : vector<64x16xf32> to vector<16xf32>
    %106 = vector.shape_cast %105 : vector<16xf32> to vector<1x16xf32>
    %cst_124 = arith.constant 6.400000e+01 : f32
    %107 = vector.broadcast %cst_124 : f32 to vector<1x16xf32>
    %108 = arith.divf %106, %107 : vector<1x16xf32>
    %109 = arith.mulf %103, %103 : vector<1x16xf32>
    %110 = arith.subf %108, %109 : vector<1x16xf32>
    %cst_125 = arith.constant 0.000000e+00 : f32
    %111 = vector.broadcast %cst_125 : f32 to vector<1x16xf32>
    %112 = arith.maximumf %110, %111 : vector<1x16xf32>
    %113 = vector.broadcast %103 : vector<1x16xf32> to vector<64x16xf32>
    %114 = arith.subf %99, %113 : vector<64x16xf32>
    %cst_126 = arith.constant 9.99999974E-6 : f32
    %115 = vector.broadcast %cst_126 : f32 to vector<1x16xf32>
    %116 = arith.addf %112, %115 : vector<1x16xf32>
    %117 = math.rsqrt %116 : vector<1x16xf32>
    %118 = vector.broadcast %117 : vector<1x16xf32> to vector<64x16xf32>
    %119 = arith.mulf %114, %118 : vector<64x16xf32>
    %c0_127 = arith.constant 0 : index
    %c0_128 = arith.constant 0 : index
    %120 = vector.load %arg4[%c0_127, %c0_128] : memref<1x16xf32, #tpu.memory_space<vmem>>, vector<1x16xf32>
    %121 = vector.broadcast %120 : vector<1x16xf32> to vector<64x16xf32>
    %122 = arith.mulf %119, %121 : vector<64x16xf32>
    %123 = vector.shape_cast %1 : vector<8x8x16xf32> to vector<64x16xf32>
    %124 = arith.addf %122, %123 : vector<64x16xf32>
    %cst_129 = arith.constant 0.000000e+00 : f32
    %125 = vector.broadcast %cst_129 : f32 to vector<2x12x16xf32>
    %c0_130 = arith.constant 0 : index
    %c0_131 = arith.constant 0 : index
    %c0_132 = arith.constant 0 : index
    %126 = vector.load %arg9[%c0_130, %c0_131, %c0_132] : memref<12x12x16xf32, #tpu.memory_space<vmem>>, vector<2x12x16xf32>
    tpu.vector_store %arg9[%c0_130, %c0_131, %c0_132], %125 {strides = array<i32>} : memref<12x12x16xf32, #tpu.memory_space<vmem>>, vector<2x12x16xf32>,
    %cst_133 = arith.constant 0.000000e+00 : f32
    %127 = vector.broadcast %cst_133 : f32 to vector<2x12x16xf32>
    %c10 = arith.constant 10 : index
    %c0_134 = arith.constant 0 : index
    %c0_135 = arith.constant 0 : index
    %128 = vector.load %arg9[%c10, %c0_134, %c0_135] : memref<12x12x16xf32, #tpu.memory_space<vmem>>, vector<2x12x16xf32>
    tpu.vector_store %arg9[%c10, %c0_134, %c0_135], %127 {strides = array<i32>} : memref<12x12x16xf32, #tpu.memory_space<vmem>>, vector<2x12x16xf32>,
    %cst_136 = arith.constant 0.000000e+00 : f32
    %129 = vector.broadcast %cst_136 : f32 to vector<12x2x16xf32>
    %c0_137 = arith.constant 0 : index
    %c0_138 = arith.constant 0 : index
    %c0_139 = arith.constant 0 : index
    %130 = vector.load %arg9[%c0_137, %c0_138, %c0_139] : memref<12x12x16xf32, #tpu.memory_space<vmem>>, vector<12x2x16xf32>
    tpu.vector_store %arg9[%c0_137, %c0_138, %c0_139], %129 {strides = array<i32>} : memref<12x12x16xf32, #tpu.memory_space<vmem>>, vector<12x2x16xf32>,
    %cst_140 = arith.constant 0.000000e+00 : f32
    %131 = vector.broadcast %cst_140 : f32 to vector<12x2x16xf32>
    %c0_141 = arith.constant 0 : index
    %c10_142 = arith.constant 10 : index
    %c0_143 = arith.constant 0 : index
    %132 = vector.load %arg9[%c0_141, %c10_142, %c0_143] : memref<12x12x16xf32, #tpu.memory_space<vmem>>, vector<12x2x16xf32>
    tpu.vector_store %arg9[%c0_141, %c10_142, %c0_143], %131 {strides = array<i32>} : memref<12x12x16xf32, #tpu.memory_space<vmem>>, vector<12x2x16xf32>,
    %133 = vector.shape_cast %124 : vector<64x16xf32> to vector<8x8x16xf32>
    %c2_144 = arith.constant 2 : index
    %c2_145 = arith.constant 2 : index
    %c0_146 = arith.constant 0 : index
    %134 = vector.load %arg9[%c2_144, %c2_145, %c0_146] : memref<12x12x16xf32, #tpu.memory_space<vmem>>, vector<8x8x16xf32>
    tpu.vector_store %arg9[%c2_144, %c2_145, %c0_146], %133 {strides = array<i32>} : memref<12x12x16xf32, #tpu.memory_space<vmem>>, vector<8x8x16xf32>,
    %c0_147 = arith.constant 0 : index
    %135 = memref.load %arg5[%c0_147] : memref<5xf32, #tpu.memory_space<smem>>
    %c0_148 = arith.constant 0 : index
    %c0_149 = arith.constant 0 : index
    %c0_150 = arith.constant 0 : index
    %136 = vector.load %arg9[%c0_148, %c0_149, %c0_150] : memref<12x12x16xf32, #tpu.memory_space<vmem>>, vector<8x12x16xf32>
    %137 = vector.broadcast %135 : f32 to vector<8x12x16xf32>
    %138 = arith.mulf %137, %136 : vector<8x12x16xf32>
    %c1_151 = arith.constant 1 : index
    %139 = memref.load %arg5[%c1_151] : memref<5xf32, #tpu.memory_space<smem>>
    %c1_152 = arith.constant 1 : index
    %c0_153 = arith.constant 0 : index
    %c0_154 = arith.constant 0 : index
    %140 = vector.load %arg9[%c1_152, %c0_153, %c0_154] : memref<12x12x16xf32, #tpu.memory_space<vmem>>, vector<8x12x16xf32>
    %141 = vector.broadcast %139 : f32 to vector<8x12x16xf32>
    %142 = arith.mulf %141, %140 : vector<8x12x16xf32>
    %143 = arith.addf %138, %142 : vector<8x12x16xf32>
    %c2_155 = arith.constant 2 : index
    %144 = memref.load %arg5[%c2_155] : memref<5xf32, #tpu.memory_space<smem>>
    %c2_156 = arith.constant 2 : index
    %c0_157 = arith.constant 0 : index
    %c0_158 = arith.constant 0 : index
    %145 = vector.load %arg9[%c2_156, %c0_157, %c0_158] : memref<12x12x16xf32, #tpu.memory_space<vmem>>, vector<8x12x16xf32>
    %146 = vector.broadcast %144 : f32 to vector<8x12x16xf32>
    %147 = arith.mulf %146, %145 : vector<8x12x16xf32>
    %148 = arith.addf %143, %147 : vector<8x12x16xf32>
    %c3 = arith.constant 3 : index
    %149 = memref.load %arg5[%c3] : memref<5xf32, #tpu.memory_space<smem>>
    %c3_159 = arith.constant 3 : index
    %c0_160 = arith.constant 0 : index
    %c0_161 = arith.constant 0 : index
    %150 = vector.load %arg9[%c3_159, %c0_160, %c0_161] : memref<12x12x16xf32, #tpu.memory_space<vmem>>, vector<8x12x16xf32>
    %151 = vector.broadcast %149 : f32 to vector<8x12x16xf32>
    %152 = arith.mulf %151, %150 : vector<8x12x16xf32>
    %153 = arith.addf %148, %152 : vector<8x12x16xf32>
    %c4 = arith.constant 4 : index
    %154 = memref.load %arg5[%c4] : memref<5xf32, #tpu.memory_space<smem>>
    %c4_162 = arith.constant 4 : index
    %c0_163 = arith.constant 0 : index
    %c0_164 = arith.constant 0 : index
    %155 = vector.load %arg9[%c4_162, %c0_163, %c0_164] : memref<12x12x16xf32, #tpu.memory_space<vmem>>, vector<8x12x16xf32>
    %156 = vector.broadcast %154 : f32 to vector<8x12x16xf32>
    %157 = arith.mulf %156, %155 : vector<8x12x16xf32>
    %158 = arith.addf %153, %157 : vector<8x12x16xf32>
    %c0_165 = arith.constant 0 : index
    %159 = memref.load %arg5[%c0_165] : memref<5xf32, #tpu.memory_space<smem>>
    %160 = vector.extract_strided_slice %158 {offsets = [0, 0, 0], sizes = [8, 8, 16], strides = [1, 1, 1]} : vector<8x12x16xf32> to vector<8x8x16xf32>
    %161 = vector.broadcast %159 : f32 to vector<8x8x16xf32>
    %162 = arith.mulf %161, %160 : vector<8x8x16xf32>
    %c1_166 = arith.constant 1 : index
    %163 = memref.load %arg5[%c1_166] : memref<5xf32, #tpu.memory_space<smem>>
    %164 = vector.extract_strided_slice %158 {offsets = [0, 1, 0], sizes = [8, 8, 16], strides = [1, 1, 1]} : vector<8x12x16xf32> to vector<8x8x16xf32>
    %165 = vector.broadcast %163 : f32 to vector<8x8x16xf32>
    %166 = arith.mulf %165, %164 : vector<8x8x16xf32>
    %167 = arith.addf %162, %166 : vector<8x8x16xf32>
    %c2_167 = arith.constant 2 : index
    %168 = memref.load %arg5[%c2_167] : memref<5xf32, #tpu.memory_space<smem>>
    %169 = vector.extract_strided_slice %158 {offsets = [0, 2, 0], sizes = [8, 8, 16], strides = [1, 1, 1]} : vector<8x12x16xf32> to vector<8x8x16xf32>
    %170 = vector.broadcast %168 : f32 to vector<8x8x16xf32>
    %171 = arith.mulf %170, %169 : vector<8x8x16xf32>
    %172 = arith.addf %167, %171 : vector<8x8x16xf32>
    %c3_168 = arith.constant 3 : index
    %173 = memref.load %arg5[%c3_168] : memref<5xf32, #tpu.memory_space<smem>>
    %174 = vector.extract_strided_slice %158 {offsets = [0, 3, 0], sizes = [8, 8, 16], strides = [1, 1, 1]} : vector<8x12x16xf32> to vector<8x8x16xf32>
    %175 = vector.broadcast %173 : f32 to vector<8x8x16xf32>
    %176 = arith.mulf %175, %174 : vector<8x8x16xf32>
    %177 = arith.addf %172, %176 : vector<8x8x16xf32>
    %c4_169 = arith.constant 4 : index
    %178 = memref.load %arg5[%c4_169] : memref<5xf32, #tpu.memory_space<smem>>
    %179 = vector.extract_strided_slice %158 {offsets = [0, 4, 0], sizes = [8, 8, 16], strides = [1, 1, 1]} : vector<8x12x16xf32> to vector<8x8x16xf32>
    %180 = vector.broadcast %178 : f32 to vector<8x8x16xf32>
    %181 = arith.mulf %180, %179 : vector<8x8x16xf32>
    %182 = arith.addf %177, %181 : vector<8x8x16xf32>
    %cst_170 = arith.constant 0.000000e+00 : f32
    %183 = vector.broadcast %cst_170 : f32 to vector<8x8x16xf32>
    %184 = arith.cmpf ogt, %182, %183 : vector<8x8x16xf32>
    %cst_171 = arith.constant 2.000000e-01 : f32
    %185 = vector.broadcast %cst_171 : f32 to vector<8x8x16xf32>
    %186 = arith.mulf %185, %182 : vector<8x8x16xf32>
    %187 = arith.select %184, %182, %186 : vector<8x8x16xi1>, vector<8x8x16xf32>
    %188 = vector.shape_cast %187 : vector<8x8x16xf32> to vector<1x8x8x16xf32>
    %c0_172 = arith.constant 0 : index
    %c0_173 = arith.constant 0 : index
    %c0_174 = arith.constant 0 : index
    %c0_175 = arith.constant 0 : index
    %189 = vector.load %arg6[%c0_172, %c0_173, %c0_174, %c0_175] : memref<1x8x8x16xf32, #tpu.memory_space<vmem>>, vector<1x8x8x16xf32>
    tpu.vector_store %arg6[%c0_172, %c0_173, %c0_174, %c0_175], %188 {strides = array<i32>} : memref<1x8x8x16xf32, #tpu.memory_space<vmem>>, vector<1x8x8x16xf32>,
    return
  }
  func.func @transform_0(%arg0: i32) -> (i32, i32, i32, i32) {
    %c0_i32 = arith.constant 0 : i32
    %c0_i32_0 = arith.constant 0 : i32
    %c0_i32_1 = arith.constant 0 : i32
    %c0_i32_2 = arith.constant 0 : i32
    return %arg0, %c0_i32, %c0_i32_0, %c0_i32_1 : i32, i32, i32, i32
  }
  func.func @transform_1(%arg0: i32) -> (i32, i32) {
    %c0_i32 = arith.constant 0 : i32
    %c0_i32_0 = arith.constant 0 : i32
    %c0_i32_1 = arith.constant 0 : i32
    return %c0_i32, %c0_i32_0 : i32, i32
  }
  func.func @transform_2(%arg0: i32) -> (i32, i32) {
    %c0_i32 = arith.constant 0 : i32
    %c0_i32_0 = arith.constant 0 : i32
    %c0_i32_1 = arith.constant 0 : i32
    return %c0_i32, %c0_i32_0 : i32, i32
  }
  func.func @transform_3(%arg0: i32) -> (i32, i32) {
    %c0_i32 = arith.constant 0 : i32
    %c0_i32_0 = arith.constant 0 : i32
    %c0_i32_1 = arith.constant 0 : i32
    return %c0_i32, %c0_i32_0 : i32, i32
  }
  func.func @transform_4(%arg0: i32) -> i32 {
    %c0_i32 = arith.constant 0 : i32
    %c0_i32_0 = arith.constant 0 : i32
    return %c0_i32 : i32
  }
  func.func @transform_5(%arg0: i32) -> (i32, i32, i32, i32) {
    %c0_i32 = arith.constant 0 : i32
    %c0_i32_0 = arith.constant 0 : i32
    %c0_i32_1 = arith.constant 0 : i32
    %c0_i32_2 = arith.constant 0 : i32
    return %arg0, %c0_i32, %c0_i32_0, %c0_i32_1 : i32, i32, i32, i32
  }
}

</mosaic_0001>

<llo_original>
// kernel: encoder_block_forward.2
$region0: #{encoder_block_forward.2}
  #allocation0 [shape = 'u32[]', space=smem, size = 0x4, offset = 0x4, fixed_abs, tag = 'smem constant byte address 0x4 - core index']
  #allocation1 [shape = 'u32[144,128]{1,0:T(1,128)}', space=vmem, size = 0x12000, scoped, tag = 'internal scratch']
  #allocation2 [shape = 'bf16[64,36]{1,0:T(16,128)(2,1)}', space=vmem, size = 0x4000, scoped, tag = 'scratch operand']
  %s0 = inlined_call_operand.hbm [shape: bf16[2,9,9,4], index: 0, kind: input, shape index: {}]
  %s1 = inlined_call_operand.hbm [shape: bf16[2,9,9,4], index: 1, kind: input, shape index: {}]
  %s2 = inlined_call_operand.hbm [shape: bf16[2,9,9,4], index: 2, kind: input, shape index: {}]
  %s3 = inlined_call_operand.hbm [shape: bf16[2,9,9,4], index: 3, kind: input, shape index: {}]
  %s4 = inlined_call_operand.hbm [shape: bf16[36,16], index: 4, kind: input, shape index: {}]
  %s5 = inlined_call_operand.hbm [shape: f32[2,8,8,16], index: 5, kind: output, shape index: {}]
  %s6 = sld [smem:[#allocation0]]
  $region73: #{encoder_block_forward.2} parent=0
    _
  %s8 = ssub.s32 1, %s6
  %s9 = scalar_select 0, %s8, %s6
  $region1: #{encoder_block_forward.2} parent=0
    #allocation3 [shape = 'u8[73728]{0}', space=vmem, size = 0x12000, scoped, tag = 'input window, operand 0']
    #allocation4 [shape = 's32[2]{0}', space=sflag, size = 0x8, scoped, tag = 'scoped memory for encoder_block_forward.2']
    #allocation5 [shape = 's32[2]{0}', space=sflag, size = 0x8, scoped, tag = 'scoped memory for encoder_block_forward.2']
    #allocation6 [shape = 'u8[73728]{0}', space=vmem, size = 0x12000, scoped, tag = 'input window, operand 1']
    #allocation7 [shape = 's32[2]{0}', space=sflag, size = 0x8, scoped, tag = 'scoped memory for encoder_block_forward.2']
    #allocation8 [shape = 'u8[73728]{0}', space=vmem, size = 0x12000, scoped, tag = 'input window, operand 2']
    #allocation9 [shape = 'u8[73728]{0}', space=vmem, size = 0x12000, scoped, tag = 'input window, operand 3']
    #allocation10 [shape = 's32[2]{0}', space=sflag, size = 0x8, scoped, tag = 'scoped memory for encoder_block_forward.2']
    #allocation11 [shape = 'u8[10240]{0}', space=vmem, size = 0x2800, scoped, tag = 'input window, operand 4, single buffered']
    #allocation12 [shape = 'u8[65536]{0}', space=vmem, size = 0x10000, scoped, tag = 'output window, operand 0']
    %10 = vsyncpa [#allocation4], 0
    %s11 = scalar_lea.sflag [#allocation4], 1
    %12 = vsyncpa %s11, 0
    %13 = vsyncpa [#allocation7], 0
    %s14 = scalar_lea.sflag [#allocation7], 1
    %15 = vsyncpa %s14, 0
    %16 = vsyncpa [#allocation10], 0
    %s17 = scalar_lea.sflag [#allocation10], 1
    %18 = vsyncpa %s17, 0
    %19 = vsyncpa [#allocation5], 0
    %s20 = scalar_lea.sflag [#allocation5], 1
    %21 = vsyncpa %s20, 0
    loop: start=0, step=1, limit=4
    $region2: #{encoder_block_forward.2} parent=1 // loop_pre_header
      _
    $region3: #{encoder_block_forward.2} parent=1 // loop_header
      %s23 = sphi 0, %s27
      %p24 = scmp.ge.s32.totalorder %s23, 4
      %s33 = sphi 0, %s35
      %s36 = sphi 0, %s33
      %s37 = sphi 0, %s36
      %s53 = sphi 0, %s37
      %s59 = sphi 0, %s61
      %s62 = sphi 0, %s59
      %s63 = sphi 0, %s62
      %s79 = sphi 0, %s63
      %s85 = sphi 0, %s87
      %s88 = sphi 0, %s85
      %s89 = sphi 0, %s88
      %s105 = sphi 0, %s89
      %s111 = sphi 0, %s113
      %s114 = sphi 0, %s111
      %s115 = sphi 0, %s114
      %s131 = sphi 0, %s115
      %s135 = sphi 0, %s135
      %s137 = sphi 0, %s135
      %s138 = sphi 0, %s137
      %s152 = sphi 0, %s138
      %s158 = sphi 0, %s160
      %s161 = sphi 0, %s158
      %s162 = sphi 0, %s161
      %s178 = sphi 0, %s162
    $region4: #{encoder_block_forward.2} parent=1 // loop_header_branch
      %26 = sbr.rel (%p24) target = $region8
    $region5: #{encoder_block_forward.2} parent=1 // loop_body
      %s28 = ssub.s32 %s23, 1
      %s29 = ssub.s32 %s23, 2
      %s30 = sadd.s32 %s23, 1
      %s31 = ssub.s32 %s23, %s30
      %p32 = scmp.eq.s32.totalorder %s31, 0
      %s34 = sadd.s32 %s33, 1
      %s35 = scalar_select %p32, %s33, %s34
      %p38 = pneg %p32
      %p39 = scmp.eq.s32.totalorder %s23, 1
      %p40 = por %p38, %p39
      %p41 = scmp.ne.s32.totalorder %s33, %s36
      %p42 = scmp.eq.s32.totalorder %s23, 0
      %p43 = por %p41, %p42
      %p44 = scmp.ne.s32.totalorder %s33, %s36
      %p45 = scmp.eq.s32.totalorder %s28, 1
      %p46 = por %p44, %p45
      %p47 = scmp.ne.s32.totalorder %s36, %s37
      %p48 = scmp.eq.s32.totalorder %s28, 0
      %p49 = por %p47, %p48
      %p50 = scmp.ne.s32.totalorder %s36, %s37
      %p51 = scmp.eq.s32.totalorder %s29, 1
      %p52 = por %p50, %p51
      %p54 = scmp.ne.s32.totalorder %s37, %s53
      %p55 = scmp.eq.s32.totalorder %s29, 0
      %p56 = por %p54, %p55
      %s57 = ssub.s32 %s23, %s30
      %p58 = scmp.eq.s32.totalorder %s57, 0
      %s60 = sadd.s32 %s59, 1
      %s61 = scalar_select %p58, %s59, %s60
      %p64 = pneg %p58
      %p65 = scmp.eq.s32.totalorder %s23, 1
      %p66 = por %p64, %p65
      %p67 = scmp.ne.s32.totalorder %s59, %s62
      %p68 = scmp.eq.s32.totalorder %s23, 0
      %p69 = por %p67, %p68
      %p70 = scmp.ne.s32.totalorder %s59, %s62
      %p71 = scmp.eq.s32.totalorder %s28, 1
      %p72 = por %p70, %p71
      %p73 = scmp.ne.s32.totalorder %s62, %s63
      %p74 = scmp.eq.s32.totalorder %s28, 0
      %p75 = por %p73, %p74
      %p76 = scmp.ne.s32.totalorder %s62, %s63
      %p77 = scmp.eq.s32.totalorder %s29, 1
      %p78 = por %p76, %p77
      %p80 = scmp.ne.s32.totalorder %s63, %s79
      %p81 = scmp.eq.s32.totalorder %s29, 0
      %p82 = por %p80, %p81
      %s83 = ssub.s32 %s23, %s30
      %p84 = scmp.eq.s32.totalorder %s83, 0
      %s86 = sadd.s32 %s85, 1
      %s87 = scalar_select %p84, %s85, %s86
      %p90 = pneg %p84
      %p91 = scmp.eq.s32.totalorder %s23, 1
      %p92 = por %p90, %p91
      %p93 = scmp.ne.s32.totalorder %s85, %s88
      %p94 = scmp.eq.s32.totalorder %s23, 0
      %p95 = por %p93, %p94
      %p96 = scmp.ne.s32.totalorder %s85, %s88
      %p97 = scmp.eq.s32.totalorder %s28, 1
      %p98 = por %p96, %p97
      %p99 = scmp.ne.s32.totalorder %s88, %s89
      %p100 = scmp.eq.s32.totalorder %s28, 0
      %p101 = por %p99, %p100
      %p102 = scmp.ne.s32.totalorder %s88, %s89
      %p103 = scmp.eq.s32.totalorder %s29, 1
      %p104 = por %p102, %p103
      %p106 = scmp.ne.s32.totalorder %s89, %s105
      %p107 = scmp.eq.s32.totalorder %s29, 0
      %p108 = por %p106, %p107
      %s109 = ssub.s32 %s23, %s30
      %p110 = scmp.eq.s32.totalorder %s109, 0
      %s112 = sadd.s32 %s111, 1
      %s113 = scalar_select %p110, %s111, %s112
      %p116 = pneg %p110
      %p117 = scmp.eq.s32.totalorder %s23, 1
      %p118 = por %p116, %p117
      %p119 = scmp.ne.s32.totalorder %s111, %s114
      %p120 = scmp.eq.s32.totalorder %s23, 0
      %p121 = por %p119, %p120
      %p122 = scmp.ne.s32.totalorder %s111, %s114
      %p123 = scmp.eq.s32.totalorder %s28, 1
      %p124 = por %p122, %p123
      %p125 = scmp.ne.s32.totalorder %s114, %s115
      %p126 = scmp.eq.s32.totalorder %s28, 0
      %p127 = por %p125, %p126
      %p128 = scmp.ne.s32.totalorder %s114, %s115
      %p129 = scmp.eq.s32.totalorder %s29, 1
      %p130 = por %p128, %p129
      %p132 = scmp.ne.s32.totalorder %s115, %s131
      %p133 = scmp.eq.s32.totalorder %s29, 0
      %p134 = por %p132, %p133
      %s136 = sadd.s32 %s135, 1
      %p139 = scmp.eq.s32.totalorder %s23, 1
      %p140 = scmp.ne.s32.totalorder %s135, %s137
      %p141 = scmp.eq.s32.totalorder %s23, 0
      %p142 = por %p140, %p141
      %p143 = scmp.ne.s32.totalorder %s135, %s137
      %p144 = scmp.eq.s32.totalorder %s28, 1
      %p145 = por %p143, %p144
      %p146 = scmp.ne.s32.totalorder %s137, %s138
      %p147 = scmp.eq.s32.totalorder %s28, 0
      %p148 = por %p146, %p147
      %p149 = scmp.ne.s32.totalorder %s137, %s138
      %p150 = scmp.eq.s32.totalorder %s29, 1
      %p151 = por %p149, %p150
      %p153 = scmp.ne.s32.totalorder %s138, %s152
      %p154 = scmp.eq.s32.totalorder %s29, 0
      %p155 = por %p153, %p154
      %s156 = ssub.s32 %s23, %s30
      %p157 = scmp.eq.s32.totalorder %s156, 0
      %s159 = sadd.s32 %s158, 1
      %s160 = scalar_select %p157, %s158, %s159
      %p163 = pneg %p157
      %p164 = scmp.eq.s32.totalorder %s23, 1
      %p165 = por %p163, %p164
      %p166 = scmp.ne.s32.totalorder %s158, %s161
      %p167 = scmp.eq.s32.totalorder %s23, 0
      %p168 = por %p166, %p167
      %p169 = scmp.ne.s32.totalorder %s158, %s161
      %p170 = scmp.eq.s32.totalorder %s28, 1
      %p171 = por %p169, %p170
      %p172 = scmp.ne.s32.totalorder %s161, %s162
      %p173 = scmp.eq.s32.totalorder %s28, 0
      %p174 = por %p172, %p173
      %p175 = scmp.ne.s32.totalorder %s161, %s162
      %p176 = scmp.eq.s32.totalorder %s29, 1
      %p177 = por %p175, %p176
      %p179 = scmp.ne.s32.totalorder %s162, %s178
      %p180 = scmp.eq.s32.totalorder %s29, 0
      %p181 = por %p179, %p180
      %p182 = scmp.le.s32.totalorder 1, %s23
      %p183 = scmp.lt.s32.totalorder %s23, 3
      %p184 = pnand %p182, %p183
      %p185 = pneg %p184
      // Predicated region
      $region9: #{encoder_block_forward.2} parent=5 // pred_check
        _
      $region10: #{encoder_block_forward.2} parent=5 // pred_check_branch
        %187 = sbr.rel (%p184) target = $region12
      $region11: #{encoder_block_forward.2} parent=5 // pred_region
        %s188 = ssub.s32 %s23, 1
        // Predicated region
        $region13: #{encoder_block_forward.2} parent=11 // pred_check
          %p189 = pneg %p148
        $region14: #{encoder_block_forward.2} parent=11 // pred_check_branch
          %191 = sbr.rel (%p189) target = $region16
        $region15: #{encoder_block_forward.2} parent=11 // pred_region
          %s193 = ssub.s32 320, 320
          %194 = vsyncadd [#allocation10], %s193
          %s195 = sshll.u32 [#allocation11], 4
          %s196 = int_to_ptr.vmem [resolvable:$true] %s195
          %201 = dma.hbm_to_vmem [thread:$0]  %s4, 320, %s196, [#allocation10], 64, 64, 4
        $region16: #{encoder_block_forward.2} parent=11 // pred_fallthru
          _
      $region12: #{encoder_block_forward.2} parent=5 // pred_fallthru
        _
      %p202 = scmp.lt.s32.totalorder %s23, 2
      // Predicated region
      $region17: #{encoder_block_forward.2} parent=5 // pred_check
        %p203 = pneg %p202
      $region18: #{encoder_block_forward.2} parent=5 // pred_check_branch
        %205 = sbr.rel (%p203) target = $region20
      $region19: #{encoder_block_forward.2} parent=5 // pred_region
        // Predicated region
        $region21: #{encoder_block_forward.2} parent=19 // pred_check
          %p206 = pneg %p43
        $region22: #{encoder_block_forward.2} parent=19 // pred_check_branch
          %208 = sbr.rel (%p206) target = $region24
        $region23: #{encoder_block_forward.2} parent=19 // pred_region
          %s209 = sand.u32 %s33, 1
          %s210 = scalar_lea.sflag [#allocation4], %s209
          %s211 = sand.u32 %s33, 1
          %s212 = smul.addr %s211, 72
          %s213 = scalar_lea.vmem [#allocation3], %s212
          %s215 = ssub.s32 1152, 1152
          %216 = vsyncadd %s210, %s215
          %s217 = smul.addr %s23, 18
          %s218 = smul.addr %s217, 64
          %s219 = scalar_lea.hbm %s0, %s218
          %s220 = sshll.u32 %s213, 4
          %s221 = int_to_ptr.vmem [resolvable:$true] %s220
          %226 = dma.hbm_to_vmem [thread:$0]  %s219, 1152, %s221, %s210, 64, 64, 4
        $region24: #{encoder_block_forward.2} parent=19 // pred_fallthru
          _
        // Predicated region
        $region25: #{encoder_block_forward.2} parent=19 // pred_check
          %p227 = pneg %p69
        $region26: #{encoder_block_forward.2} parent=19 // pred_check_branch
          %229 = sbr.rel (%p227) target = $region28
        $region27: #{encoder_block_forward.2} parent=19 // pred_region
          %s230 = sand.u32 %s23, 1
          %s231 = scalar_lea.sflag [#allocation7], %s230
          %s232 = sand.u32 %s59, 1
          %s233 = smul.addr %s232, 72
          %s234 = scalar_lea.vmem [#allocation6], %s233
          %s236 = ssub.s32 1152, 1152
          %237 = vsyncadd %s231, %s236
          %s238 = smul.addr %s23, 18
          %s239 = smul.addr %s238, 64
          %s240 = scalar_lea.hbm %s1, %s239
          %s241 = sshll.u32 %s234, 4
          %s242 = int_to_ptr.vmem [resolvable:$true] %s241
          %247 = dma.hbm_to_vmem [thread:$0]  %s240, 1152, %s242, %s231, 64, 64, 4
        $region28: #{encoder_block_forward.2} parent=19 // pred_fallthru
          _
        // Predicated region
        $region29: #{encoder_block_forward.2} parent=19 // pred_check
          %p248 = pneg %p95
        $region30: #{encoder_block_forward.2} parent=19 // pred_check_branch
          %250 = sbr.rel (%p248) target = $region32
        $region31: #{encoder_block_forward.2} parent=19 // pred_region
          %s251 = sand.u32 %s23, 1
          %s252 = scalar_lea.sflag [#allocation7], %s251
          %s253 = sand.u32 %s85, 1
          %s254 = smul.addr %s253, 72
          %s255 = scalar_lea.vmem [#allocation8], %s254
          %s257 = ssub.s32 1152, 1152
          %258 = vsyncadd %s252, %s257
          %s259 = smul.addr %s23, 18
          %s260 = smul.addr %s259, 64
          %s261 = scalar_lea.hbm %s2, %s260
          %s262 = sshll.u32 %s255, 4
          %s263 = int_to_ptr.vmem [resolvable:$true] %s262
          %268 = dma.hbm_to_vmem [thread:$0]  %s261, 1152, %s263, %s252, 64, 64, 4
        $region32: #{encoder_block_forward.2} parent=19 // pred_fallthru
          _
        // Predicated region
        $region33: #{encoder_block_forward.2} parent=19 // pred_check
          %p269 = pneg %p121
        $region34: #{encoder_block_forward.2} parent=19 // pred_check_branch
          %271 = sbr.rel (%p269) target = $region36
        $region35: #{encoder_block_forward.2} parent=19 // pred_region
          %s272 = sand.u32 %s23, 1
          %s273 = scalar_lea.sflag [#allocation10], %s272
          %s274 = sand.u32 %s111, 1
          %s275 = smul.addr %s274, 72
          %s276 = scalar_lea.vmem [#allocation9], %s275
          %s278 = ssub.s32 1152, 1152
          %279 = vsyncadd %s273, %s278
          %s280 = smul.addr %s23, 18
          %s281 = smul.addr %s280, 64
          %s282 = scalar_lea.hbm %s3, %s281
          %s283 = sshll.u32 %s276, 4
          %s284 = int_to_ptr.vmem [resolvable:$true] %s283
          %289 = dma.hbm_to_vmem [thread:$0]  %s282, 1152, %s284, %s273, 64, 64, 4
        $region36: #{encoder_block_forward.2} parent=19 // pred_fallthru
          _
      $region20: #{encoder_block_forward.2} parent=5 // pred_fallthru
        _
      %p290 = scmp.le.s32.totalorder 1, %s23
      %p291 = scmp.lt.s32.totalorder %s23, 3
      %p292 = pnand %p290, %p291
      %p293 = pneg %p292
      // Predicated region
      $region37: #{encoder_block_forward.2} parent=5 // pred_check
        _
      $region38: #{encoder_block_forward.2} parent=5 // pred_check_branch
        %295 = sbr.rel (%p292) target = $region40
      $region39: #{encoder_block_forward.2} parent=5 // pred_region
        %s296 = ssub.s32 %s23, 1
        %s297 = sand.u32 %s36, 1
        %s298 = scalar_lea.sflag [#allocation4], %s297
        %s299 = sand.u32 %s36, 1
        %s300 = smul.addr %s299, 72
        %s301 = scalar_lea.vmem [#allocation3], %s300
        // Predicated region
        $region41: #{encoder_block_forward.2} parent=39 // pred_check
          %p302 = pneg %p49
        $region42: #{encoder_block_forward.2} parent=39 // pred_check_branch
          %304 = sbr.rel (%p302) target = $region44
        $region43: #{encoder_block_forward.2} parent=39 // pred_region
          %305 = dma.done %s298, 1152
        $region44: #{encoder_block_forward.2} parent=39 // pred_fallthru
          _
        %s306 = sand.u32 %s28, 1
        %s307 = scalar_lea.sflag [#allocation7], %s306
        %s308 = sand.u32 %s62, 1
        %s309 = smul.addr %s308, 72
        %s310 = scalar_lea.vmem [#allocation6], %s309
        // Predicated region
        $region45: #{encoder_block_forward.2} parent=39 // pred_check
          %p311 = pneg %p75
        $region46: #{encoder_block_forward.2} parent=39 // pred_check_branch
          %313 = sbr.rel (%p311) target = $region48
        $region47: #{encoder_block_forward.2} parent=39 // pred_region
          %314 = dma.done %s307, 1152
        $region48: #{encoder_block_forward.2} parent=39 // pred_fallthru
          _
        %s315 = sand.u32 %s28, 1
        %s316 = scalar_lea.sflag [#allocation7], %s315
        %s317 = sand.u32 %s88, 1
        %s318 = smul.addr %s317, 72
        %s319 = scalar_lea.vmem [#allocation8], %s318
        // Predicated region
        $region49: #{encoder_block_forward.2} parent=39 // pred_check
          %p320 = pneg %p101
        $region50: #{encoder_block_forward.2} parent=39 // pred_check_branch
          %322 = sbr.rel (%p320) target = $region52
        $region51: #{encoder_block_forward.2} parent=39 // pred_region
          %323 = dma.done %s316, 1152
        $region52: #{encoder_block_forward.2} parent=39 // pred_fallthru
          _
        %s324 = sand.u32 %s28, 1
        %s325 = scalar_lea.sflag [#allocation10], %s324
        %s326 = sand.u32 %s114, 1
        %s327 = smul.addr %s326, 72
        %s328 = scalar_lea.vmem [#allocation9], %s327
        // Predicated region
        $region53: #{encoder_block_forward.2} parent=39 // pred_check
          %p329 = pneg %p127
        $region54: #{encoder_block_forward.2} parent=39 // pred_check_branch
          %331 = sbr.rel (%p329) target = $region56
        $region55: #{encoder_block_forward.2} parent=39 // pred_region
          %332 = dma.done %s325, 1152
        $region56: #{encoder_block_forward.2} parent=39 // pred_fallthru
          _
        // Predicated region
        $region57: #{encoder_block_forward.2} parent=39 // pred_check
          %p333 = pneg %p148
        $region58: #{encoder_block_forward.2} parent=39 // pred_check_branch
          %335 = sbr.rel (%p333) target = $region60
        $region59: #{encoder_block_forward.2} parent=39 // pred_region
          %336 = dma.done [#allocation10], 320
        $region60: #{encoder_block_forward.2} parent=39 // pred_fallthru
          _
        %s337 = sand.u32 %s36, 1
        %s338 = scalar_lea.sflag [#allocation4], %s337
        %s339 = sand.u32 %s36, 1
        %s340 = smul.addr %s339, 72
        %s341 = scalar_lea.vmem [#allocation3], %s340
        %p342 = pneg %p49
        %p343 = pneg %p46
        %s344 = sand.u32 %s28, 1
        %s345 = scalar_lea.sflag [#allocation7], %s344
        %s346 = sand.u32 %s62, 1
        %s347 = smul.addr %s346, 72
        %s348 = scalar_lea.vmem [#allocation6], %s347
        %p349 = pneg %p75
        %p350 = pneg %p72
        %s351 = sand.u32 %s28, 1
        %s352 = scalar_lea.sflag [#allocation7], %s351
        %s353 = sand.u32 %s88, 1
        %s354 = smul.addr %s353, 72
        %s355 = scalar_lea.vmem [#allocation8], %s354
        %p356 = pneg %p101
        %p357 = pneg %p98
        %s358 = sand.u32 %s28, 1
        %s359 = scalar_lea.sflag [#allocation10], %s358
        %s360 = sand.u32 %s114, 1
        %s361 = smul.addr %s360, 72
        %s362 = scalar_lea.vmem [#allocation9], %s361
        %p363 = pneg %p127
        %p364 = pneg %p124
        %p365 = pneg %p148
        %p366 = pneg %p145
        %p367 = pneg %p174
        %p368 = pneg %p171
        %s369 = sand.u32 %s161, 1
        %s370 = scalar_lea.sflag [#allocation5], %s369
        %s371 = sand.u32 %s161, 1
        %s372 = smul.addr %s371, 64
        %s373 = scalar_lea.vmem [#allocation12], %s372
        %v375 = vld [vmem:[%s301] sm:$0xf]
        %v376 = vld [vmem:[%s301 + $0x4] sm:$0x1]
        %v377 = vld [vmem:[%s301 + $0x8] sm:$0xf]
        %v378 = vld [vmem:[%s301 + $0xc] sm:$0x1]
        %v379 = vld [vmem:[%s301 + $0x10] sm:$0xf]
        %v380 = vld [vmem:[%s301 + $0x14] sm:$0x1]
        %v381 = vld [vmem:[%s301 + $0x18] sm:$0xf]
        %v382 = vld [vmem:[%s301 + $0x1c] sm:$0x1]
        %v383 = vld [vmem:[%s301 + $0x20] sm:$0xf]
        %v384 = vld [vmem:[%s301 + $0x24] sm:$0x1]
        %v385 = vld [vmem:[%s301 + $0x28] sm:$0xf]
        %v386 = vld [vmem:[%s301 + $0x2c] sm:$0x1]
        %v387 = vld [vmem:[%s301 + $0x30] sm:$0xf]
        %v388 = vld [vmem:[%s301 + $0x34] sm:$0x1]
        %v389 = vld [vmem:[%s301 + $0x38] sm:$0xf]
        %v390 = vld [vmem:[%s301 + $0x3c] sm:$0x1]
        %v391 = vld [vmem:[%s301 + $0x40] sm:$0xf]
        %v392 = vld [vmem:[%s301 + $0x44] sm:$0x1]
        %v393 = vld [vmem:[%s310] sm:$0xf]
        %v394 = vld [vmem:[%s310 + $0x8] sm:$0xf]
        %v395 = vld [vmem:[%s310 + $0x10] sm:$0xf]
        %v396 = vld [vmem:[%s310 + $0x18] sm:$0xf]
        %v397 = vld [vmem:[%s310 + $0x20] sm:$0xf]
        %v398 = vld [vmem:[%s310 + $0x28] sm:$0xf]
        %v399 = vld [vmem:[%s310 + $0x30] sm:$0xf]
        %v400 = vld [vmem:[%s310 + $0x38] sm:$0xf]
        %v401 = vld [vmem:[%s310 + $0x40] sm:$0xf]
        %v402 = vld [vmem:[%s319] sm:$0xf]
        %v403 = vld [vmem:[%s319 + $0x4] sm:$0x1]
        %v404 = vld [vmem:[%s319 + $0x8] sm:$0xf]
        %v405 = vld [vmem:[%s319 + $0xc] sm:$0x1]
        %v406 = vld [vmem:[%s319 + $0x10] sm:$0xf]
        %v407 = vld [vmem:[%s319 + $0x14] sm:$0x1]
        %v408 = vld [vmem:[%s319 + $0x18] sm:$0xf]
        %v409 = vld [vmem:[%s319 + $0x1c] sm:$0x1]
        %v410 = vld [vmem:[%s319 + $0x20] sm:$0xf]
        %v411 = vld [vmem:[%s319 + $0x24] sm:$0x1]
        %v412 = vld [vmem:[%s319 + $0x28] sm:$0xf]
        %v413 = vld [vmem:[%s319 + $0x2c] sm:$0x1]
        %v414 = vld [vmem:[%s319 + $0x30] sm:$0xf]
        %v415 = vld [vmem:[%s319 + $0x34] sm:$0x1]
        %v416 = vld [vmem:[%s319 + $0x38] sm:$0xf]
        %v417 = vld [vmem:[%s319 + $0x3c] sm:$0x1]
        %v418 = vld [vmem:[%s328] sm:$0xf]
        %v419 = vld [vmem:[%s328 + $0x8] sm:$0xf]
        %v420 = vld [vmem:[%s328 + $0x10] sm:$0xf]
        %v421 = vld [vmem:[%s328 + $0x18] sm:$0xf]
        %v422 = vld [vmem:[%s328 + $0x20] sm:$0xf]
        %v423 = vld [vmem:[%s328 + $0x28] sm:$0xf]
        %v424 = vld [vmem:[%s328 + $0x30] sm:$0xf]
        %v425 = vld [vmem:[%s328 + $0x38] sm:$0xf]
        %v434 = vunpack.c.l.b16 %v375
        %v435 = vunpack.c.l.b16 %v377
        %v436 = vunpack.c.l.b16 %v379
        %v437 = vunpack.c.l.b16 %v381
        %v438 = vunpack.c.l.b16 %v383
        %v439 = vunpack.c.l.b16 %v385
        %v440 = vunpack.c.l.b16 %v387
        %v441 = vunpack.c.l.b16 %v389
        %v442 = vpack.c.b16 %v435, %v434
        %v443 = vpack.c.b16 %v437, %v436
        %v444 = vpack.c.b16 %v439, %v438
        %v445 = vpack.c.b16 %v441, %v440
        %vm450 = vcmask 31744
        %451 = vst.msk [vmem:[#allocation2] sm:$0xff] %vm450, %v442
        %452 = vst.msk [vmem:[#allocation2 + $0x8] sm:$0xff] %vm450, %v443
        %453 = vst.msk [vmem:[#allocation2 + $0x10] sm:$0xff] %vm450, %v444
        %454 = vst.msk [vmem:[#allocation2 + $0x18] sm:$0xff] %vm450, %v445
        %v463 = vunpack.c.l.b16 %v393
        %v464 = vunpack.c.l.b16 %v394
        %v465 = vunpack.c.l.b16 %v395
        %v466 = vunpack.c.l.b16 %v396
        %v467 = vunpack.c.l.b16 %v397
        %v468 = vunpack.c.l.b16 %v398
        %v469 = vunpack.c.l.b16 %v399
        %v470 = vunpack.c.l.b16 %v400
        %v471 = vpack.c.b16 %v464, %v463
        %v472 = vpack.c.b16 %v466, %v465
        %v473 = vpack.c.b16 %v468, %v467
        %v474 = vpack.c.b16 %v470, %v469
        %475 = vrot.lane.b32.xlu0 %v471, 4
        %v476 = vpop.permute.xlu0 %475
        %477 = vrot.lane.b32.xlu0 %v472, 4
        %v478 = vpop.permute.xlu0 %477
        %479 = vrot.lane.b32.xlu0 %v473, 4
        %v480 = vpop.permute.xlu0 %479
        %481 = vrot.lane.b32.xlu0 %v474, 4
        %v482 = vpop.permute.xlu0 %481
        %vm487 = vcmask 64544
        %488 = vst.msk [vmem:[#allocation2] sm:$0xff] %vm487, %v476
        %489 = vst.msk [vmem:[#allocation2 + $0x8] sm:$0xff] %vm487, %v478
        %490 = vst.msk [vmem:[#allocation2 + $0x10] sm:$0xff] %vm487, %v480
        %491 = vst.msk [vmem:[#allocation2 + $0x18] sm:$0xff] %vm487, %v482
        %vm492 = vsmask.f32 3328
        %vm493 = vsmask.f32 7440
        %vm494 = vmor %vm492, %vm493
        %v496 = vshrl.u32 %v375, 16
        %v498 = vrot.slane %v496, 4
        %v499 = vshll.u32 %v375, 16
        %v501 = vrot.slane %v499, 5
        %v502 = vor.u32 %v498, %v501
        %v503 = vrot.slane %v502, 4
        %v505 = vshll.u32 %v376, 16
        %v507 = vrot.slane %v505, 5
        %v508 = vsel %vm494, %v503, %v507
        %v510 = vshrl.u32 %v377, 16
        %v512 = vrot.slane %v510, 4
        %v513 = vshll.u32 %v377, 16
        %v515 = vrot.slane %v513, 5
        %v516 = vor.u32 %v512, %v515
        %v517 = vrot.slane %v516, 4
        %v519 = vshll.u32 %v378, 16
        %v521 = vrot.slane %v519, 5
        %v522 = vsel %vm494, %v517, %v521
        %v524 = vshrl.u32 %v379, 16
        %v526 = vrot.slane %v524, 4
        %v527 = vshll.u32 %v379, 16
        %v529 = vrot.slane %v527, 5
        %v530 = vor.u32 %v526, %v529
        %v531 = vrot.slane %v530, 4
        %v533 = vshll.u32 %v380, 16
        %v535 = vrot.slane %v533, 5
        %v536 = vsel %vm494, %v531, %v535
        %v538 = vshrl.u32 %v381, 16
        %v540 = vrot.slane %v538, 4
        %v541 = vshll.u32 %v381, 16
        %v543 = vrot.slane %v541, 5
        %v544 = vor.u32 %v540, %v543
        %v545 = vrot.slane %v544, 4
        %v547 = vshll.u32 %v382, 16
        %v549 = vrot.slane %v547, 5
        %v550 = vsel %vm494, %v545, %v549
        %v552 = vshrl.u32 %v383, 16
        %v554 = vrot.slane %v552, 4
        %v555 = vshll.u32 %v383, 16
        %v557 = vrot.slane %v555, 5
        %v558 = vor.u32 %v554, %v557
        %v559 = vrot.slane %v558, 4
        %v561 = vshll.u32 %v384, 16
        %v563 = vrot.slane %v561, 5
        %v564 = vsel %vm494, %v559, %v563
        %v566 = vshrl.u32 %v385, 16
        %v568 = vrot.slane %v566, 4
        %v569 = vshll.u32 %v385, 16
        %v571 = vrot.slane %v569, 5
        %v572 = vor.u32 %v568, %v571
        %v573 = vrot.slane %v572, 4
        %v575 = vshll.u32 %v386, 16
        %v577 = vrot.slane %v575, 5
        %v578 = vsel %vm494, %v573, %v577
        %v580 = vshrl.u32 %v387, 16
        %v582 = vrot.slane %v580, 4
        %v583 = vshll.u32 %v387, 16
        %v585 = vrot.slane %v583, 5
        %v586 = vor.u32 %v582, %v585
        %v587 = vrot.slane %v586, 4
        %v589 = vshll.u32 %v388, 16
        %v591 = vrot.slane %v589, 5
        %v592 = vsel %vm494, %v587, %v591
        %v594 = vshrl.u32 %v389, 16
        %v596 = vrot.slane %v594, 4
        %v597 = vshll.u32 %v389, 16
        %v599 = vrot.slane %v597, 5
        %v600 = vor.u32 %v596, %v599
        %v601 = vrot.slane %v600, 4
        %v603 = vshll.u32 %v390, 16
        %v605 = vrot.slane %v603, 5
        %v606 = vsel %vm494, %v601, %v605
        %v607 = vunpack.c.l.b16 %v508
        %v608 = vunpack.c.l.b16 %v522
        %v609 = vunpack.c.l.b16 %v536
        %v610 = vunpack.c.l.b16 %v550
        %v611 = vunpack.c.l.b16 %v564
        %v612 = vunpack.c.l.b16 %v578
        %v613 = vunpack.c.l.b16 %v592
        %v614 = vunpack.c.l.b16 %v606
        %v615 = vpack.c.b16 %v608, %v607
        %v616 = vpack.c.b16 %v610, %v609
        %v617 = vpack.c.b16 %v612, %v611
        %v618 = vpack.c.b16 %v614, %v613
        %619 = vrot.lane.b32.xlu0 %v615, 8
        %v620 = vpop.permute.xlu0 %619
        %621 = vrot.lane.b32.xlu0 %v616, 8
        %v622 = vpop.permute.xlu0 %621
        %623 = vrot.lane.b32.xlu0 %v617, 8
        %v624 = vpop.permute.xlu0 %623
        %625 = vrot.lane.b32.xlu0 %v618, 8
        %v626 = vpop.permute.xlu0 %625
        %vm631 = vcmask 97344
        %632 = vst.msk [vmem:[#allocation2] sm:$0xff] %vm631, %v620
        %633 = vst.msk [vmem:[#allocation2 + $0x8] sm:$0xff] %vm631, %v622
        %634 = vst.msk [vmem:[#allocation2 + $0x10] sm:$0xff] %vm631, %v624
        %635 = vst.msk [vmem:[#allocation2 + $0x18] sm:$0xff] %vm631, %v626
        %v644 = vunpack.c.l.b16 %v402
        %v645 = vunpack.c.l.b16 %v404
        %v646 = vunpack.c.l.b16 %v406
        %v647 = vunpack.c.l.b16 %v408
        %v648 = vunpack.c.l.b16 %v410
        %v649 = vunpack.c.l.b16 %v412
        %v650 = vunpack.c.l.b16 %v414
        %v651 = vunpack.c.l.b16 %v416
        %v652 = vpack.c.b16 %v645, %v644
        %v653 = vpack.c.b16 %v647, %v646
        %v654 = vpack.c.b16 %v649, %v648
        %v655 = vpack.c.b16 %v651, %v650
        %656 = vrot.lane.b32.xlu0 %v652, 12
        %v657 = vpop.permute.xlu0 %656
        %658 = vrot.lane.b32.xlu0 %v653, 12
        %v659 = vpop.permute.xlu0 %658
        %660 = vrot.lane.b32.xlu0 %v654, 12
        %v661 = vpop.permute.xlu0 %660
        %662 = vrot.lane.b32.xlu0 %v655, 12
        %v663 = vpop.permute.xlu0 %662
        %vm668 = vcmask 130144
        %669 = vst.msk [vmem:[#allocation2] sm:$0xff] %vm668, %v657
        %670 = vst.msk [vmem:[#allocation2 + $0x8] sm:$0xff] %vm668, %v659
        %671 = vst.msk [vmem:[#allocation2 + $0x10] sm:$0xff] %vm668, %v661
        %672 = vst.msk [vmem:[#allocation2 + $0x18] sm:$0xff] %vm668, %v663
        %v681 = vunpack.c.l.b16 %v418
        %v682 = vunpack.c.l.b16 %v419
        %v683 = vunpack.c.l.b16 %v420
        %v684 = vunpack.c.l.b16 %v421
        %v685 = vunpack.c.l.b16 %v422
        %v686 = vunpack.c.l.b16 %v423
        %v687 = vunpack.c.l.b16 %v424
        %v688 = vunpack.c.l.b16 %v425
        %v689 = vpack.c.b16 %v682, %v681
        %v690 = vpack.c.b16 %v684, %v683
        %v691 = vpack.c.b16 %v686, %v685
        %v692 = vpack.c.b16 %v688, %v687
        %693 = vrot.lane.b32.xlu0 %v689, 16
        %v694 = vpop.permute.xlu0 %693
        %695 = vrot.lane.b32.xlu0 %v690, 16
        %v696 = vpop.permute.xlu0 %695
        %697 = vrot.lane.b32.xlu0 %v691, 16
        %v698 = vpop.permute.xlu0 %697
        %699 = vrot.lane.b32.xlu0 %v692, 16
        %v700 = vpop.permute.xlu0 %699
        %vm705 = vcmask 162944
        %706 = vst.msk [vmem:[#allocation2] sm:$0xff] %vm705, %v694
        %707 = vst.msk [vmem:[#allocation2 + $0x8] sm:$0xff] %vm705, %v696
        %708 = vst.msk [vmem:[#allocation2 + $0x10] sm:$0xff] %vm705, %v698
        %709 = vst.msk [vmem:[#allocation2 + $0x18] sm:$0xff] %vm705, %v700
        %v711 = vshrl.u32 %v402, 16
        %v713 = vrot.slane %v711, 4
        %v714 = vshll.u32 %v402, 16
        %v716 = vrot.slane %v714, 5
        %v717 = vor.u32 %v713, %v716
        %v718 = vrot.slane %v717, 4
        %v720 = vshll.u32 %v403, 16
        %v722 = vrot.slane %v720, 5
        %v723 = vsel %vm494, %v718, %v722
        %v725 = vshrl.u32 %v404, 16
        %v727 = vrot.slane %v725, 4
        %v728 = vshll.u32 %v404, 16
        %v730 = vrot.slane %v728, 5
        %v731 = vor.u32 %v727, %v730
        %v732 = vrot.slane %v731, 4
        %v734 = vshll.u32 %v405, 16
        %v736 = vrot.slane %v734, 5
        %v737 = vsel %vm494, %v732, %v736
        %v739 = vshrl.u32 %v406, 16
        %v741 = vrot.slane %v739, 4
        %v742 = vshll.u32 %v406, 16
        %v744 = vrot.slane %v742, 5
        %v745 = vor.u32 %v741, %v744
        %v746 = vrot.slane %v745, 4
        %v748 = vshll.u32 %v407, 16
        %v750 = vrot.slane %v748, 5
        %v751 = vsel %vm494, %v746, %v750
        %v753 = vshrl.u32 %v408, 16
        %v755 = vrot.slane %v753, 4
        %v756 = vshll.u32 %v408, 16
        %v758 = vrot.slane %v756, 5
        %v759 = vor.u32 %v755, %v758
        %v760 = vrot.slane %v759, 4
        %v762 = vshll.u32 %v409, 16
        %v764 = vrot.slane %v762, 5
        %v765 = vsel %vm494, %v760, %v764
        %v767 = vshrl.u32 %v410, 16
        %v769 = vrot.slane %v767, 4
        %v770 = vshll.u32 %v410, 16
        %v772 = vrot.slane %v770, 5
        %v773 = vor.u32 %v769, %v772
        %v774 = vrot.slane %v773, 4
        %v776 = vshll.u32 %v411, 16
        %v778 = vrot.slane %v776, 5
        %v779 = vsel %vm494, %v774, %v778
        %v781 = vshrl.u32 %v412, 16
        %v783 = vrot.slane %v781, 4
        %v784 = vshll.u32 %v412, 16
        %v786 = vrot.slane %v784, 5
        %v787 = vor.u32 %v783, %v786
        %v788 = vrot.slane %v787, 4
        %v790 = vshll.u32 %v413, 16
        %v792 = vrot.slane %v790, 5
        %v793 = vsel %vm494, %v788, %v792
        %v795 = vshrl.u32 %v414, 16
        %v797 = vrot.slane %v795, 4
        %v798 = vshll.u32 %v414, 16
        %v800 = vrot.slane %v798, 5
        %v801 = vor.u32 %v797, %v800
        %v802 = vrot.slane %v801, 4
        %v804 = vshll.u32 %v415, 16
        %v806 = vrot.slane %v804, 5
        %v807 = vsel %vm494, %v802, %v806
        %v809 = vshrl.u32 %v416, 16
        %v811 = vrot.slane %v809, 4
        %v812 = vshll.u32 %v416, 16
        %v814 = vrot.slane %v812, 5
        %v815 = vor.u32 %v811, %v814
        %v816 = vrot.slane %v815, 4
        %v818 = vshll.u32 %v417, 16
        %v820 = vrot.slane %v818, 5
        %v821 = vsel %vm494, %v816, %v820
        %v822 = vunpack.c.l.b16 %v723
        %v823 = vunpack.c.l.b16 %v737
        %v824 = vunpack.c.l.b16 %v751
        %v825 = vunpack.c.l.b16 %v765
        %v826 = vunpack.c.l.b16 %v779
        %v827 = vunpack.c.l.b16 %v793
        %v828 = vunpack.c.l.b16 %v807
        %v829 = vunpack.c.l.b16 %v821
        %v830 = vpack.c.b16 %v823, %v822
        %v831 = vpack.c.b16 %v825, %v824
        %v832 = vpack.c.b16 %v827, %v826
        %v833 = vpack.c.b16 %v829, %v828
        %834 = vrot.lane.b32.xlu0 %v830, 20
        %v835 = vpop.permute.xlu0 %834
        %836 = vrot.lane.b32.xlu0 %v831, 20
        %v837 = vpop.permute.xlu0 %836
        %838 = vrot.lane.b32.xlu0 %v832, 20
        %v839 = vpop.permute.xlu0 %838
        %840 = vrot.lane.b32.xlu0 %v833, 20
        %v841 = vpop.permute.xlu0 %840
        %vm846 = vcmask 195744
        %847 = vst.msk [vmem:[#allocation2] sm:$0xff] %vm846, %v835
        %848 = vst.msk [vmem:[#allocation2 + $0x8] sm:$0xff] %vm846, %v837
        %849 = vst.msk [vmem:[#allocation2 + $0x10] sm:$0xff] %vm846, %v839
        %850 = vst.msk [vmem:[#allocation2 + $0x18] sm:$0xff] %vm846, %v841
        %v852 = vunpack.c.l.b16 %v391
        %v853 = vpack.c.b16 %v436, %v435
        %v854 = vpack.c.b16 %v438, %v437
        %v855 = vpack.c.b16 %v440, %v439
        %v856 = vpack.c.b16 %v852, %v441
        %857 = vrot.lane.b32.xlu0 %v853, 24
        %v858 = vpop.permute.xlu0 %857
        %859 = vrot.lane.b32.xlu0 %v854, 24
        %v860 = vpop.permute.xlu0 %859
        %861 = vrot.lane.b32.xlu0 %v855, 24
        %v862 = vpop.permute.xlu0 %861
        %863 = vrot.lane.b32.xlu0 %v856, 24
        %v864 = vpop.permute.xlu0 %863
        %vm869 = vcmask 228544
        %870 = vst.msk [vmem:[#allocation2] sm:$0xff] %vm869, %v858
        %871 = vst.msk [vmem:[#allocation2 + $0x8] sm:$0xff] %vm869, %v860
        %872 = vst.msk [vmem:[#allocation2 + $0x10] sm:$0xff] %vm869, %v862
        %873 = vst.msk [vmem:[#allocation2 + $0x18] sm:$0xff] %vm869, %v864
        %v875 = vunpack.c.l.b16 %v401
        %v876 = vpack.c.b16 %v465, %v464
        %v877 = vpack.c.b16 %v467, %v466
        %v878 = vpack.c.b16 %v469, %v468
        %v879 = vpack.c.b16 %v875, %v470
        %880 = vrot.lane.b32.xlu0 %v876, 28
        %v881 = vpop.permute.xlu0 %880
        %882 = vrot.lane.b32.xlu0 %v877, 28
        %v883 = vpop.permute.xlu0 %882
        %884 = vrot.lane.b32.xlu0 %v878, 28
        %v885 = vpop.permute.xlu0 %884
        %886 = vrot.lane.b32.xlu0 %v879, 28
        %v887 = vpop.permute.xlu0 %886
        %vm892 = vcmask 261344
        %893 = vst.msk [vmem:[#allocation2] sm:$0xff] %vm892, %v881
        %894 = vst.msk [vmem:[#allocation2 + $0x8] sm:$0xff] %vm892, %v883
        %895 = vst.msk [vmem:[#allocation2 + $0x10] sm:$0xff] %vm892, %v885
        %896 = vst.msk [vmem:[#allocation2 + $0x18] sm:$0xff] %vm892, %v887
        %v898 = vshrl.u32 %v391, 16
        %v900 = vrot.slane %v898, 4
        %v901 = vshll.u32 %v391, 16
        %v903 = vrot.slane %v901, 5
        %v904 = vor.u32 %v900, %v903
        %v905 = vrot.slane %v904, 4
        %v907 = vshll.u32 %v392, 16
        %v909 = vrot.slane %v907, 5
        %v910 = vsel %vm494, %v905, %v909
        %v911 = vunpack.c.l.b16 %v910
        %v912 = vpack.c.b16 %v609, %v608
        %v913 = vpack.c.b16 %v611, %v610
        %v914 = vpack.c.b16 %v613, %v612
        %v915 = vpack.c.b16 %v911, %v614
        %916 = vrot.lane.b32.xlu0 %v912, 32
        %v917 = vpop.permute.xlu0 %916
        %918 = vrot.lane.b32.xlu0 %v913, 32
        %v919 = vpop.permute.xlu0 %918
        %920 = vrot.lane.b32.xlu0 %v914, 32
        %v921 = vpop.permute.xlu0 %920
        %922 = vrot.lane.b32.xlu0 %v915, 32
        %v923 = vpop.permute.xlu0 %922
        %vm928 = vcmask 294144
        %929 = vst.msk [vmem:[#allocation2] sm:$0xff] %vm928, %v917
        %930 = vst.msk [vmem:[#allocation2 + $0x8] sm:$0xff] %vm928, %v919
        %931 = vst.msk [vmem:[#allocation2 + $0x10] sm:$0xff] %vm928, %v921
        %932 = vst.msk [vmem:[#allocation2 + $0x18] sm:$0xff] %vm928, %v923
        %v933 = vld [vmem:[#allocation2] sm:$0xff]
        %v934 = vld [vmem:[#allocation2 + $0x8] sm:$0xff]
        %v935 = vld [vmem:[#allocation2 + $0x10] sm:$0xff]
        %v936 = vld [vmem:[#allocation2 + $0x18] sm:$0xff]
        %v937 = vld [vmem:[#allocation11] sm:$0xf]
        %v938 = vld [vmem:[#allocation11 + $0x4] sm:$0xf]
        %v939 = vld [vmem:[#allocation11 + $0x8] sm:$0xf]
        %v940 = vld [vmem:[#allocation11 + $0xc] sm:$0xf]
        %v941 = vld [vmem:[#allocation11 + $0x10] sm:$0x3]
        %v947 = vunpack.c.l.b16 %v937
        %v948 = vunpack.c.l.b16 %v938
        %v949 = vunpack.c.l.b16 %v939
        %v950 = vunpack.c.l.b16 %v940
        %v951 = vunpack.c.l.b16 %v941
        %v952 = vpack.c.b16 %v948, %v947
        %v953 = vpack.c.b16 %v950, %v949
        %v954 = vpack.c.b16 %v951, %v951
        %vm957 = vcmask 293888
        %v959 = vsel %vm957, %v933, 0
        %v962 = vsel %vm957, %v934, 0
        %v965 = vsel %vm957, %v935, 0
        %v968 = vsel %vm957, %v936, 0
        %vm970 = vcmask 1041408
        %v972 = vsel %vm970, %v954, 0
        %974 = vmatprep.subr.bf16.mxu0 0
        %975 = vmatpush1.bf16.msra.mxu0 %v952
        %976 = vmatprep.subr.bf16.mxu0 0
        %977 = vmatpush1.bf16.msra.mxu0 %v953
        %978 = vmatprep.subr.bf16.mxu0 0
        %979 = vmatpush1.bf16.msra.mxu0 %v972
        %980 = vmatprep.subr.bf16.mxu0 0
        %981 = vmatpush1.bf16.msra.mxu0 0
        %982 = vmatprep.subr.bf16.mxu0 0
        %983 = vmatpush1.bf16.msra.mxu0 0
        %984 = vmatprep.subr.bf16.mxu0 0
        %985 = vmatpush1.bf16.msra.mxu0 0
        %986 = vmatprep.subr.bf16.mxu0 0
        %987 = vmatpush1.bf16.msra.mxu0 0
        %988 = vmatprep.subr.bf16.mxu0 0
        %989 = vmatpush1.bf16.msra.mxu0 0
        %990 = vmatprep.subr.bf16.mxu0 0
        %991 = vmatpush1.bf16.msra.mxu0 0
        %992 = vmatprep.subr.bf16.mxu0 0
        %993 = vmatpush1.bf16.msra.mxu0 0
        %994 = vmatprep.subr.bf16.mxu0 0
        %995 = vmatpush1.bf16.msra.mxu0 0
        %996 = vmatprep.subr.bf16.mxu0 0
        %997 = vmatpush1.bf16.msra.mxu0 0
        %998 = vmatprep.subr.bf16.mxu0 0
        %999 = vmatpush1.bf16.msra.mxu0 0
        %1000 = vmatprep.subr.bf16.mxu0 0
        %1001 = vmatpush1.bf16.msra.mxu0 0
        %1002 = vmatprep.subr.bf16.mxu0 0
        %1003 = vmatpush1.bf16.msra.mxu0 0
        %1004 = vmatprep.subr.bf16.mxu0 0
        %1005 = vmatpush1.bf16.msra.mxu0 0
        %1006 = vmatprep.mubr.bf16.mxu0 0
        %1007 = vmatmul.mubr.bf16.gmra.mrb[0].mxu0 %v959
        %v1008 = vpop.f32.mrb[0].mxu0
        %v1009 = vadd.f32 0.0, %v1008
        %v1010 = vpop.f32.mrb[0].mxu0
        %v1011 = vpop.f32.mrb[0].mxu0
        %v1012 = vadd.f32 0.0, %v1011
        %v1013 = vpop.f32.mrb[0].mxu0
        %1014 = vmatprep.mubr.bf16.mxu0 0
        %1015 = vmatmul.mubr.bf16.gmra.mrb[0].mxu0 %v962
        %v1016 = vpop.f32.mrb[0].mxu0
        %v1017 = vadd.f32 0.0, %v1016
        %v1018 = vpop.f32.mrb[0].mxu0
        %v1019 = vpop.f32.mrb[0].mxu0
        %v1020 = vadd.f32 0.0, %v1019
        %v1021 = vpop.f32.mrb[0].mxu0
        %1022 = vmatprep.mubr.bf16.mxu0 0
        %1023 = vmatmul.mubr.bf16.gmra.mrb[0].mxu0 %v965
        %v1024 = vpop.f32.mrb[0].mxu0
        %v1025 = vadd.f32 0.0, %v1024
        %v1026 = vpop.f32.mrb[0].mxu0
        %v1027 = vpop.f32.mrb[0].mxu0
        %v1028 = vadd.f32 0.0, %v1027
        %v1029 = vpop.f32.mrb[0].mxu0
        %1030 = vmatprep.mubr.bf16.mxu0 0
        %1031 = vmatmul.mubr.bf16.gmra.mrb[0].mxu0 %v968
        %v1032 = vpop.f32.mrb[0].mxu0
        %v1033 = vadd.f32 0.0, %v1032
        %v1034 = vpop.f32.mrb[0].mxu0
        %v1035 = vpop.f32.mrb[0].mxu0
        %v1036 = vadd.f32 0.0, %v1035
        %v1037 = vpop.f32.mrb[0].mxu0
        %1038 = vdwg.mxu0
        %vm1039 = vcmask 130048
        %v1040 = vsel %vm1039, %v1009, 0.0
        %v1041 = vsel %vm1039, %v1012, 0.0
        %v1042 = vadd.f32 %v1040, %v1041
        %v1043 = vsel %vm1039, %v1017, 0.0
        %v1044 = vadd.f32 %v1042, %v1043
        %v1045 = vsel %vm1039, %v1020, 0.0
        %v1046 = vadd.f32 %v1044, %v1045
        %v1047 = vsel %vm1039, %v1025, 0.0
        %v1048 = vadd.f32 %v1046, %v1047
        %v1049 = vsel %vm1039, %v1028, 0.0
        %v1050 = vadd.f32 %v1048, %v1049
        %v1051 = vsel %vm1039, %v1033, 0.0
        %v1052 = vadd.f32 %v1050, %v1051
        %v1053 = vsel %vm1039, %v1036, 0.0
        %v1054 = vadd.f32 %v1052, %v1053
        %v1055 = vrot.slane %v1054, 4
        %v1056 = vadd.f32 %v1054, %v1055
        %v1057 = vrot.slane %v1056, 2
        %v1058 = vadd.f32 %v1056, %v1057
        %v1059 = vrot.slane %v1058, 1
        %v1060 = vadd.f32 %v1058, %v1059
        %v1061 = vrcp.pop 64.0
        %v1062 = vmul.f32 %v1060, %v1061
        %v1063 = vmul.f32 %v1009, %v1009
        %v1064 = vmul.f32 %v1012, %v1012
        %v1065 = vmul.f32 %v1017, %v1017
        %v1066 = vmul.f32 %v1020, %v1020
        %v1067 = vmul.f32 %v1025, %v1025
        %v1068 = vmul.f32 %v1028, %v1028
        %v1069 = vmul.f32 %v1033, %v1033
        %v1070 = vmul.f32 %v1036, %v1036
        %v1071 = vsel %vm1039, %v1063, 0.0
        %v1072 = vsel %vm1039, %v1064, 0.0
        %v1073 = vadd.f32 %v1071, %v1072
        %v1074 = vsel %vm1039, %v1065, 0.0
        %v1075 = vadd.f32 %v1073, %v1074
        %v1076 = vsel %vm1039, %v1066, 0.0
        %v1077 = vadd.f32 %v1075, %v1076
        %v1078 = vsel %vm1039, %v1067, 0.0
        %v1079 = vadd.f32 %v1077, %v1078
        %v1080 = vsel %vm1039, %v1068, 0.0
        %v1081 = vadd.f32 %v1079, %v1080
        %v1082 = vsel %vm1039, %v1069, 0.0
        %v1083 = vadd.f32 %v1081, %v1082
        %v1084 = vsel %vm1039, %v1070, 0.0
        %v1085 = vadd.f32 %v1083, %v1084
        %v1086 = vrot.slane %v1085, 4
        %v1087 = vadd.f32 %v1085, %v1086
        %v1088 = vrot.slane %v1087, 2
        %v1089 = vadd.f32 %v1087, %v1088
        %v1090 = vrot.slane %v1089, 1
        %v1091 = vadd.f32 %v1089, %v1090
        %v1092 = vmul.f32 %v1091, %v1061
        %v1093 = vmul.f32 %v1062, %v1062
        %v1094 = vsub.f32 %v1092, %v1093
        %v1095 = vmax.f32 %v1094, 0.0
        %v1096 = vsub.f32 %v1009, %v1062
        %v1097 = vsub.f32 %v1012, %v1062
        %v1098 = vsub.f32 %v1017, %v1062
        %v1099 = vsub.f32 %v1020, %v1062
        %v1100 = vsub.f32 %v1025, %v1062
        %v1101 = vsub.f32 %v1028, %v1062
        %v1102 = vsub.f32 %v1033, %v1062
        %v1103 = vsub.f32 %v1036, %v1062
        %v1104 = vadd.f32 %v1095, 1e-05
        %v1105 = vrsqrt.pop %v1104
        %v1106 = vmul.f32 %v1096, %v1105
        %v1107 = vmul.f32 %v1097, %v1105
        %v1108 = vmul.f32 %v1098, %v1105
        %v1109 = vmul.f32 %v1099, %v1105
        %v1110 = vmul.f32 %v1100, %v1105
        %v1111 = vmul.f32 %v1101, %v1105
        %v1112 = vmul.f32 %v1102, %v1105
        %v1113 = vmul.f32 %v1103, %v1105
        %vm1114 = vcmp.gt.f32.partialorder %v1106, 0.0
        %vm1115 = vcmp.gt.f32.partialorder %v1107, 0.0
        %vm1116 = vcmp.gt.f32.partialorder %v1108, 0.0
        %vm1117 = vcmp.gt.f32.partialorder %v1109, 0.0
        %vm1118 = vcmp.gt.f32.partialorder %v1110, 0.0
        %vm1119 = vcmp.gt.f32.partialorder %v1111, 0.0
        %vm1120 = vcmp.gt.f32.partialorder %v1112, 0.0
        %vm1121 = vcmp.gt.f32.partialorder %v1113, 0.0
        %v1122 = vmul.f32 %v1106, 0.2
        %v1123 = vmul.f32 %v1107, 0.2
        %v1124 = vmul.f32 %v1108, 0.2
        %v1125 = vmul.f32 %v1109, 0.2
        %v1126 = vmul.f32 %v1110, 0.2
        %v1127 = vmul.f32 %v1111, 0.2
        %v1128 = vmul.f32 %v1112, 0.2
        %v1129 = vmul.f32 %v1113, 0.2
        %v1130 = vsel %vm1114, %v1106, %v1122
        %v1131 = vsel %vm1115, %v1107, %v1123
        %v1132 = vsel %vm1116, %v1108, %v1124
        %v1133 = vsel %vm1117, %v1109, %v1125
        %v1134 = vsel %vm1118, %v1110, %v1126
        %v1135 = vsel %vm1119, %v1111, %v1127
        %v1136 = vsel %vm1120, %v1112, %v1128
        %v1137 = vsel %vm1121, %v1113, %v1129
        %1138 = vst.msk [vmem:[%s373] sm:$0xff] %vm1039, %v1130
        %1139 = vst.msk [vmem:[%s373 + $0x8] sm:$0xff] %vm1039, %v1131
        %1140 = vst.msk [vmem:[%s373 + $0x10] sm:$0xff] %vm1039, %v1132
        %1141 = vst.msk [vmem:[%s373 + $0x18] sm:$0xff] %vm1039, %v1133
        %1142 = vst.msk [vmem:[%s373 + $0x20] sm:$0xff] %vm1039, %v1134
        %1143 = vst.msk [vmem:[%s373 + $0x28] sm:$0xff] %vm1039, %v1135
        %1144 = vst.msk [vmem:[%s373 + $0x30] sm:$0xff] %vm1039, %v1136
        %1145 = vst.msk [vmem:[%s373 + $0x38] sm:$0xff] %vm1039, %v1137
        %s1146 = sand.u32 %s161, 1
        %s1147 = scalar_lea.sflag [#allocation5], %s1146
        %s1148 = sand.u32 %s161, 1
        %s1149 = smul.addr %s1148, 64
        %s1150 = scalar_lea.vmem [#allocation12], %s1149
        // Predicated region
        $region61: #{encoder_block_forward.2} parent=39 // pred_check
          %p1151 = pneg %p171
        $region62: #{encoder_block_forward.2} parent=39 // pred_check_branch
          %1153 = sbr.rel (%p1151) target = $region64
        $region63: #{encoder_block_forward.2} parent=39 // pred_region
          %s1155 = ssub.s32 1024, 1024
          %1156 = vsyncadd %s1147, %s1155
          %s1157 = smul.addr %s28, 8
          %s1158 = smul.addr %s1157, 128
          %s1159 = scalar_lea.hbm %s5, %s1158
          %s1160 = sshll.u32 %s1150, 4
          %s1161 = int_to_ptr.vmem [resolvable:$true] %s1160
          %1166 = dma.vmem_to_hbm [thread:$0]  %s1161, 1024, %s1159, %s1147, 128, 128, 8
        $region64: #{encoder_block_forward.2} parent=39 // pred_fallthru
          _
      $region40: #{encoder_block_forward.2} parent=5 // pred_fallthru
        _
      %p1167 = scmp.le.s32.totalorder 2, %s23
      // Predicated region
      $region65: #{encoder_block_forward.2} parent=5 // pred_check
        %p1168 = pneg %p1167
      $region66: #{encoder_block_forward.2} parent=5 // pred_check_branch
        %1170 = sbr.rel (%p1168) target = $region68
      $region67: #{encoder_block_forward.2} parent=5 // pred_region
        %s1171 = ssub.s32 %s23, 2
        // Predicated region
        $region69: #{encoder_block_forward.2} parent=67 // pred_check
          %p1172 = pneg %p177
        $region70: #{encoder_block_forward.2} parent=67 // pred_check_branch
          %1174 = sbr.rel (%p1172) target = $region72
        $region71: #{encoder_block_forward.2} parent=67 // pred_region
          %s1175 = sand.u32 %s162, 1
          %s1176 = scalar_lea.sflag [#allocation5], %s1175
          %s1177 = sand.u32 %s162, 1
          %s1178 = smul.addr %s1177, 64
          %s1179 = scalar_lea.vmem [#allocation12], %s1178
          %1180 = dma.done %s1176, 1024
        $region72: #{encoder_block_forward.2} parent=67 // pred_fallthru
          _
      $region68: #{encoder_block_forward.2} parent=5 // pred_fallthru
        _
    $region6: #{encoder_block_forward.2} parent=1 // loop_footer
      %s27 = sadd.s32 1, %s23
    $region7: #{encoder_block_forward.2} parent=1 // loop_footer_branch
      %22 = sbr.rel target = $region3
    $region8: #{encoder_block_forward.2} parent=1 // loop_exit
      _
    %1181 = vsyncpa [#allocation4], 1
    %s1182 = scalar_lea.sflag [#allocation4], 1
    %1183 = vsyncpa %s1182, 1
    %1184 = vsyncpa [#allocation7], 1
    %s1185 = scalar_lea.sflag [#allocation7], 1
    %1186 = vsyncpa %s1185, 1
    %1187 = vsyncpa [#allocation10], 1
    %s1188 = scalar_lea.sflag [#allocation10], 1
    %1189 = vsyncpa %s1188, 1
    %1190 = vsyncpa [#allocation5], 1
    %s1191 = scalar_lea.sflag [#allocation5], 1
    %1192 = vsyncpa %s1191, 1

// kernel: encoder_block_forward.3
$region0: #{encoder_block_forward.3}
  #allocation0 [shape = 'u32[]', space=smem, size = 0x4, offset = 0x4, fixed_abs, tag = 'smem constant byte address 0x4 - core index']
  #allocation1 [shape = 'u32[144,128]{1,0:T(1,128)}', space=vmem, size = 0x12000, scoped, tag = 'internal scratch']
  #allocation2 [shape = 'bf16[10,10,16]{2,1,0:T(8,128)(2,1)}', space=vmem, size = 0xa000, scoped, tag = 'scratch operand']
  #allocation3 [shape = 'bf16[64,144]{1,0:T(16,128)(2,1)}', space=vmem, size = 0x8000, scoped, tag = 'scratch operand']
  #allocation4 [shape = 'f32[12,12,16]{2,1,0:T(8,128)}', space=vmem, size = 0x18000, scoped, tag = 'scratch operand']
  %s0 = inlined_call_operand.hbm [shape: f32[2,8,8,16], index: 0, kind: input, shape index: {}]
  %s1 = inlined_call_operand.hbm [shape: bf16[144,16], index: 1, kind: input, shape index: {}]
  %s2 = inlined_call_operand.hbm [shape: bf16[144,16], index: 2, kind: input, shape index: {}]
  %s3 = inlined_call_operand.hbm [shape: f32[1,16], index: 3, kind: input, shape index: {}]
  %s4 = inlined_call_operand.hbm [shape: f32[5], index: 4, kind: input, shape index: {}]
  %s5 = inlined_call_operand.hbm [shape: f32[2,8,8,16], index: 5, kind: output, shape index: {}]
  %s6 = sld [smem:[#allocation0]]
  $region73: #{encoder_block_forward.3} parent=0
    _
  %s8 = ssub.s32 1, %s6
  %s9 = scalar_select 0, %s8, %s6
  $region1: #{encoder_block_forward.3} parent=0
    #allocation5 [shape = 'u8[65536]{0}', space=vmem, size = 0x10000, scoped, tag = 'input window, operand 0']
    #allocation6 [shape = 's32[2]{0}', space=sflag, size = 0x8, scoped, tag = 'scoped memory for encoder_block_forward.3']
    #allocation7 [shape = 's32[2]{0}', space=sflag, size = 0x8, scoped, tag = 'scoped memory for encoder_block_forward.3']
    #allocation8 [shape = 's32[2]{0}', space=sflag, size = 0x8, scoped, tag = 'scoped memory for encoder_block_forward.3']
    #allocation9 [shape = 'u8[36864]{0}', space=vmem, size = 0x9000, scoped, tag = 'input window, operand 1, single buffered']
    #allocation10 [shape = 's32[1]{0}', space=sflag, size = 0x4, scoped, tag = 'scoped memory for encoder_block_forward.3']
    #allocation11 [shape = 'u8[36864]{0}', space=vmem, size = 0x9000, scoped, tag = 'input window, operand 2, single buffered']
    #allocation12 [shape = 'u8[512]{0}', space=vmem, size = 0x400, scoped, tag = 'input window, operand 3, single buffered']
    #allocation13 [shape = 's32[1]{0}', space=sflag, size = 0x4, scoped, tag = 'scoped memory for encoder_block_forward.3']
    #allocation14 [shape = 'u8[512]{0}', space=smem, size = 0x200, scoped, tag = 'input window, operand 4, single buffered']
    #allocation15 [shape = 'u8[65536]{0}', space=vmem, size = 0x10000, scoped, tag = 'output window, operand 0']
    %10 = vsyncpa [#allocation6], 0
    %s11 = scalar_lea.sflag [#allocation6], 1
    %12 = vsyncpa %s11, 0
    %13 = vsyncpa [#allocation10], 0
    %14 = vsyncpa [#allocation13], 0
    %15 = vsyncpa [#allocation8], 0
    %16 = vsyncpa [#allocation7], 0
    %s17 = scalar_lea.sflag [#allocation7], 1
    %18 = vsyncpa %s17, 0
    loop: start=0, step=1, limit=4
    $region2: #{encoder_block_forward.3} parent=1 // loop_pre_header
      _
    $region3: #{encoder_block_forward.3} parent=1 // loop_header
      %s20 = sphi 0, %s24
      %p21 = scmp.ge.s32.totalorder %s20, 4
      %s30 = sphi 0, %s32
      %s33 = sphi 0, %s30
      %s34 = sphi 0, %s33
      %s50 = sphi 0, %s34
      %s54 = sphi 0, %s54
      %s56 = sphi 0, %s54
      %s57 = sphi 0, %s56
      %s71 = sphi 0, %s57
      %s75 = sphi 0, %s75
      %s77 = sphi 0, %s75
      %s78 = sphi 0, %s77
      %s92 = sphi 0, %s78
      %s96 = sphi 0, %s96
      %s98 = sphi 0, %s96
      %s99 = sphi 0, %s98
      %s113 = sphi 0, %s99
      %s117 = sphi 0, %s117
      %s119 = sphi 0, %s117
      %s120 = sphi 0, %s119
      %s134 = sphi 0, %s120
      %s140 = sphi 0, %s142
      %s143 = sphi 0, %s140
      %s144 = sphi 0, %s143
      %s160 = sphi 0, %s144
    $region4: #{encoder_block_forward.3} parent=1 // loop_header_branch
      %23 = sbr.rel (%p21) target = $region8
    $region5: #{encoder_block_forward.3} parent=1 // loop_body
      %s25 = ssub.s32 %s20, 1
      %s26 = ssub.s32 %s20, 2
      %s27 = sadd.s32 %s20, 1
      %s28 = ssub.s32 %s20, %s27
      %p29 = scmp.eq.s32.totalorder %s28, 0
      %s31 = sadd.s32 %s30, 1
      %s32 = scalar_select %p29, %s30, %s31
      %p35 = pneg %p29
      %p36 = scmp.eq.s32.totalorder %s20, 1
      %p37 = por %p35, %p36
      %p38 = scmp.ne.s32.totalorder %s30, %s33
      %p39 = scmp.eq.s32.totalorder %s20, 0
      %p40 = por %p38, %p39
      %p41 = scmp.ne.s32.totalorder %s30, %s33
      %p42 = scmp.eq.s32.totalorder %s25, 1
      %p43 = por %p41, %p42
      %p44 = scmp.ne.s32.totalorder %s33, %s34
      %p45 = scmp.eq.s32.totalorder %s25, 0
      %p46 = por %p44, %p45
      %p47 = scmp.ne.s32.totalorder %s33, %s34
      %p48 = scmp.eq.s32.totalorder %s26, 1
      %p49 = por %p47, %p48
      %p51 = scmp.ne.s32.totalorder %s34, %s50
      %p52 = scmp.eq.s32.totalorder %s26, 0
      %p53 = por %p51, %p52
      %s55 = sadd.s32 %s54, 1
      %p58 = scmp.eq.s32.totalorder %s20, 1
      %p59 = scmp.ne.s32.totalorder %s54, %s56
      %p60 = scmp.eq.s32.totalorder %s20, 0
      %p61 = por %p59, %p60
      %p62 = scmp.ne.s32.totalorder %s54, %s56
      %p63 = scmp.eq.s32.totalorder %s25, 1
      %p64 = por %p62, %p63
      %p65 = scmp.ne.s32.totalorder %s56, %s57
      %p66 = scmp.eq.s32.totalorder %s25, 0
      %p67 = por %p65, %p66
      %p68 = scmp.ne.s32.totalorder %s56, %s57
      %p69 = scmp.eq.s32.totalorder %s26, 1
      %p70 = por %p68, %p69
      %p72 = scmp.ne.s32.totalorder %s57, %s71
      %p73 = scmp.eq.s32.totalorder %s26, 0
      %p74 = por %p72, %p73
      %s76 = sadd.s32 %s75, 1
      %p79 = scmp.eq.s32.totalorder %s20, 1
      %p80 = scmp.ne.s32.totalorder %s75, %s77
      %p81 = scmp.eq.s32.totalorder %s20, 0
      %p82 = por %p80, %p81
      %p83 = scmp.ne.s32.totalorder %s75, %s77
      %p84 = scmp.eq.s32.totalorder %s25, 1
      %p85 = por %p83, %p84
      %p86 = scmp.ne.s32.totalorder %s77, %s78
      %p87 = scmp.eq.s32.totalorder %s25, 0
      %p88 = por %p86, %p87
      %p89 = scmp.ne.s32.totalorder %s77, %s78
      %p90 = scmp.eq.s32.totalorder %s26, 1
      %p91 = por %p89, %p90
      %p93 = scmp.ne.s32.totalorder %s78, %s92
      %p94 = scmp.eq.s32.totalorder %s26, 0
      %p95 = por %p93, %p94
      %s97 = sadd.s32 %s96, 1
      %p100 = scmp.eq.s32.totalorder %s20, 1
      %p101 = scmp.ne.s32.totalorder %s96, %s98
      %p102 = scmp.eq.s32.totalorder %s20, 0
      %p103 = por %p101, %p102
      %p104 = scmp.ne.s32.totalorder %s96, %s98
      %p105 = scmp.eq.s32.totalorder %s25, 1
      %p106 = por %p104, %p105
      %p107 = scmp.ne.s32.totalorder %s98, %s99
      %p108 = scmp.eq.s32.totalorder %s25, 0
      %p109 = por %p107, %p108
      %p110 = scmp.ne.s32.totalorder %s98, %s99
      %p111 = scmp.eq.s32.totalorder %s26, 1
      %p112 = por %p110, %p111
      %p114 = scmp.ne.s32.totalorder %s99, %s113
      %p115 = scmp.eq.s32.totalorder %s26, 0
      %p116 = por %p114, %p115
      %s118 = sadd.s32 %s117, 1
      %p121 = scmp.eq.s32.totalorder %s20, 1
      %p122 = scmp.ne.s32.totalorder %s117, %s119
      %p123 = scmp.eq.s32.totalorder %s20, 0
      %p124 = por %p122, %p123
      %p125 = scmp.ne.s32.totalorder %s117, %s119
      %p126 = scmp.eq.s32.totalorder %s25, 1
      %p127 = por %p125, %p126
      %p128 = scmp.ne.s32.totalorder %s119, %s120
      %p129 = scmp.eq.s32.totalorder %s25, 0
      %p130 = por %p128, %p129
      %p131 = scmp.ne.s32.totalorder %s119, %s120
      %p132 = scmp.eq.s32.totalorder %s26, 1
      %p133 = por %p131, %p132
      %p135 = scmp.ne.s32.totalorder %s120, %s134
      %p136 = scmp.eq.s32.totalorder %s26, 0
      %p137 = por %p135, %p136
      %s138 = ssub.s32 %s20, %s27
      %p139 = scmp.eq.s32.totalorder %s138, 0
      %s141 = sadd.s32 %s140, 1
      %s142 = scalar_select %p139, %s140, %s141
      %p145 = pneg %p139
      %p146 = scmp.eq.s32.totalorder %s20, 1
      %p147 = por %p145, %p146
      %p148 = scmp.ne.s32.totalorder %s140, %s143
      %p149 = scmp.eq.s32.totalorder %s20, 0
      %p150 = por %p148, %p149
      %p151 = scmp.ne.s32.totalorder %s140, %s143
      %p152 = scmp.eq.s32.totalorder %s25, 1
      %p153 = por %p151, %p152
      %p154 = scmp.ne.s32.totalorder %s143, %s144
      %p155 = scmp.eq.s32.totalorder %s25, 0
      %p156 = por %p154, %p155
      %p157 = scmp.ne.s32.totalorder %s143, %s144
      %p158 = scmp.eq.s32.totalorder %s26, 1
      %p159 = por %p157, %p158
      %p161 = scmp.ne.s32.totalorder %s144, %s160
      %p162 = scmp.eq.s32.totalorder %s26, 0
      %p163 = por %p161, %p162
      %p164 = scmp.le.s32.totalorder 1, %s20
      %p165 = scmp.lt.s32.totalorder %s20, 3
      %p166 = pnand %p164, %p165
      %p167 = pneg %p166
      // Predicated region
      $region9: #{encoder_block_forward.3} parent=5 // pred_check
        _
      $region10: #{encoder_block_forward.3} parent=5 // pred_check_branch
        %169 = sbr.rel (%p166) target = $region12
      $region11: #{encoder_block_forward.3} parent=5 // pred_region
        %s170 = ssub.s32 %s20, 1
        // Predicated region
        $region13: #{encoder_block_forward.3} parent=11 // pred_check
          %p171 = pneg %p67
        $region14: #{encoder_block_forward.3} parent=11 // pred_check_branch
          %173 = sbr.rel (%p171) target = $region16
        $region15: #{encoder_block_forward.3} parent=11 // pred_region
          %s175 = ssub.s32 1152, 1152
          %176 = vsyncadd [#allocation10], %s175
          %s177 = sshll.u32 [#allocation9], 4
          %s178 = int_to_ptr.vmem [resolvable:$true] %s177
          %183 = dma.hbm_to_vmem [thread:$0]  %s1, 1152, %s178, [#allocation10], 64, 64, 4
        $region16: #{encoder_block_forward.3} parent=11 // pred_fallthru
          _
        // Predicated region
        $region17: #{encoder_block_forward.3} parent=11 // pred_check
          %p184 = pneg %p88
        $region18: #{encoder_block_forward.3} parent=11 // pred_check_branch
          %186 = sbr.rel (%p184) target = $region20
        $region19: #{encoder_block_forward.3} parent=11 // pred_region
          %s188 = ssub.s32 1152, 1152
          %189 = vsyncadd [#allocation10], %s188
          %s190 = sshll.u32 [#allocation11], 4
          %s191 = int_to_ptr.vmem [resolvable:$true] %s190
          %196 = dma.hbm_to_vmem [thread:$0]  %s2, 1152, %s191, [#allocation10], 64, 64, 4
        $region20: #{encoder_block_forward.3} parent=11 // pred_fallthru
          _
        // Predicated region
        $region21: #{encoder_block_forward.3} parent=11 // pred_check
          %p197 = pneg %p109
        $region22: #{encoder_block_forward.3} parent=11 // pred_check_branch
          %199 = sbr.rel (%p197) target = $region24
        $region23: #{encoder_block_forward.3} parent=11 // pred_region
          %s201 = ssub.s32 16, 16
          %202 = vsyncadd [#allocation13], %s201
          %s204 = sshll.u32 [#allocation12], 4
          %s205 = int_to_ptr.vmem [resolvable:$true] %s204
          %207 = dma.hbm_to_vmem [thread:$0]  %s3, 16, %s205, [#allocation13]
        $region24: #{encoder_block_forward.3} parent=11 // pred_fallthru
          _
        // Predicated region
        $region25: #{encoder_block_forward.3} parent=11 // pred_check
          %p208 = pneg %p130
        $region26: #{encoder_block_forward.3} parent=11 // pred_check_branch
          %210 = sbr.rel (%p208) target = $region28
        $region27: #{encoder_block_forward.3} parent=11 // pred_region
          %s212 = ssub.s32 16, 16
          %213 = vsyncadd [#allocation8], %s212
          %216 = dma.hbm_to_smem %s4, 16, [#allocation14], [#allocation8]
        $region28: #{encoder_block_forward.3} parent=11 // pred_fallthru
          _
      $region12: #{encoder_block_forward.3} parent=5 // pred_fallthru
        _
      %p217 = scmp.lt.s32.totalorder %s20, 2
      // Predicated region
      $region29: #{encoder_block_forward.3} parent=5 // pred_check
        %p218 = pneg %p217
      $region30: #{encoder_block_forward.3} parent=5 // pred_check_branch
        %220 = sbr.rel (%p218) target = $region32
      $region31: #{encoder_block_forward.3} parent=5 // pred_region
        // Predicated region
        $region33: #{encoder_block_forward.3} parent=31 // pred_check
          %p221 = pneg %p40
        $region34: #{encoder_block_forward.3} parent=31 // pred_check_branch
          %223 = sbr.rel (%p221) target = $region36
        $region35: #{encoder_block_forward.3} parent=31 // pred_region
          %s224 = sand.u32 %s30, 1
          %s225 = scalar_lea.sflag [#allocation6], %s224
          %s226 = sand.u32 %s30, 1
          %s227 = smul.addr %s226, 64
          %s228 = scalar_lea.vmem [#allocation5], %s227
          %s230 = ssub.s32 1024, 1024
          %231 = vsyncadd %s225, %s230
          %s232 = smul.addr %s20, 8
          %s233 = smul.addr %s232, 128
          %s234 = scalar_lea.hbm %s0, %s233
          %s235 = sshll.u32 %s228, 4
          %s236 = int_to_ptr.vmem [resolvable:$true] %s235
          %241 = dma.hbm_to_vmem [thread:$0]  %s234, 1024, %s236, %s225, 128, 128, 8
        $region36: #{encoder_block_forward.3} parent=31 // pred_fallthru
          _
      $region32: #{encoder_block_forward.3} parent=5 // pred_fallthru
        _
      %p242 = scmp.le.s32.totalorder 1, %s20
      %p243 = scmp.lt.s32.totalorder %s20, 3
      %p244 = pnand %p242, %p243
      %p245 = pneg %p244
      // Predicated region
      $region37: #{encoder_block_forward.3} parent=5 // pred_check
        _
      $region38: #{encoder_block_forward.3} parent=5 // pred_check_branch
        %247 = sbr.rel (%p244) target = $region40
      $region39: #{encoder_block_forward.3} parent=5 // pred_region
        %s248 = ssub.s32 %s20, 1
        %s249 = sand.u32 %s33, 1
        %s250 = scalar_lea.sflag [#allocation6], %s249
        %s251 = sand.u32 %s33, 1
        %s252 = smul.addr %s251, 64
        %s253 = scalar_lea.vmem [#allocation5], %s252
        // Predicated region
        $region41: #{encoder_block_forward.3} parent=39 // pred_check
          %p254 = pneg %p46
        $region42: #{encoder_block_forward.3} parent=39 // pred_check_branch
          %256 = sbr.rel (%p254) target = $region44
        $region43: #{encoder_block_forward.3} parent=39 // pred_region
          %257 = dma.done %s250, 1024
        $region44: #{encoder_block_forward.3} parent=39 // pred_fallthru
          _
        // Predicated region
        $region45: #{encoder_block_forward.3} parent=39 // pred_check
          %p258 = pneg %p67
        $region46: #{encoder_block_forward.3} parent=39 // pred_check_branch
          %260 = sbr.rel (%p258) target = $region48
        $region47: #{encoder_block_forward.3} parent=39 // pred_region
          %261 = dma.done [#allocation10], 1152
        $region48: #{encoder_block_forward.3} parent=39 // pred_fallthru
          _
        // Predicated region
        $region49: #{encoder_block_forward.3} parent=39 // pred_check
          %p262 = pneg %p88
        $region50: #{encoder_block_forward.3} parent=39 // pred_check_branch
          %264 = sbr.rel (%p262) target = $region52
        $region51: #{encoder_block_forward.3} parent=39 // pred_region
          %265 = dma.done [#allocation10], 1152
        $region52: #{encoder_block_forward.3} parent=39 // pred_fallthru
          _
        // Predicated region
        $region53: #{encoder_block_forward.3} parent=39 // pred_check
          %p266 = pneg %p109
        $region54: #{encoder_block_forward.3} parent=39 // pred_check_branch
          %268 = sbr.rel (%p266) target = $region56
        $region55: #{encoder_block_forward.3} parent=39 // pred_region
          %269 = dma.done [#allocation13], 16
        $region56: #{encoder_block_forward.3} parent=39 // pred_fallthru
          _
        // Predicated region
        $region57: #{encoder_block_forward.3} parent=39 // pred_check
          %p270 = pneg %p130
        $region58: #{encoder_block_forward.3} parent=39 // pred_check_branch
          %272 = sbr.rel (%p270) target = $region60
        $region59: #{encoder_block_forward.3} parent=39 // pred_region
          %273 = dma.done [#allocation8], 16
        $region60: #{encoder_block_forward.3} parent=39 // pred_fallthru
          _
        %274 = sfence
        %s275 = sand.u32 %s33, 1
        %s276 = scalar_lea.sflag [#allocation6], %s275
        %s277 = sand.u32 %s33, 1
        %s278 = smul.addr %s277, 64
        %s279 = scalar_lea.vmem [#allocation5], %s278
        %p280 = pneg %p46
        %p281 = pneg %p43
        %p282 = pneg %p67
        %p283 = pneg %p64
        %p284 = pneg %p88
        %p285 = pneg %p85
        %p286 = pneg %p109
        %p287 = pneg %p106
        %p288 = pneg %p130
        %p289 = pneg %p127
        %p290 = pneg %p156
        %p291 = pneg %p153
        %s292 = sand.u32 %s143, 1
        %s293 = scalar_lea.sflag [#allocation7], %s292
        %s294 = sand.u32 %s143, 1
        %s295 = smul.addr %s294, 64
        %s296 = scalar_lea.vmem [#allocation15], %s295
        %v298 = vld [vmem:[%s253] sm:$0xff]
        %v299 = vld [vmem:[%s253 + $0x8] sm:$0xff]
        %v300 = vld [vmem:[%s253 + $0x10] sm:$0xff]
        %v301 = vld [vmem:[%s253 + $0x18] sm:$0xff]
        %v302 = vld [vmem:[%s253 + $0x20] sm:$0xff]
        %v303 = vld [vmem:[%s253 + $0x28] sm:$0xff]
        %v304 = vld [vmem:[%s253 + $0x30] sm:$0xff]
        %v305 = vld [vmem:[%s253 + $0x38] sm:$0xff]
        %vm306 = vcmask 125952
        %307 = vst.msk [vmem:[#allocation2] sm:$0xf] %vm306, 0
        %vm308 = vcmask 122880
        %309 = vst.msk [vmem:[#allocation2 + $0x4] sm:$0x1] %vm308, 0
        %s310 = scalar_lea.vmem [#allocation2], 72
        %311 = vst.msk [vmem:[%s310] sm:$0xf] %vm306, 0
        %312 = vst.msk [vmem:[%s310 + $0x4] sm:$0x1] %vm308, 0
        %vm313 = vcmask 122880
        %vm314 = vsmask.f32 256
        %vm315 = vmand %vm313, %vm314
        %v316 = vld [vmem:[#allocation2] sm:$0x1]
        %v317 = vsel %vm315, 0, %v316
        %318 = vst [vmem:[#allocation2] sm:$0x1] %v317
        %v319 = vld [vmem:[#allocation2 + $0x8] sm:$0x1]
        %v320 = vsel %vm315, 0, %v319
        %321 = vst [vmem:[#allocation2 + $0x8] sm:$0x1] %v320
        %v322 = vld [vmem:[#allocation2 + $0x10] sm:$0x1]
        %v323 = vsel %vm315, 0, %v322
        %324 = vst [vmem:[#allocation2 + $0x10] sm:$0x1] %v323
        %v325 = vld [vmem:[#allocation2 + $0x18] sm:$0x1]
        %v326 = vsel %vm315, 0, %v325
        %327 = vst [vmem:[#allocation2 + $0x18] sm:$0x1] %v326
        %v328 = vld [vmem:[#allocation2 + $0x20] sm:$0x1]
        %v329 = vsel %vm315, 0, %v328
        %330 = vst [vmem:[#allocation2 + $0x20] sm:$0x1] %v329
        %v331 = vld [vmem:[#allocation2 + $0x28] sm:$0x1]
        %v332 = vsel %vm315, 0, %v331
        %333 = vst [vmem:[#allocation2 + $0x28] sm:$0x1] %v332
        %v334 = vld [vmem:[#allocation2 + $0x30] sm:$0x1]
        %v335 = vsel %vm315, 0, %v334
        %336 = vst [vmem:[#allocation2 + $0x30] sm:$0x1] %v335
        %v337 = vld [vmem:[#allocation2 + $0x38] sm:$0x1]
        %v338 = vsel %vm315, 0, %v337
        %339 = vst [vmem:[#allocation2 + $0x38] sm:$0x1] %v338
        %v340 = vld [vmem:[#allocation2 + $0x40] sm:$0x1]
        %v341 = vsel %vm315, 0, %v340
        %342 = vst [vmem:[#allocation2 + $0x40] sm:$0x1] %v341
        %v343 = vld [vmem:[#allocation2 + $0x48] sm:$0x1]
        %v344 = vsel %vm315, 0, %v343
        %345 = vst [vmem:[#allocation2 + $0x48] sm:$0x1] %v344
        %vm346 = vsmask.f32 7938
        %vm347 = vmand %vm313, %vm346
        %v348 = vld [vmem:[#allocation2 + $0x4] sm:$0x1]
        %v349 = vsel %vm347, 0, %v348
        %350 = vst [vmem:[#allocation2 + $0x4] sm:$0x1] %v349
        %v351 = vld [vmem:[#allocation2 + $0xc] sm:$0x1]
        %v352 = vsel %vm347, 0, %v351
        %353 = vst [vmem:[#allocation2 + $0xc] sm:$0x1] %v352
        %v354 = vld [vmem:[#allocation2 + $0x14] sm:$0x1]
        %v355 = vsel %vm347, 0, %v354
        %356 = vst [vmem:[#allocation2 + $0x14] sm:$0x1] %v355
        %v357 = vld [vmem:[#allocation2 + $0x1c] sm:$0x1]
        %v358 = vsel %vm347, 0, %v357
        %359 = vst [vmem:[#allocation2 + $0x1c] sm:$0x1] %v358
        %v360 = vld [vmem:[#allocation2 + $0x24] sm:$0x1]
        %v361 = vsel %vm347, 0, %v360
        %362 = vst [vmem:[#allocation2 + $0x24] sm:$0x1] %v361
        %v363 = vld [vmem:[#allocation2 + $0x2c] sm:$0x1]
        %v364 = vsel %vm347, 0, %v363
        %365 = vst [vmem:[#allocation2 + $0x2c] sm:$0x1] %v364
        %v366 = vld [vmem:[#allocation2 + $0x34] sm:$0x1]
        %v367 = vsel %vm347, 0, %v366
        %368 = vst [vmem:[#allocation2 + $0x34] sm:$0x1] %v367
        %v369 = vld [vmem:[#allocation2 + $0x3c] sm:$0x1]
        %v370 = vsel %vm347, 0, %v369
        %371 = vst [vmem:[#allocation2 + $0x3c] sm:$0x1] %v370
        %v372 = vld [vmem:[#allocation2 + $0x44] sm:$0x1]
        %v373 = vsel %vm347, 0, %v372
        %374 = vst [vmem:[#allocation2 + $0x44] sm:$0x1] %v373
        %v375 = vld [vmem:[#allocation2 + $0x4c] sm:$0x1]
        %v376 = vsel %vm347, 0, %v375
        %377 = vst [vmem:[#allocation2 + $0x4c] sm:$0x1] %v376
        %v378 = vpack.c.bf16 %v298, %v298
        %v379 = vpack.c.bf16 %v299, %v299
        %v380 = vpack.c.bf16 %v300, %v300
        %v381 = vpack.c.bf16 %v301, %v301
        %v382 = vpack.c.bf16 %v302, %v302
        %v383 = vpack.c.bf16 %v303, %v303
        %v384 = vpack.c.bf16 %v304, %v304
        %v385 = vpack.c.bf16 %v305, %v305
        %v394 = vunpack.c.l.b16 %v378
        %v395 = vunpack.c.l.b16 %v379
        %v396 = vunpack.c.l.b16 %v380
        %v397 = vunpack.c.l.b16 %v381
        %v398 = vunpack.c.l.b16 %v382
        %v399 = vunpack.c.l.b16 %v383
        %v400 = vunpack.c.l.b16 %v384
        %v401 = vunpack.c.l.b16 %v385
        %v402 = vpack.c.b16 %v394, %v394
        %v403 = vpack.c.b16 %v395, %v395
        %v404 = vpack.c.b16 %v396, %v396
        %v405 = vpack.c.b16 %v397, %v397
        %v406 = vpack.c.b16 %v398, %v398
        %v407 = vpack.c.b16 %v399, %v399
        %v408 = vpack.c.b16 %v400, %v400
        %v409 = vpack.c.b16 %v401, %v401
        %v411 = vshrl.u32 %v402, 16
        %v413 = vrot.slane %v411, 7
        %v414 = vshll.u32 %v402, 16
        %v416 = vor.u32 %v413, %v414
        %v417 = vrot.slane %v413, 4
        %v419 = vshrl.u32 %v403, 16
        %v421 = vrot.slane %v419, 7
        %v422 = vshll.u32 %v403, 16
        %v424 = vor.u32 %v421, %v422
        %v425 = vrot.slane %v421, 4
        %v427 = vshrl.u32 %v404, 16
        %v429 = vrot.slane %v427, 7
        %v430 = vshll.u32 %v404, 16
        %v432 = vor.u32 %v429, %v430
        %v433 = vrot.slane %v429, 4
        %v435 = vshrl.u32 %v405, 16
        %v437 = vrot.slane %v435, 7
        %v438 = vshll.u32 %v405, 16
        %v440 = vor.u32 %v437, %v438
        %v441 = vrot.slane %v437, 4
        %v443 = vshrl.u32 %v406, 16
        %v445 = vrot.slane %v443, 7
        %v446 = vshll.u32 %v406, 16
        %v448 = vor.u32 %v445, %v446
        %v449 = vrot.slane %v445, 4
        %v451 = vshrl.u32 %v407, 16
        %v453 = vrot.slane %v451, 7
        %v454 = vshll.u32 %v407, 16
        %v456 = vor.u32 %v453, %v454
        %v457 = vrot.slane %v453, 4
        %v459 = vshrl.u32 %v408, 16
        %v461 = vrot.slane %v459, 7
        %v462 = vshll.u32 %v408, 16
        %v464 = vor.u32 %v461, %v462
        %v465 = vrot.slane %v461, 4
        %v467 = vshrl.u32 %v409, 16
        %v469 = vrot.slane %v467, 7
        %v470 = vshll.u32 %v409, 16
        %v472 = vor.u32 %v469, %v470
        %v473 = vrot.slane %v469, 4
        %s490 = scalar_lea.vmem [#allocation2], 8
        %vm491 = vcmask 125952
        %vm492 = vmand %vm491, %vm346
        %v493 = vld [vmem:[%s490] sm:$0xf]
        %v494 = vsel %vm492, %v416, %v493
        %495 = vst [vmem:[%s490] sm:$0xf] %v494
        %v496 = vld [vmem:[%s490 + $0x4] sm:$0x1]
        %v497 = vsel %vm315, %v417, %v496
        %498 = vst [vmem:[%s490 + $0x4] sm:$0x1] %v497
        %v499 = vld [vmem:[%s490 + $0x8] sm:$0xf]
        %v500 = vsel %vm492, %v424, %v499
        %501 = vst [vmem:[%s490 + $0x8] sm:$0xf] %v500
        %v502 = vld [vmem:[%s490 + $0xc] sm:$0x1]
        %v503 = vsel %vm315, %v425, %v502
        %504 = vst [vmem:[%s490 + $0xc] sm:$0x1] %v503
        %v505 = vld [vmem:[%s490 + $0x10] sm:$0xf]
        %v506 = vsel %vm492, %v432, %v505
        %507 = vst [vmem:[%s490 + $0x10] sm:$0xf] %v506
        %v508 = vld [vmem:[%s490 + $0x14] sm:$0x1]
        %v509 = vsel %vm315, %v433, %v508
        %510 = vst [vmem:[%s490 + $0x14] sm:$0x1] %v509
        %v511 = vld [vmem:[%s490 + $0x18] sm:$0xf]
        %v512 = vsel %vm492, %v440, %v511
        %513 = vst [vmem:[%s490 + $0x18] sm:$0xf] %v512
        %v514 = vld [vmem:[%s490 + $0x1c] sm:$0x1]
        %v515 = vsel %vm315, %v441, %v514
        %516 = vst [vmem:[%s490 + $0x1c] sm:$0x1] %v515
        %v517 = vld [vmem:[%s490 + $0x20] sm:$0xf]
        %v518 = vsel %vm492, %v448, %v517
        %519 = vst [vmem:[%s490 + $0x20] sm:$0xf] %v518
        %v520 = vld [vmem:[%s490 + $0x24] sm:$0x1]
        %v521 = vsel %vm315, %v449, %v520
        %522 = vst [vmem:[%s490 + $0x24] sm:$0x1] %v521
        %v523 = vld [vmem:[%s490 + $0x28] sm:$0xf]
        %v524 = vsel %vm492, %v456, %v523
        %525 = vst [vmem:[%s490 + $0x28] sm:$0xf] %v524
        %v526 = vld [vmem:[%s490 + $0x2c] sm:$0x1]
        %v527 = vsel %vm315, %v457, %v526
        %528 = vst [vmem:[%s490 + $0x2c] sm:$0x1] %v527
        %v529 = vld [vmem:[%s490 + $0x30] sm:$0xf]
        %v530 = vsel %vm492, %v464, %v529
        %531 = vst [vmem:[%s490 + $0x30] sm:$0xf] %v530
        %v532 = vld [vmem:[%s490 + $0x34] sm:$0x1]
        %v533 = vsel %vm315, %v465, %v532
        %534 = vst [vmem:[%s490 + $0x34] sm:$0x1] %v533
        %v535 = vld [vmem:[%s490 + $0x38] sm:$0xf]
        %v536 = vsel %vm492, %v472, %v535
        %537 = vst [vmem:[%s490 + $0x38] sm:$0xf] %v536
        %v538 = vld [vmem:[%s490 + $0x3c] sm:$0x1]
        %v539 = vsel %vm315, %v473, %v538
        %540 = vst [vmem:[%s490 + $0x3c] sm:$0x1] %v539
        %v541 = vld [vmem:[#allocation2] sm:$0xf]
        %v542 = vld [vmem:[#allocation2 + $0x8] sm:$0xf]
        %v543 = vld [vmem:[#allocation2 + $0x10] sm:$0xf]
        %v544 = vld [vmem:[#allocation2 + $0x18] sm:$0xf]
        %v545 = vld [vmem:[#allocation2 + $0x20] sm:$0xf]
        %v546 = vld [vmem:[#allocation2 + $0x28] sm:$0xf]
        %v547 = vld [vmem:[#allocation2 + $0x30] sm:$0xf]
        %v548 = vld [vmem:[#allocation2 + $0x38] sm:$0xf]
        %v557 = vunpack.c.l.b16 %v541
        %v558 = vunpack.c.l.b16 %v542
        %v559 = vunpack.c.l.b16 %v543
        %v560 = vunpack.c.l.b16 %v544
        %v561 = vunpack.c.l.b16 %v545
        %v562 = vunpack.c.l.b16 %v546
        %v563 = vunpack.c.l.b16 %v547
        %v564 = vunpack.c.l.b16 %v548
        %v565 = vpack.c.b16 %v558, %v557
        %v566 = vpack.c.b16 %v560, %v559
        %v567 = vpack.c.b16 %v562, %v561
        %v568 = vpack.c.b16 %v564, %v563
        %vm573 = vcmask 130048
        %574 = vst.msk [vmem:[#allocation3] sm:$0xff] %vm573, %v565
        %575 = vst.msk [vmem:[#allocation3 + $0x10] sm:$0xff] %vm573, %v566
        %576 = vst.msk [vmem:[#allocation3 + $0x20] sm:$0xff] %vm573, %v567
        %577 = vst.msk [vmem:[#allocation3 + $0x30] sm:$0xff] %vm573, %v568
        %v578 = vld [vmem:[#allocation2] sm:$0xf]
        %v579 = vld [vmem:[#allocation2 + $0x4] sm:$0x1]
        %v580 = vld [vmem:[#allocation2 + $0x8] sm:$0xf]
        %v581 = vld [vmem:[#allocation2 + $0xc] sm:$0x1]
        %v582 = vld [vmem:[#allocation2 + $0x10] sm:$0xf]
        %v583 = vld [vmem:[#allocation2 + $0x14] sm:$0x1]
        %v584 = vld [vmem:[#allocation2 + $0x18] sm:$0xf]
        %v585 = vld [vmem:[#allocation2 + $0x1c] sm:$0x1]
        %v586 = vld [vmem:[#allocation2 + $0x20] sm:$0xf]
        %v587 = vld [vmem:[#allocation2 + $0x24] sm:$0x1]
        %v588 = vld [vmem:[#allocation2 + $0x28] sm:$0xf]
        %v589 = vld [vmem:[#allocation2 + $0x2c] sm:$0x1]
        %v590 = vld [vmem:[#allocation2 + $0x30] sm:$0xf]
        %v591 = vld [vmem:[#allocation2 + $0x34] sm:$0x1]
        %v592 = vld [vmem:[#allocation2 + $0x38] sm:$0xf]
        %v593 = vld [vmem:[#allocation2 + $0x3c] sm:$0x1]
        %vm594 = vsmask.f32 3328
        %vm595 = vsmask.f32 7440
        %vm596 = vmor %vm594, %vm595
        %v598 = vshrl.u32 %v578, 16
        %v600 = vrot.slane %v598, 4
        %v601 = vshll.u32 %v578, 16
        %v603 = vrot.slane %v601, 5
        %v604 = vor.u32 %v600, %v603
        %v605 = vrot.slane %v604, 4
        %v607 = vshll.u32 %v579, 16
        %v609 = vrot.slane %v607, 5
        %v610 = vsel %vm596, %v605, %v609
        %v612 = vshrl.u32 %v580, 16
        %v614 = vrot.slane %v612, 4
        %v615 = vshll.u32 %v580, 16
        %v617 = vrot.slane %v615, 5
        %v618 = vor.u32 %v614, %v617
        %v619 = vrot.slane %v618, 4
        %v621 = vshll.u32 %v581, 16
        %v623 = vrot.slane %v621, 5
        %v624 = vsel %vm596, %v619, %v623
        %v626 = vshrl.u32 %v582, 16
        %v628 = vrot.slane %v626, 4
        %v629 = vshll.u32 %v582, 16
        %v631 = vrot.slane %v629, 5
        %v632 = vor.u32 %v628, %v631
        %v633 = vrot.slane %v632, 4
        %v635 = vshll.u32 %v583, 16
        %v637 = vrot.slane %v635, 5
        %v638 = vsel %vm596, %v633, %v637
        %v640 = vshrl.u32 %v584, 16
        %v642 = vrot.slane %v640, 4
        %v643 = vshll.u32 %v584, 16
        %v645 = vrot.slane %v643, 5
        %v646 = vor.u32 %v642, %v645
        %v647 = vrot.slane %v646, 4
        %v649 = vshll.u32 %v585, 16
        %v651 = vrot.slane %v649, 5
        %v652 = vsel %vm596, %v647, %v651
        %v654 = vshrl.u32 %v586, 16
        %v656 = vrot.slane %v654, 4
        %v657 = vshll.u32 %v586, 16
        %v659 = vrot.slane %v657, 5
        %v660 = vor.u32 %v656, %v659
        %v661 = vrot.slane %v660, 4
        %v663 = vshll.u32 %v587, 16
        %v665 = vrot.slane %v663, 5
        %v666 = vsel %vm596, %v661, %v665
        %v668 = vshrl.u32 %v588, 16
        %v670 = vrot.slane %v668, 4
        %v671 = vshll.u32 %v588, 16
        %v673 = vrot.slane %v671, 5
        %v674 = vor.u32 %v670, %v673
        %v675 = vrot.slane %v674, 4
        %v677 = vshll.u32 %v589, 16
        %v679 = vrot.slane %v677, 5
        %v680 = vsel %vm596, %v675, %v679
        %v682 = vshrl.u32 %v590, 16
        %v684 = vrot.slane %v682, 4
        %v685 = vshll.u32 %v590, 16
        %v687 = vrot.slane %v685, 5
        %v688 = vor.u32 %v684, %v687
        %v689 = vrot.slane %v688, 4
        %v691 = vshll.u32 %v591, 16
        %v693 = vrot.slane %v691, 5
        %v694 = vsel %vm596, %v689, %v693
        %v696 = vshrl.u32 %v592, 16
        %v698 = vrot.slane %v696, 4
        %v699 = vshll.u32 %v592, 16
        %v701 = vrot.slane %v699, 5
        %v702 = vor.u32 %v698, %v701
        %v703 = vrot.slane %v702, 4
        %v705 = vshll.u32 %v593, 16
        %v707 = vrot.slane %v705, 5
        %v708 = vsel %vm596, %v703, %v707
        %v709 = vunpack.c.l.b16 %v610
        %v710 = vunpack.c.l.b16 %v624
        %v711 = vunpack.c.l.b16 %v638
        %v712 = vunpack.c.l.b16 %v652
        %v713 = vunpack.c.l.b16 %v666
        %v714 = vunpack.c.l.b16 %v680
        %v715 = vunpack.c.l.b16 %v694
        %v716 = vunpack.c.l.b16 %v708
        %v717 = vpack.c.b16 %v710, %v709
        %v718 = vpack.c.b16 %v712, %v711
        %v719 = vpack.c.b16 %v714, %v713
        %v720 = vpack.c.b16 %v716, %v715
        %721 = vrot.lane.b32.xlu0 %v717, 16
        %v722 = vpop.permute.xlu0 %721
        %723 = vrot.lane.b32.xlu0 %v718, 16
        %v724 = vpop.permute.xlu0 %723
        %725 = vrot.lane.b32.xlu0 %v719, 16
        %v726 = vpop.permute.xlu0 %725
        %727 = vrot.lane.b32.xlu0 %v720, 16
        %v728 = vpop.permute.xlu0 %727
        %vm733 = vcmask 261248
        %734 = vst.msk [vmem:[#allocation3] sm:$0xff] %vm733, %v722
        %735 = vst.msk [vmem:[#allocation3 + $0x10] sm:$0xff] %vm733, %v724
        %736 = vst.msk [vmem:[#allocation3 + $0x20] sm:$0xff] %vm733, %v726
        %737 = vst.msk [vmem:[#allocation3 + $0x30] sm:$0xff] %vm733, %v728
        %v738 = vld [vmem:[#allocation2] sm:$0xe]
        %v739 = vld [vmem:[#allocation2 + $0x4] sm:$0x1]
        %v740 = vld [vmem:[#allocation2 + $0x8] sm:$0xe]
        %v741 = vld [vmem:[#allocation2 + $0xc] sm:$0x1]
        %v742 = vld [vmem:[#allocation2 + $0x10] sm:$0xe]
        %v743 = vld [vmem:[#allocation2 + $0x14] sm:$0x1]
        %v744 = vld [vmem:[#allocation2 + $0x18] sm:$0xe]
        %v745 = vld [vmem:[#allocation2 + $0x1c] sm:$0x1]
        %v746 = vld [vmem:[#allocation2 + $0x20] sm:$0xe]
        %v747 = vld [vmem:[#allocation2 + $0x24] sm:$0x1]
        %v748 = vld [vmem:[#allocation2 + $0x28] sm:$0xe]
        %v749 = vld [vmem:[#allocation2 + $0x2c] sm:$0x1]
        %v750 = vld [vmem:[#allocation2 + $0x30] sm:$0xe]
        %v751 = vld [vmem:[#allocation2 + $0x34] sm:$0x1]
        %v752 = vld [vmem:[#allocation2 + $0x38] sm:$0xe]
        %v753 = vld [vmem:[#allocation2 + $0x3c] sm:$0x1]
        %vm770 = vcmask 1042432
        %vm771 = vcmask 1046532
        %vm772 = vmor %vm770, %vm771
        %v773 = vrot.slane %v738, 5
        %v774 = vrot.slane %v773, 4
        %v775 = vrot.slane %v739, 5
        %v776 = vsel %vm772, %v774, %v775
        %v777 = vrot.slane %v740, 5
        %v778 = vrot.slane %v777, 4
        %v779 = vrot.slane %v741, 5
        %v780 = vsel %vm772, %v778, %v779
        %v781 = vrot.slane %v742, 5
        %v782 = vrot.slane %v781, 4
        %v783 = vrot.slane %v743, 5
        %v784 = vsel %vm772, %v782, %v783
        %v785 = vrot.slane %v744, 5
        %v786 = vrot.slane %v785, 4
        %v787 = vrot.slane %v745, 5
        %v788 = vsel %vm772, %v786, %v787
        %v789 = vrot.slane %v746, 5
        %v790 = vrot.slane %v789, 4
        %v791 = vrot.slane %v747, 5
        %v792 = vsel %vm772, %v790, %v791
        %v793 = vrot.slane %v748, 5
        %v794 = vrot.slane %v793, 4
        %v795 = vrot.slane %v749, 5
        %v796 = vsel %vm772, %v794, %v795
        %v797 = vrot.slane %v750, 5
        %v798 = vrot.slane %v797, 4
        %v799 = vrot.slane %v751, 5
        %v800 = vsel %vm772, %v798, %v799
        %v801 = vrot.slane %v752, 5
        %v802 = vrot.slane %v801, 4
        %v803 = vrot.slane %v753, 5
        %v804 = vsel %vm772, %v802, %v803
        %v805 = vunpack.c.l.b16 %v776
        %v806 = vunpack.c.l.b16 %v780
        %v807 = vunpack.c.l.b16 %v784
        %v808 = vunpack.c.l.b16 %v788
        %v809 = vunpack.c.l.b16 %v792
        %v810 = vunpack.c.l.b16 %v796
        %v811 = vunpack.c.l.b16 %v800
        %v812 = vunpack.c.l.b16 %v804
        %v813 = vpack.c.b16 %v806, %v805
        %v814 = vpack.c.b16 %v808, %v807
        %v815 = vpack.c.b16 %v810, %v809
        %v816 = vpack.c.b16 %v812, %v811
        %817 = vrot.lane.b32.xlu0 %v813, 32
        %v818 = vpop.permute.xlu0 %817
        %819 = vrot.lane.b32.xlu0 %v814, 32
        %v820 = vpop.permute.xlu0 %819
        %821 = vrot.lane.b32.xlu0 %v815, 32
        %v822 = vpop.permute.xlu0 %821
        %823 = vrot.lane.b32.xlu0 %v816, 32
        %v824 = vpop.permute.xlu0 %823
        %vm829 = vcmask 392448
        %830 = vst.msk [vmem:[#allocation3] sm:$0xff] %vm829, %v818
        %831 = vst.msk [vmem:[#allocation3 + $0x10] sm:$0xff] %vm829, %v820
        %832 = vst.msk [vmem:[#allocation3 + $0x20] sm:$0xff] %vm829, %v822
        %833 = vst.msk [vmem:[#allocation3 + $0x30] sm:$0xff] %vm829, %v824
        %v834 = vld [vmem:[%s490] sm:$0xf]
        %v835 = vld [vmem:[%s490 + $0x8] sm:$0xf]
        %v836 = vld [vmem:[%s490 + $0x10] sm:$0xf]
        %v837 = vld [vmem:[%s490 + $0x18] sm:$0xf]
        %v838 = vld [vmem:[%s490 + $0x20] sm:$0xf]
        %v839 = vld [vmem:[%s490 + $0x28] sm:$0xf]
        %v840 = vld [vmem:[%s490 + $0x30] sm:$0xf]
        %v841 = vld [vmem:[%s490 + $0x38] sm:$0xf]
        %v850 = vunpack.c.l.b16 %v834
        %v851 = vunpack.c.l.b16 %v835
        %v852 = vunpack.c.l.b16 %v836
        %v853 = vunpack.c.l.b16 %v837
        %v854 = vunpack.c.l.b16 %v838
        %v855 = vunpack.c.l.b16 %v839
        %v856 = vunpack.c.l.b16 %v840
        %v857 = vunpack.c.l.b16 %v841
        %v858 = vpack.c.b16 %v851, %v850
        %v859 = vpack.c.b16 %v853, %v852
        %v860 = vpack.c.b16 %v855, %v854
        %v861 = vpack.c.b16 %v857, %v856
        %862 = vrot.lane.b32.xlu0 %v858, 48
        %v863 = vpop.permute.xlu0 %862
        %864 = vrot.lane.b32.xlu0 %v859, 48
        %v865 = vpop.permute.xlu0 %864
        %866 = vrot.lane.b32.xlu0 %v860, 48
        %v867 = vpop.permute.xlu0 %866
        %868 = vrot.lane.b32.xlu0 %v861, 48
        %v869 = vpop.permute.xlu0 %868
        %vm874 = vcmask 523648
        %875 = vst.msk [vmem:[#allocation3] sm:$0xff] %vm874, %v863
        %876 = vst.msk [vmem:[#allocation3 + $0x10] sm:$0xff] %vm874, %v865
        %877 = vst.msk [vmem:[#allocation3 + $0x20] sm:$0xff] %vm874, %v867
        %878 = vst.msk [vmem:[#allocation3 + $0x30] sm:$0xff] %vm874, %v869
        %v879 = vld [vmem:[%s490] sm:$0xf]
        %v880 = vld [vmem:[%s490 + $0x4] sm:$0x1]
        %v881 = vld [vmem:[%s490 + $0x8] sm:$0xf]
        %v882 = vld [vmem:[%s490 + $0xc] sm:$0x1]
        %v883 = vld [vmem:[%s490 + $0x10] sm:$0xf]
        %v884 = vld [vmem:[%s490 + $0x14] sm:$0x1]
        %v885 = vld [vmem:[%s490 + $0x18] sm:$0xf]
        %v886 = vld [vmem:[%s490 + $0x1c] sm:$0x1]
        %v887 = vld [vmem:[%s490 + $0x20] sm:$0xf]
        %v888 = vld [vmem:[%s490 + $0x24] sm:$0x1]
        %v889 = vld [vmem:[%s490 + $0x28] sm:$0xf]
        %v890 = vld [vmem:[%s490 + $0x2c] sm:$0x1]
        %v891 = vld [vmem:[%s490 + $0x30] sm:$0xf]
        %v892 = vld [vmem:[%s490 + $0x34] sm:$0x1]
        %v893 = vld [vmem:[%s490 + $0x38] sm:$0xf]
        %v894 = vld [vmem:[%s490 + $0x3c] sm:$0x1]
        %v896 = vshrl.u32 %v879, 16
        %v898 = vrot.slane %v896, 4
        %v899 = vshll.u32 %v879, 16
        %v901 = vrot.slane %v899, 5
        %v902 = vor.u32 %v898, %v901
        %v903 = vrot.slane %v902, 4
        %v905 = vshll.u32 %v880, 16
        %v907 = vrot.slane %v905, 5
        %v908 = vsel %vm596, %v903, %v907
        %v910 = vshrl.u32 %v881, 16
        %v912 = vrot.slane %v910, 4
        %v913 = vshll.u32 %v881, 16
        %v915 = vrot.slane %v913, 5
        %v916 = vor.u32 %v912, %v915
        %v917 = vrot.slane %v916, 4
        %v919 = vshll.u32 %v882, 16
        %v921 = vrot.slane %v919, 5
        %v922 = vsel %vm596, %v917, %v921
        %v924 = vshrl.u32 %v883, 16
        %v926 = vrot.slane %v924, 4
        %v927 = vshll.u32 %v883, 16
        %v929 = vrot.slane %v927, 5
        %v930 = vor.u32 %v926, %v929
        %v931 = vrot.slane %v930, 4
        %v933 = vshll.u32 %v884, 16
        %v935 = vrot.slane %v933, 5
        %v936 = vsel %vm596, %v931, %v935
        %v938 = vshrl.u32 %v885, 16
        %v940 = vrot.slane %v938, 4
        %v941 = vshll.u32 %v885, 16
        %v943 = vrot.slane %v941, 5
        %v944 = vor.u32 %v940, %v943
        %v945 = vrot.slane %v944, 4
        %v947 = vshll.u32 %v886, 16
        %v949 = vrot.slane %v947, 5
        %v950 = vsel %vm596, %v945, %v949
        %v952 = vshrl.u32 %v887, 16
        %v954 = vrot.slane %v952, 4
        %v955 = vshll.u32 %v887, 16
        %v957 = vrot.slane %v955, 5
        %v958 = vor.u32 %v954, %v957
        %v959 = vrot.slane %v958, 4
        %v961 = vshll.u32 %v888, 16
        %v963 = vrot.slane %v961, 5
        %v964 = vsel %vm596, %v959, %v963
        %v966 = vshrl.u32 %v889, 16
        %v968 = vrot.slane %v966, 4
        %v969 = vshll.u32 %v889, 16
        %v971 = vrot.slane %v969, 5
        %v972 = vor.u32 %v968, %v971
        %v973 = vrot.slane %v972, 4
        %v975 = vshll.u32 %v890, 16
        %v977 = vrot.slane %v975, 5
        %v978 = vsel %vm596, %v973, %v977
        %v980 = vshrl.u32 %v891, 16
        %v982 = vrot.slane %v980, 4
        %v983 = vshll.u32 %v891, 16
        %v985 = vrot.slane %v983, 5
        %v986 = vor.u32 %v982, %v985
        %v987 = vrot.slane %v986, 4
        %v989 = vshll.u32 %v892, 16
        %v991 = vrot.slane %v989, 5
        %v992 = vsel %vm596, %v987, %v991
        %v994 = vshrl.u32 %v893, 16
        %v996 = vrot.slane %v994, 4
        %v997 = vshll.u32 %v893, 16
        %v999 = vrot.slane %v997, 5
        %v1000 = vor.u32 %v996, %v999
        %v1001 = vrot.slane %v1000, 4
        %v1003 = vshll.u32 %v894, 16
        %v1005 = vrot.slane %v1003, 5
        %v1006 = vsel %vm596, %v1001, %v1005
        %v1007 = vunpack.c.l.b16 %v908
        %v1008 = vunpack.c.l.b16 %v922
        %v1009 = vunpack.c.l.b16 %v936
        %v1010 = vunpack.c.l.b16 %v950
        %v1011 = vunpack.c.l.b16 %v964
        %v1012 = vunpack.c.l.b16 %v978
        %v1013 = vunpack.c.l.b16 %v992
        %v1014 = vunpack.c.l.b16 %v1006
        %v1015 = vpack.c.b16 %v1008, %v1007
        %v1016 = vpack.c.b16 %v1010, %v1009
        %v1017 = vpack.c.b16 %v1012, %v1011
        %v1018 = vpack.c.b16 %v1014, %v1013
        %1019 = vrot.lane.b32.xlu0 %v1015, 64
        %v1020 = vpop.permute.xlu0 %1019
        %1021 = vrot.lane.b32.xlu0 %v1016, 64
        %v1022 = vpop.permute.xlu0 %1021
        %1023 = vrot.lane.b32.xlu0 %v1017, 64
        %v1024 = vpop.permute.xlu0 %1023
        %1025 = vrot.lane.b32.xlu0 %v1018, 64
        %v1026 = vpop.permute.xlu0 %1025
        %vm1031 = vcmask 654848
        %1032 = vst.msk [vmem:[#allocation3] sm:$0xff] %vm1031, %v1020
        %1033 = vst.msk [vmem:[#allocation3 + $0x10] sm:$0xff] %vm1031, %v1022
        %1034 = vst.msk [vmem:[#allocation3 + $0x20] sm:$0xff] %vm1031, %v1024
        %1035 = vst.msk [vmem:[#allocation3 + $0x30] sm:$0xff] %vm1031, %v1026
        %v1036 = vld [vmem:[%s490] sm:$0xe]
        %v1037 = vld [vmem:[%s490 + $0x4] sm:$0x1]
        %v1038 = vld [vmem:[%s490 + $0x8] sm:$0xe]
        %v1039 = vld [vmem:[%s490 + $0xc] sm:$0x1]
        %v1040 = vld [vmem:[%s490 + $0x10] sm:$0xe]
        %v1041 = vld [vmem:[%s490 + $0x14] sm:$0x1]
        %v1042 = vld [vmem:[%s490 + $0x18] sm:$0xe]
        %v1043 = vld [vmem:[%s490 + $0x1c] sm:$0x1]
        %v1044 = vld [vmem:[%s490 + $0x20] sm:$0xe]
        %v1045 = vld [vmem:[%s490 + $0x24] sm:$0x1]
        %v1046 = vld [vmem:[%s490 + $0x28] sm:$0xe]
        %v1047 = vld [vmem:[%s490 + $0x2c] sm:$0x1]
        %v1048 = vld [vmem:[%s490 + $0x30] sm:$0xe]
        %v1049 = vld [vmem:[%s490 + $0x34] sm:$0x1]
        %v1050 = vld [vmem:[%s490 + $0x38] sm:$0xe]
        %v1051 = vld [vmem:[%s490 + $0x3c] sm:$0x1]
        %v1068 = vrot.slane %v1036, 5
        %v1069 = vrot.slane %v1068, 4
        %v1070 = vrot.slane %v1037, 5
        %v1071 = vsel %vm772, %v1069, %v1070
        %v1072 = vrot.slane %v1038, 5
        %v1073 = vrot.slane %v1072, 4
        %v1074 = vrot.slane %v1039, 5
        %v1075 = vsel %vm772, %v1073, %v1074
        %v1076 = vrot.slane %v1040, 5
        %v1077 = vrot.slane %v1076, 4
        %v1078 = vrot.slane %v1041, 5
        %v1079 = vsel %vm772, %v1077, %v1078
        %v1080 = vrot.slane %v1042, 5
        %v1081 = vrot.slane %v1080, 4
        %v1082 = vrot.slane %v1043, 5
        %v1083 = vsel %vm772, %v1081, %v1082
        %v1084 = vrot.slane %v1044, 5
        %v1085 = vrot.slane %v1084, 4
        %v1086 = vrot.slane %v1045, 5
        %v1087 = vsel %vm772, %v1085, %v1086
        %v1088 = vrot.slane %v1046, 5
        %v1089 = vrot.slane %v1088, 4
        %v1090 = vrot.slane %v1047, 5
        %v1091 = vsel %vm772, %v1089, %v1090
        %v1092 = vrot.slane %v1048, 5
        %v1093 = vrot.slane %v1092, 4
        %v1094 = vrot.slane %v1049, 5
        %v1095 = vsel %vm772, %v1093, %v1094
        %v1096 = vrot.slane %v1050, 5
        %v1097 = vrot.slane %v1096, 4
        %v1098 = vrot.slane %v1051, 5
        %v1099 = vsel %vm772, %v1097, %v1098
        %v1100 = vunpack.c.l.b16 %v1071
        %v1101 = vunpack.c.l.b16 %v1075
        %v1102 = vunpack.c.l.b16 %v1079
        %v1103 = vunpack.c.l.b16 %v1083
        %v1104 = vunpack.c.l.b16 %v1087
        %v1105 = vunpack.c.l.b16 %v1091
        %v1106 = vunpack.c.l.b16 %v1095
        %v1107 = vunpack.c.l.b16 %v1099
        %v1108 = vpack.c.b16 %v1101, %v1100
        %v1109 = vpack.c.b16 %v1103, %v1102
        %v1110 = vpack.c.b16 %v1105, %v1104
        %v1111 = vpack.c.b16 %v1107, %v1106
        %1112 = vrot.lane.b32.xlu0 %v1108, 80
        %v1113 = vpop.permute.xlu0 %1112
        %1114 = vrot.lane.b32.xlu0 %v1109, 80
        %v1115 = vpop.permute.xlu0 %1114
        %1116 = vrot.lane.b32.xlu0 %v1110, 80
        %v1117 = vpop.permute.xlu0 %1116
        %1118 = vrot.lane.b32.xlu0 %v1111, 80
        %v1119 = vpop.permute.xlu0 %1118
        %vm1124 = vcmask 786048
        %1125 = vst.msk [vmem:[#allocation3] sm:$0xff] %vm1124, %v1113
        %1126 = vst.msk [vmem:[#allocation3 + $0x10] sm:$0xff] %vm1124, %v1115
        %1127 = vst.msk [vmem:[#allocation3 + $0x20] sm:$0xff] %vm1124, %v1117
        %1128 = vst.msk [vmem:[#allocation3 + $0x30] sm:$0xff] %vm1124, %v1119
        %s1129 = scalar_lea.vmem [#allocation2], 16
        %v1130 = vld [vmem:[%s1129] sm:$0xf]
        %v1131 = vld [vmem:[%s1129 + $0x8] sm:$0xf]
        %v1132 = vld [vmem:[%s1129 + $0x10] sm:$0xf]
        %v1133 = vld [vmem:[%s1129 + $0x18] sm:$0xf]
        %v1134 = vld [vmem:[%s1129 + $0x20] sm:$0xf]
        %v1135 = vld [vmem:[%s1129 + $0x28] sm:$0xf]
        %v1136 = vld [vmem:[%s1129 + $0x30] sm:$0xf]
        %v1137 = vld [vmem:[%s1129 + $0x38] sm:$0xf]
        %v1146 = vunpack.c.l.b16 %v1130
        %v1147 = vunpack.c.l.b16 %v1131
        %v1148 = vunpack.c.l.b16 %v1132
        %v1149 = vunpack.c.l.b16 %v1133
        %v1150 = vunpack.c.l.b16 %v1134
        %v1151 = vunpack.c.l.b16 %v1135
        %v1152 = vunpack.c.l.b16 %v1136
        %v1153 = vunpack.c.l.b16 %v1137
        %v1154 = vpack.c.b16 %v1147, %v1146
        %v1155 = vpack.c.b16 %v1149, %v1148
        %v1156 = vpack.c.b16 %v1151, %v1150
        %v1157 = vpack.c.b16 %v1153, %v1152
        %1158 = vrot.lane.b32.xlu0 %v1154, 96
        %v1159 = vpop.permute.xlu0 %1158
        %1160 = vrot.lane.b32.xlu0 %v1155, 96
        %v1161 = vpop.permute.xlu0 %1160
        %1162 = vrot.lane.b32.xlu0 %v1156, 96
        %v1163 = vpop.permute.xlu0 %1162
        %1164 = vrot.lane.b32.xlu0 %v1157, 96
        %v1165 = vpop.permute.xlu0 %1164
        %vm1170 = vcmask 917248
        %1171 = vst.msk [vmem:[#allocation3] sm:$0xff] %vm1170, %v1159
        %1172 = vst.msk [vmem:[#allocation3 + $0x10] sm:$0xff] %vm1170, %v1161
        %1173 = vst.msk [vmem:[#allocation3 + $0x20] sm:$0xff] %vm1170, %v1163
        %1174 = vst.msk [vmem:[#allocation3 + $0x30] sm:$0xff] %vm1170, %v1165
        %v1175 = vld [vmem:[%s1129] sm:$0xf]
        %v1176 = vld [vmem:[%s1129 + $0x4] sm:$0x1]
        %v1177 = vld [vmem:[%s1129 + $0x8] sm:$0xf]
        %v1178 = vld [vmem:[%s1129 + $0xc] sm:$0x1]
        %v1179 = vld [vmem:[%s1129 + $0x10] sm:$0xf]
        %v1180 = vld [vmem:[%s1129 + $0x14] sm:$0x1]
        %v1181 = vld [vmem:[%s1129 + $0x18] sm:$0xf]
        %v1182 = vld [vmem:[%s1129 + $0x1c] sm:$0x1]
        %v1183 = vld [vmem:[%s1129 + $0x20] sm:$0xf]
        %v1184 = vld [vmem:[%s1129 + $0x24] sm:$0x1]
        %v1185 = vld [vmem:[%s1129 + $0x28] sm:$0xf]
        %v1186 = vld [vmem:[%s1129 + $0x2c] sm:$0x1]
        %v1187 = vld [vmem:[%s1129 + $0x30] sm:$0xf]
        %v1188 = vld [vmem:[%s1129 + $0x34] sm:$0x1]
        %v1189 = vld [vmem:[%s1129 + $0x38] sm:$0xf]
        %v1190 = vld [vmem:[%s1129 + $0x3c] sm:$0x1]
        %v1192 = vshrl.u32 %v1175, 16
        %v1194 = vrot.slane %v1192, 4
        %v1195 = vshll.u32 %v1175, 16
        %v1197 = vrot.slane %v1195, 5
        %v1198 = vor.u32 %v1194, %v1197
        %v1199 = vrot.slane %v1198, 4
        %v1201 = vshll.u32 %v1176, 16
        %v1203 = vrot.slane %v1201, 5
        %v1204 = vsel %vm596, %v1199, %v1203
        %v1206 = vshrl.u32 %v1177, 16
        %v1208 = vrot.slane %v1206, 4
        %v1209 = vshll.u32 %v1177, 16
        %v1211 = vrot.slane %v1209, 5
        %v1212 = vor.u32 %v1208, %v1211
        %v1213 = vrot.slane %v1212, 4
        %v1215 = vshll.u32 %v1178, 16
        %v1217 = vrot.slane %v1215, 5
        %v1218 = vsel %vm596, %v1213, %v1217
        %v1220 = vshrl.u32 %v1179, 16
        %v1222 = vrot.slane %v1220, 4
        %v1223 = vshll.u32 %v1179, 16
        %v1225 = vrot.slane %v1223, 5
        %v1226 = vor.u32 %v1222, %v1225
        %v1227 = vrot.slane %v1226, 4
        %v1229 = vshll.u32 %v1180, 16
        %v1231 = vrot.slane %v1229, 5
        %v1232 = vsel %vm596, %v1227, %v1231
        %v1234 = vshrl.u32 %v1181, 16
        %v1236 = vrot.slane %v1234, 4
        %v1237 = vshll.u32 %v1181, 16
        %v1239 = vrot.slane %v1237, 5
        %v1240 = vor.u32 %v1236, %v1239
        %v1241 = vrot.slane %v1240, 4
        %v1243 = vshll.u32 %v1182, 16
        %v1245 = vrot.slane %v1243, 5
        %v1246 = vsel %vm596, %v1241, %v1245
        %v1248 = vshrl.u32 %v1183, 16
        %v1250 = vrot.slane %v1248, 4
        %v1251 = vshll.u32 %v1183, 16
        %v1253 = vrot.slane %v1251, 5
        %v1254 = vor.u32 %v1250, %v1253
        %v1255 = vrot.slane %v1254, 4
        %v1257 = vshll.u32 %v1184, 16
        %v1259 = vrot.slane %v1257, 5
        %v1260 = vsel %vm596, %v1255, %v1259
        %v1262 = vshrl.u32 %v1185, 16
        %v1264 = vrot.slane %v1262, 4
        %v1265 = vshll.u32 %v1185, 16
        %v1267 = vrot.slane %v1265, 5
        %v1268 = vor.u32 %v1264, %v1267
        %v1269 = vrot.slane %v1268, 4
        %v1271 = vshll.u32 %v1186, 16
        %v1273 = vrot.slane %v1271, 5
        %v1274 = vsel %vm596, %v1269, %v1273
        %v1276 = vshrl.u32 %v1187, 16
        %v1278 = vrot.slane %v1276, 4
        %v1279 = vshll.u32 %v1187, 16
        %v1281 = vrot.slane %v1279, 5
        %v1282 = vor.u32 %v1278, %v1281
        %v1283 = vrot.slane %v1282, 4
        %v1285 = vshll.u32 %v1188, 16
        %v1287 = vrot.slane %v1285, 5
        %v1288 = vsel %vm596, %v1283, %v1287
        %v1290 = vshrl.u32 %v1189, 16
        %v1292 = vrot.slane %v1290, 4
        %v1293 = vshll.u32 %v1189, 16
        %v1295 = vrot.slane %v1293, 5
        %v1296 = vor.u32 %v1292, %v1295
        %v1297 = vrot.slane %v1296, 4
        %v1299 = vshll.u32 %v1190, 16
        %v1301 = vrot.slane %v1299, 5
        %v1302 = vsel %vm596, %v1297, %v1301
        %v1303 = vunpack.c.l.b16 %v1204
        %v1304 = vunpack.c.l.b16 %v1218
        %v1305 = vunpack.c.l.b16 %v1232
        %v1306 = vunpack.c.l.b16 %v1246
        %v1307 = vunpack.c.l.b16 %v1260
        %v1308 = vunpack.c.l.b16 %v1274
        %v1309 = vunpack.c.l.b16 %v1288
        %v1310 = vunpack.c.l.b16 %v1302
        %v1311 = vpack.c.b16 %v1304, %v1303
        %v1312 = vpack.c.b16 %v1306, %v1305
        %v1313 = vpack.c.b16 %v1308, %v1307
        %v1314 = vpack.c.b16 %v1310, %v1309
        %1315 = vrot.lane.b32.xlu0 %v1311, 112
        %v1316 = vpop.permute.xlu0 %1315
        %1317 = vrot.lane.b32.xlu0 %v1312, 112
        %v1318 = vpop.permute.xlu0 %1317
        %1319 = vrot.lane.b32.xlu0 %v1313, 112
        %v1320 = vpop.permute.xlu0 %1319
        %1321 = vrot.lane.b32.xlu0 %v1314, 112
        %v1322 = vpop.permute.xlu0 %1321
        %vm1327 = vcmask 1048448
        %1328 = vst.msk [vmem:[#allocation3] sm:$0xff] %vm1327, %v1316
        %1329 = vst.msk [vmem:[#allocation3 + $0x10] sm:$0xff] %vm1327, %v1318
        %1330 = vst.msk [vmem:[#allocation3 + $0x20] sm:$0xff] %vm1327, %v1320
        %1331 = vst.msk [vmem:[#allocation3 + $0x30] sm:$0xff] %vm1327, %v1322
        %v1332 = vld [vmem:[%s1129] sm:$0xe]
        %v1333 = vld [vmem:[%s1129 + $0x4] sm:$0x1]
        %v1334 = vld [vmem:[%s1129 + $0x8] sm:$0xe]
        %v1335 = vld [vmem:[%s1129 + $0xc] sm:$0x1]
        %v1336 = vld [vmem:[%s1129 + $0x10] sm:$0xe]
        %v1337 = vld [vmem:[%s1129 + $0x14] sm:$0x1]
        %v1338 = vld [vmem:[%s1129 + $0x18] sm:$0xe]
        %v1339 = vld [vmem:[%s1129 + $0x1c] sm:$0x1]
        %v1340 = vld [vmem:[%s1129 + $0x20] sm:$0xe]
        %v1341 = vld [vmem:[%s1129 + $0x24] sm:$0x1]
        %v1342 = vld [vmem:[%s1129 + $0x28] sm:$0xe]
        %v1343 = vld [vmem:[%s1129 + $0x2c] sm:$0x1]
        %v1344 = vld [vmem:[%s1129 + $0x30] sm:$0xe]
        %v1345 = vld [vmem:[%s1129 + $0x34] sm:$0x1]
        %v1346 = vld [vmem:[%s1129 + $0x38] sm:$0xe]
        %v1347 = vld [vmem:[%s1129 + $0x3c] sm:$0x1]
        %v1364 = vrot.slane %v1332, 5
        %v1365 = vrot.slane %v1364, 4
        %v1366 = vrot.slane %v1333, 5
        %v1367 = vsel %vm772, %v1365, %v1366
        %v1368 = vrot.slane %v1334, 5
        %v1369 = vrot.slane %v1368, 4
        %v1370 = vrot.slane %v1335, 5
        %v1371 = vsel %vm772, %v1369, %v1370
        %v1372 = vrot.slane %v1336, 5
        %v1373 = vrot.slane %v1372, 4
        %v1374 = vrot.slane %v1337, 5
        %v1375 = vsel %vm772, %v1373, %v1374
        %v1376 = vrot.slane %v1338, 5
        %v1377 = vrot.slane %v1376, 4
        %v1378 = vrot.slane %v1339, 5
        %v1379 = vsel %vm772, %v1377, %v1378
        %v1380 = vrot.slane %v1340, 5
        %v1381 = vrot.slane %v1380, 4
        %v1382 = vrot.slane %v1341, 5
        %v1383 = vsel %vm772, %v1381, %v1382
        %v1384 = vrot.slane %v1342, 5
        %v1385 = vrot.slane %v1384, 4
        %v1386 = vrot.slane %v1343, 5
        %v1387 = vsel %vm772, %v1385, %v1386
        %v1388 = vrot.slane %v1344, 5
        %v1389 = vrot.slane %v1388, 4
        %v1390 = vrot.slane %v1345, 5
        %v1391 = vsel %vm772, %v1389, %v1390
        %v1392 = vrot.slane %v1346, 5
        %v1393 = vrot.slane %v1392, 4
        %v1394 = vrot.slane %v1347, 5
        %v1395 = vsel %vm772, %v1393, %v1394
        %v1396 = vunpack.c.l.b16 %v1367
        %v1397 = vunpack.c.l.b16 %v1371
        %v1398 = vunpack.c.l.b16 %v1375
        %v1399 = vunpack.c.l.b16 %v1379
        %v1400 = vunpack.c.l.b16 %v1383
        %v1401 = vunpack.c.l.b16 %v1387
        %v1402 = vunpack.c.l.b16 %v1391
        %v1403 = vunpack.c.l.b16 %v1395
        %v1404 = vpack.c.b16 %v1397, %v1396
        %v1405 = vpack.c.b16 %v1399, %v1398
        %v1406 = vpack.c.b16 %v1401, %v1400
        %v1407 = vpack.c.b16 %v1403, %v1402
        %1412 = vst.msk [vmem:[#allocation3 + $0x8] sm:$0xff] %vm573, %v1404
        %1413 = vst.msk [vmem:[#allocation3 + $0x18] sm:$0xff] %vm573, %v1405
        %1414 = vst.msk [vmem:[#allocation3 + $0x28] sm:$0xff] %vm573, %v1406
        %1415 = vst.msk [vmem:[#allocation3 + $0x38] sm:$0xff] %vm573, %v1407
        %v1416 = vld [vmem:[#allocation3] sm:$0xff]
        %v1417 = vld [vmem:[#allocation3 + $0x8] sm:$0xff]
        %v1418 = vld [vmem:[#allocation3 + $0x10] sm:$0xff]
        %v1419 = vld [vmem:[#allocation3 + $0x18] sm:$0xff]
        %v1420 = vld [vmem:[#allocation3 + $0x20] sm:$0xff]
        %v1421 = vld [vmem:[#allocation3 + $0x28] sm:$0xff]
        %v1422 = vld [vmem:[#allocation3 + $0x30] sm:$0xff]
        %v1423 = vld [vmem:[#allocation3 + $0x38] sm:$0xff]
        %v1424 = vld [vmem:[#allocation9] sm:$0xf]
        %v1425 = vld [vmem:[#allocation9 + $0x4] sm:$0xf]
        %v1426 = vld [vmem:[#allocation9 + $0x8] sm:$0xf]
        %v1427 = vld [vmem:[#allocation9 + $0xc] sm:$0xf]
        %v1428 = vld [vmem:[#allocation9 + $0x10] sm:$0xf]
        %v1429 = vld [vmem:[#allocation9 + $0x14] sm:$0xf]
        %v1430 = vld [vmem:[#allocation9 + $0x18] sm:$0xf]
        %v1431 = vld [vmem:[#allocation9 + $0x1c] sm:$0xf]
        %v1432 = vld [vmem:[#allocation9 + $0x20] sm:$0xf]
        %v1433 = vld [vmem:[#allocation9 + $0x24] sm:$0xf]
        %v1434 = vld [vmem:[#allocation9 + $0x28] sm:$0xf]
        %v1435 = vld [vmem:[#allocation9 + $0x2c] sm:$0xf]
        %v1436 = vld [vmem:[#allocation9 + $0x30] sm:$0xf]
        %v1437 = vld [vmem:[#allocation9 + $0x34] sm:$0xf]
        %v1438 = vld [vmem:[#allocation9 + $0x38] sm:$0xf]
        %v1439 = vld [vmem:[#allocation9 + $0x3c] sm:$0xf]
        %v1440 = vld [vmem:[#allocation9 + $0x40] sm:$0xf]
        %v1441 = vld [vmem:[#allocation9 + $0x44] sm:$0xf]
        %v1460 = vunpack.c.l.b16 %v1424
        %v1461 = vunpack.c.l.b16 %v1425
        %v1462 = vunpack.c.l.b16 %v1426
        %v1463 = vunpack.c.l.b16 %v1427
        %v1464 = vunpack.c.l.b16 %v1428
        %v1465 = vunpack.c.l.b16 %v1429
        %v1466 = vunpack.c.l.b16 %v1430
        %v1467 = vunpack.c.l.b16 %v1431
        %v1468 = vunpack.c.l.b16 %v1432
        %v1469 = vunpack.c.l.b16 %v1433
        %v1470 = vunpack.c.l.b16 %v1434
        %v1471 = vunpack.c.l.b16 %v1435
        %v1472 = vunpack.c.l.b16 %v1436
        %v1473 = vunpack.c.l.b16 %v1437
        %v1474 = vunpack.c.l.b16 %v1438
        %v1475 = vunpack.c.l.b16 %v1439
        %v1476 = vunpack.c.l.b16 %v1440
        %v1477 = vunpack.c.l.b16 %v1441
        %v1478 = vpack.c.b16 %v1461, %v1460
        %v1479 = vpack.c.b16 %v1463, %v1462
        %v1480 = vpack.c.b16 %v1465, %v1464
        %v1481 = vpack.c.b16 %v1467, %v1466
        %v1482 = vpack.c.b16 %v1469, %v1468
        %v1483 = vpack.c.b16 %v1471, %v1470
        %v1484 = vpack.c.b16 %v1473, %v1472
        %v1485 = vpack.c.b16 %v1475, %v1474
        %v1486 = vpack.c.b16 %v1477, %v1476
        %v1497 = vsel %vm573, %v1417, 0
        %v1500 = vsel %vm573, %v1419, 0
        %v1503 = vsel %vm573, %v1421, 0
        %v1506 = vsel %vm573, %v1423, 0
        %1508 = vmatprep.subr.bf16.mxu0 0
        %1509 = vmatpush1.bf16.msra.mxu0 %v1478
        %1510 = vmatprep.subr.bf16.mxu0 0
        %1511 = vmatpush1.bf16.msra.mxu0 %v1479
        %1512 = vmatprep.subr.bf16.mxu0 0
        %1513 = vmatpush1.bf16.msra.mxu0 %v1480
        %1514 = vmatprep.subr.bf16.mxu0 0
        %1515 = vmatpush1.bf16.msra.mxu0 %v1481
        %1516 = vmatprep.subr.bf16.mxu0 0
        %1517 = vmatpush1.bf16.msra.mxu0 %v1482
        %1518 = vmatprep.subr.bf16.mxu0 0
        %1519 = vmatpush1.bf16.msra.mxu0 %v1483
        %1520 = vmatprep.subr.bf16.mxu0 0
        %1521 = vmatpush1.bf16.msra.mxu0 %v1484
        %1522 = vmatprep.subr.bf16.mxu0 0
        %1523 = vmatpush1.bf16.msra.mxu0 %v1485
        %1524 = vmatprep.subr.bf16.mxu0 0
        %1525 = vmatpush1.bf16.msra.mxu0 %v1486
        %1526 = vmatprep.subr.bf16.mxu0 0
        %1527 = vmatpush1.bf16.msra.mxu0 0
        %1528 = vmatprep.subr.bf16.mxu0 0
        %1529 = vmatpush1.bf16.msra.mxu0 0
        %1530 = vmatprep.subr.bf16.mxu0 0
        %1531 = vmatpush1.bf16.msra.mxu0 0
        %1532 = vmatprep.subr.bf16.mxu0 0
        %1533 = vmatpush1.bf16.msra.mxu0 0
        %1534 = vmatprep.subr.bf16.mxu0 0
        %1535 = vmatpush1.bf16.msra.mxu0 0
        %1536 = vmatprep.subr.bf16.mxu0 0
        %1537 = vmatpush1.bf16.msra.mxu0 0
        %1538 = vmatprep.subr.bf16.mxu0 0
        %1539 = vmatpush1.bf16.msra.mxu0 0
        %1540 = vmatprep.mubr.bf16.mxu0 %v1497
        %1541 = vmatmul.mubr.bf16.gmra.mrb[0].mxu0 %v1416
        %v1542 = vpop.f32.mrb[0].mxu0
        %v1543 = vadd.f32 0.0, %v1542
        %v1544 = vpop.f32.mrb[0].mxu0
        %v1545 = vpop.f32.mrb[0].mxu0
        %v1546 = vadd.f32 0.0, %v1545
        %v1547 = vpop.f32.mrb[0].mxu0
        %1548 = vmatprep.mubr.bf16.mxu0 %v1500
        %1549 = vmatmul.mubr.bf16.gmra.mrb[0].mxu0 %v1418
        %v1550 = vpop.f32.mrb[0].mxu0
        %v1551 = vadd.f32 0.0, %v1550
        %v1552 = vpop.f32.mrb[0].mxu0
        %v1553 = vpop.f32.mrb[0].mxu0
        %v1554 = vadd.f32 0.0, %v1553
        %v1555 = vpop.f32.mrb[0].mxu0
        %1556 = vmatprep.mubr.bf16.mxu0 %v1503
        %1557 = vmatmul.mubr.bf16.gmra.mrb[0].mxu0 %v1420
        %v1558 = vpop.f32.mrb[0].mxu0
        %v1559 = vadd.f32 0.0, %v1558
        %v1560 = vpop.f32.mrb[0].mxu0
        %v1561 = vpop.f32.mrb[0].mxu0
        %v1562 = vadd.f32 0.0, %v1561
        %v1563 = vpop.f32.mrb[0].mxu0
        %1564 = vmatprep.mubr.bf16.mxu0 %v1506
        %1565 = vmatmul.mubr.bf16.gmra.mrb[0].mxu0 %v1422
        %v1566 = vpop.f32.mrb[0].mxu0
        %v1567 = vadd.f32 0.0, %v1566
        %v1568 = vpop.f32.mrb[0].mxu0
        %v1569 = vpop.f32.mrb[0].mxu0
        %v1570 = vadd.f32 0.0, %v1569
        %v1571 = vpop.f32.mrb[0].mxu0
        %1572 = vdwg.mxu0
        %v1573 = vsel %vm573, %v1543, 0.0
        %v1574 = vsel %vm573, %v1546, 0.0
        %v1575 = vadd.f32 %v1573, %v1574
        %v1576 = vsel %vm573, %v1551, 0.0
        %v1577 = vadd.f32 %v1575, %v1576
        %v1578 = vsel %vm573, %v1554, 0.0
        %v1579 = vadd.f32 %v1577, %v1578
        %v1580 = vsel %vm573, %v1559, 0.0
        %v1581 = vadd.f32 %v1579, %v1580
        %v1582 = vsel %vm573, %v1562, 0.0
        %v1583 = vadd.f32 %v1581, %v1582
        %v1584 = vsel %vm573, %v1567, 0.0
        %v1585 = vadd.f32 %v1583, %v1584
        %v1586 = vsel %vm573, %v1570, 0.0
        %v1587 = vadd.f32 %v1585, %v1586
        %v1588 = vrot.slane %v1587, 4
        %v1589 = vadd.f32 %v1587, %v1588
        %v1590 = vrot.slane %v1589, 2
        %v1591 = vadd.f32 %v1589, %v1590
        %v1592 = vrot.slane %v1591, 1
        %v1593 = vadd.f32 %v1591, %v1592
        %v1594 = vrcp.pop 64.0
        %v1595 = vmul.f32 %v1593, %v1594
        %v1596 = vmul.f32 %v1543, %v1543
        %v1597 = vmul.f32 %v1546, %v1546
        %v1598 = vmul.f32 %v1551, %v1551
        %v1599 = vmul.f32 %v1554, %v1554
        %v1600 = vmul.f32 %v1559, %v1559
        %v1601 = vmul.f32 %v1562, %v1562
        %v1602 = vmul.f32 %v1567, %v1567
        %v1603 = vmul.f32 %v1570, %v1570
        %v1604 = vsel %vm573, %v1596, 0.0
        %v1605 = vsel %vm573, %v1597, 0.0
        %v1606 = vadd.f32 %v1604, %v1605
        %v1607 = vsel %vm573, %v1598, 0.0
        %v1608 = vadd.f32 %v1606, %v1607
        %v1609 = vsel %vm573, %v1599, 0.0
        %v1610 = vadd.f32 %v1608, %v1609
        %v1611 = vsel %vm573, %v1600, 0.0
        %v1612 = vadd.f32 %v1610, %v1611
        %v1613 = vsel %vm573, %v1601, 0.0
        %v1614 = vadd.f32 %v1612, %v1613
        %v1615 = vsel %vm573, %v1602, 0.0
        %v1616 = vadd.f32 %v1614, %v1615
        %v1617 = vsel %vm573, %v1603, 0.0
        %v1618 = vadd.f32 %v1616, %v1617
        %v1619 = vrot.slane %v1618, 4
        %v1620 = vadd.f32 %v1618, %v1619
        %v1621 = vrot.slane %v1620, 2
        %v1622 = vadd.f32 %v1620, %v1621
        %v1623 = vrot.slane %v1622, 1
        %v1624 = vadd.f32 %v1622, %v1623
        %v1625 = vmul.f32 %v1624, %v1594
        %v1626 = vmul.f32 %v1595, %v1595
        %v1627 = vsub.f32 %v1625, %v1626
        %v1628 = vmax.f32 %v1627, 0.0
        %v1629 = vsub.f32 %v1543, %v1595
        %v1630 = vsub.f32 %v1546, %v1595
        %v1631 = vsub.f32 %v1551, %v1595
        %v1632 = vsub.f32 %v1554, %v1595
        %v1633 = vsub.f32 %v1559, %v1595
        %v1634 = vsub.f32 %v1562, %v1595
        %v1635 = vsub.f32 %v1567, %v1595
        %v1636 = vsub.f32 %v1570, %v1595
        %v1637 = vadd.f32 %v1628, 1e-05
        %v1638 = vrsqrt.pop %v1637
        %v1639 = vmul.f32 %v1629, %v1638
        %v1640 = vmul.f32 %v1630, %v1638
        %v1641 = vmul.f32 %v1631, %v1638
        %v1642 = vmul.f32 %v1632, %v1638
        %v1643 = vmul.f32 %v1633, %v1638
        %v1644 = vmul.f32 %v1634, %v1638
        %v1645 = vmul.f32 %v1635, %v1638
        %v1646 = vmul.f32 %v1636, %v1638
        %vm1647 = vcmp.gt.f32.partialorder %v1639, 0.0
        %vm1648 = vcmp.gt.f32.partialorder %v1640, 0.0
        %vm1649 = vcmp.gt.f32.partialorder %v1641, 0.0
        %vm1650 = vcmp.gt.f32.partialorder %v1642, 0.0
        %vm1651 = vcmp.gt.f32.partialorder %v1643, 0.0
        %vm1652 = vcmp.gt.f32.partialorder %v1644, 0.0
        %vm1653 = vcmp.gt.f32.partialorder %v1645, 0.0
        %vm1654 = vcmp.gt.f32.partialorder %v1646, 0.0
        %v1655 = vmul.f32 %v1639, 0.2
        %v1656 = vmul.f32 %v1640, 0.2
        %v1657 = vmul.f32 %v1641, 0.2
        %v1658 = vmul.f32 %v1642, 0.2
        %v1659 = vmul.f32 %v1643, 0.2
        %v1660 = vmul.f32 %v1644, 0.2
        %v1661 = vmul.f32 %v1645, 0.2
        %v1662 = vmul.f32 %v1646, 0.2
        %v1663 = vsel %vm1647, %v1639, %v1655
        %v1664 = vsel %vm1648, %v1640, %v1656
        %v1665 = vsel %vm1649, %v1641, %v1657
        %v1666 = vsel %vm1650, %v1642, %v1658
        %v1667 = vsel %vm1651, %v1643, %v1659
        %v1668 = vsel %vm1652, %v1644, %v1660
        %v1669 = vsel %vm1653, %v1645, %v1661
        %v1670 = vsel %vm1654, %v1646, %v1662
        %v1671 = vpack.c.bf16 %v1663, %v1663
        %v1672 = vpack.c.bf16 %v1664, %v1664
        %v1673 = vpack.c.bf16 %v1665, %v1665
        %v1674 = vpack.c.bf16 %v1666, %v1666
        %v1675 = vpack.c.bf16 %v1667, %v1667
        %v1676 = vpack.c.bf16 %v1668, %v1668
        %v1677 = vpack.c.bf16 %v1669, %v1669
        %v1678 = vpack.c.bf16 %v1670, %v1670
        %v1687 = vunpack.c.l.b16 %v1671
        %v1688 = vunpack.c.l.b16 %v1672
        %v1689 = vunpack.c.l.b16 %v1673
        %v1690 = vunpack.c.l.b16 %v1674
        %v1691 = vunpack.c.l.b16 %v1675
        %v1692 = vunpack.c.l.b16 %v1676
        %v1693 = vunpack.c.l.b16 %v1677
        %v1694 = vunpack.c.l.b16 %v1678
        %v1695 = vpack.c.b16 %v1687, %v1687
        %v1696 = vpack.c.b16 %v1688, %v1688
        %v1697 = vpack.c.b16 %v1689, %v1689
        %v1698 = vpack.c.b16 %v1690, %v1690
        %v1699 = vpack.c.b16 %v1691, %v1691
        %v1700 = vpack.c.b16 %v1692, %v1692
        %v1701 = vpack.c.b16 %v1693, %v1693
        %v1702 = vpack.c.b16 %v1694, %v1694
        %v1704 = vshrl.u32 %v1695, 16
        %v1706 = vrot.slane %v1704, 7
        %v1707 = vshll.u32 %v1695, 16
        %v1709 = vor.u32 %v1706, %v1707
        %v1710 = vrot.slane %v1706, 4
        %v1712 = vshrl.u32 %v1696, 16
        %v1714 = vrot.slane %v1712, 7
        %v1715 = vshll.u32 %v1696, 16
        %v1717 = vor.u32 %v1714, %v1715
        %v1718 = vrot.slane %v1714, 4
        %v1720 = vshrl.u32 %v1697, 16
        %v1722 = vrot.slane %v1720, 7
        %v1723 = vshll.u32 %v1697, 16
        %v1725 = vor.u32 %v1722, %v1723
        %v1726 = vrot.slane %v1722, 4
        %v1728 = vshrl.u32 %v1698, 16
        %v1730 = vrot.slane %v1728, 7
        %v1731 = vshll.u32 %v1698, 16
        %v1733 = vor.u32 %v1730, %v1731
        %v1734 = vrot.slane %v1730, 4
        %v1736 = vshrl.u32 %v1699, 16
        %v1738 = vrot.slane %v1736, 7
        %v1739 = vshll.u32 %v1699, 16
        %v1741 = vor.u32 %v1738, %v1739
        %v1742 = vrot.slane %v1738, 4
        %v1744 = vshrl.u32 %v1700, 16
        %v1746 = vrot.slane %v1744, 7
        %v1747 = vshll.u32 %v1700, 16
        %v1749 = vor.u32 %v1746, %v1747
        %v1750 = vrot.slane %v1746, 4
        %v1752 = vshrl.u32 %v1701, 16
        %v1754 = vrot.slane %v1752, 7
        %v1755 = vshll.u32 %v1701, 16
        %v1757 = vor.u32 %v1754, %v1755
        %v1758 = vrot.slane %v1754, 4
        %v1760 = vshrl.u32 %v1702, 16
        %v1762 = vrot.slane %v1760, 7
        %v1763 = vshll.u32 %v1702, 16
        %v1765 = vor.u32 %v1762, %v1763
        %v1766 = vrot.slane %v1762, 4
        %v1783 = vld [vmem:[%s490] sm:$0xf]
        %v1784 = vsel %vm492, %v1709, %v1783
        %1785 = vst [vmem:[%s490] sm:$0xf] %v1784
        %v1786 = vld [vmem:[%s490 + $0x4] sm:$0x1]
        %v1787 = vsel %vm315, %v1710, %v1786
        %1788 = vst [vmem:[%s490 + $0x4] sm:$0x1] %v1787
        %v1789 = vld [vmem:[%s490 + $0x8] sm:$0xf]
        %v1790 = vsel %vm492, %v1717, %v1789
        %1791 = vst [vmem:[%s490 + $0x8] sm:$0xf] %v1790
        %v1792 = vld [vmem:[%s490 + $0xc] sm:$0x1]
        %v1793 = vsel %vm315, %v1718, %v1792
        %1794 = vst [vmem:[%s490 + $0xc] sm:$0x1] %v1793
        %v1795 = vld [vmem:[%s490 + $0x10] sm:$0xf]
        %v1796 = vsel %vm492, %v1725, %v1795
        %1797 = vst [vmem:[%s490 + $0x10] sm:$0xf] %v1796
        %v1798 = vld [vmem:[%s490 + $0x14] sm:$0x1]
        %v1799 = vsel %vm315, %v1726, %v1798
        %1800 = vst [vmem:[%s490 + $0x14] sm:$0x1] %v1799
        %v1801 = vld [vmem:[%s490 + $0x18] sm:$0xf]
        %v1802 = vsel %vm492, %v1733, %v1801
        %1803 = vst [vmem:[%s490 + $0x18] sm:$0xf] %v1802
        %v1804 = vld [vmem:[%s490 + $0x1c] sm:$0x1]
        %v1805 = vsel %vm315, %v1734, %v1804
        %1806 = vst [vmem:[%s490 + $0x1c] sm:$0x1] %v1805
        %v1807 = vld [vmem:[%s490 + $0x20] sm:$0xf]
        %v1808 = vsel %vm492, %v1741, %v1807
        %1809 = vst [vmem:[%s490 + $0x20] sm:$0xf] %v1808
        %v1810 = vld [vmem:[%s490 + $0x24] sm:$0x1]
        %v1811 = vsel %vm315, %v1742, %v1810
        %1812 = vst [vmem:[%s490 + $0x24] sm:$0x1] %v1811
        %v1813 = vld [vmem:[%s490 + $0x28] sm:$0xf]
        %v1814 = vsel %vm492, %v1749, %v1813
        %1815 = vst [vmem:[%s490 + $0x28] sm:$0xf] %v1814
        %v1816 = vld [vmem:[%s490 + $0x2c] sm:$0x1]
        %v1817 = vsel %vm315, %v1750, %v1816
        %1818 = vst [vmem:[%s490 + $0x2c] sm:$0x1] %v1817
        %v1819 = vld [vmem:[%s490 + $0x30] sm:$0xf]
        %v1820 = vsel %vm492, %v1757, %v1819
        %1821 = vst [vmem:[%s490 + $0x30] sm:$0xf] %v1820
        %v1822 = vld [vmem:[%s490 + $0x34] sm:$0x1]
        %v1823 = vsel %vm315, %v1758, %v1822
        %1824 = vst [vmem:[%s490 + $0x34] sm:$0x1] %v1823
        %v1825 = vld [vmem:[%s490 + $0x38] sm:$0xf]
        %v1826 = vsel %vm492, %v1765, %v1825
        %1827 = vst [vmem:[%s490 + $0x38] sm:$0xf] %v1826
        %v1828 = vld [vmem:[%s490 + $0x3c] sm:$0x1]
        %v1829 = vsel %vm315, %v1766, %v1828
        %1830 = vst [vmem:[%s490 + $0x3c] sm:$0x1] %v1829
        %v1831 = vld [vmem:[#allocation2] sm:$0xf]
        %v1832 = vld [vmem:[#allocation2 + $0x8] sm:$0xf]
        %v1833 = vld [vmem:[#allocation2 + $0x10] sm:$0xf]
        %v1834 = vld [vmem:[#allocation2 + $0x18] sm:$0xf]
        %v1835 = vld [vmem:[#allocation2 + $0x20] sm:$0xf]
        %v1836 = vld [vmem:[#allocation2 + $0x28] sm:$0xf]
        %v1837 = vld [vmem:[#allocation2 + $0x30] sm:$0xf]
        %v1838 = vld [vmem:[#allocation2 + $0x38] sm:$0xf]
        %v1847 = vunpack.c.l.b16 %v1831
        %v1848 = vunpack.c.l.b16 %v1832
        %v1849 = vunpack.c.l.b16 %v1833
        %v1850 = vunpack.c.l.b16 %v1834
        %v1851 = vunpack.c.l.b16 %v1835
        %v1852 = vunpack.c.l.b16 %v1836
        %v1853 = vunpack.c.l.b16 %v1837
        %v1854 = vunpack.c.l.b16 %v1838
        %v1855 = vpack.c.b16 %v1848, %v1847
        %v1856 = vpack.c.b16 %v1850, %v1849
        %v1857 = vpack.c.b16 %v1852, %v1851
        %v1858 = vpack.c.b16 %v1854, %v1853
        %1863 = vst.msk [vmem:[#allocation3] sm:$0xff] %vm573, %v1855
        %1864 = vst.msk [vmem:[#allocation3 + $0x10] sm:$0xff] %vm573, %v1856
        %1865 = vst.msk [vmem:[#allocation3 + $0x20] sm:$0xff] %vm573, %v1857
        %1866 = vst.msk [vmem:[#allocation3 + $0x30] sm:$0xff] %vm573, %v1858
        %v1867 = vld [vmem:[#allocation2] sm:$0xf]
        %v1868 = vld [vmem:[#allocation2 + $0x4] sm:$0x1]
        %v1869 = vld [vmem:[#allocation2 + $0x8] sm:$0xf]
        %v1870 = vld [vmem:[#allocation2 + $0xc] sm:$0x1]
        %v1871 = vld [vmem:[#allocation2 + $0x10] sm:$0xf]
        %v1872 = vld [vmem:[#allocation2 + $0x14] sm:$0x1]
        %v1873 = vld [vmem:[#allocation2 + $0x18] sm:$0xf]
        %v1874 = vld [vmem:[#allocation2 + $0x1c] sm:$0x1]
        %v1875 = vld [vmem:[#allocation2 + $0x20] sm:$0xf]
        %v1876 = vld [vmem:[#allocation2 + $0x24] sm:$0x1]
        %v1877 = vld [vmem:[#allocation2 + $0x28] sm:$0xf]
        %v1878 = vld [vmem:[#allocation2 + $0x2c] sm:$0x1]
        %v1879 = vld [vmem:[#allocation2 + $0x30] sm:$0xf]
        %v1880 = vld [vmem:[#allocation2 + $0x34] sm:$0x1]
        %v1881 = vld [vmem:[#allocation2 + $0x38] sm:$0xf]
        %v1882 = vld [vmem:[#allocation2 + $0x3c] sm:$0x1]
        %v1884 = vshrl.u32 %v1867, 16
        %v1886 = vrot.slane %v1884, 4
        %v1887 = vshll.u32 %v1867, 16
        %v1889 = vrot.slane %v1887, 5
        %v1890 = vor.u32 %v1886, %v1889
        %v1891 = vrot.slane %v1890, 4
        %v1893 = vshll.u32 %v1868, 16
        %v1895 = vrot.slane %v1893, 5
        %v1896 = vsel %vm596, %v1891, %v1895
        %v1898 = vshrl.u32 %v1869, 16
        %v1900 = vrot.slane %v1898, 4
        %v1901 = vshll.u32 %v1869, 16
        %v1903 = vrot.slane %v1901, 5
        %v1904 = vor.u32 %v1900, %v1903
        %v1905 = vrot.slane %v1904, 4
        %v1907 = vshll.u32 %v1870, 16
        %v1909 = vrot.slane %v1907, 5
        %v1910 = vsel %vm596, %v1905, %v1909
        %v1912 = vshrl.u32 %v1871, 16
        %v1914 = vrot.slane %v1912, 4
        %v1915 = vshll.u32 %v1871, 16
        %v1917 = vrot.slane %v1915, 5
        %v1918 = vor.u32 %v1914, %v1917
        %v1919 = vrot.slane %v1918, 4
        %v1921 = vshll.u32 %v1872, 16
        %v1923 = vrot.slane %v1921, 5
        %v1924 = vsel %vm596, %v1919, %v1923
        %v1926 = vshrl.u32 %v1873, 16
        %v1928 = vrot.slane %v1926, 4
        %v1929 = vshll.u32 %v1873, 16
        %v1931 = vrot.slane %v1929, 5
        %v1932 = vor.u32 %v1928, %v1931
        %v1933 = vrot.slane %v1932, 4
        %v1935 = vshll.u32 %v1874, 16
        %v1937 = vrot.slane %v1935, 5
        %v1938 = vsel %vm596, %v1933, %v1937
        %v1940 = vshrl.u32 %v1875, 16
        %v1942 = vrot.slane %v1940, 4
        %v1943 = vshll.u32 %v1875, 16
        %v1945 = vrot.slane %v1943, 5
        %v1946 = vor.u32 %v1942, %v1945
        %v1947 = vrot.slane %v1946, 4
        %v1949 = vshll.u32 %v1876, 16
        %v1951 = vrot.slane %v1949, 5
        %v1952 = vsel %vm596, %v1947, %v1951
        %v1954 = vshrl.u32 %v1877, 16
        %v1956 = vrot.slane %v1954, 4
        %v1957 = vshll.u32 %v1877, 16
        %v1959 = vrot.slane %v1957, 5
        %v1960 = vor.u32 %v1956, %v1959
        %v1961 = vrot.slane %v1960, 4
        %v1963 = vshll.u32 %v1878, 16
        %v1965 = vrot.slane %v1963, 5
        %v1966 = vsel %vm596, %v1961, %v1965
        %v1968 = vshrl.u32 %v1879, 16
        %v1970 = vrot.slane %v1968, 4
        %v1971 = vshll.u32 %v1879, 16
        %v1973 = vrot.slane %v1971, 5
        %v1974 = vor.u32 %v1970, %v1973
        %v1975 = vrot.slane %v1974, 4
        %v1977 = vshll.u32 %v1880, 16
        %v1979 = vrot.slane %v1977, 5
        %v1980 = vsel %vm596, %v1975, %v1979
        %v1982 = vshrl.u32 %v1881, 16
        %v1984 = vrot.slane %v1982, 4
        %v1985 = vshll.u32 %v1881, 16
        %v1987 = vrot.slane %v1985, 5
        %v1988 = vor.u32 %v1984, %v1987
        %v1989 = vrot.slane %v1988, 4
        %v1991 = vshll.u32 %v1882, 16
        %v1993 = vrot.slane %v1991, 5
        %v1994 = vsel %vm596, %v1989, %v1993
        %v1995 = vunpack.c.l.b16 %v1896
        %v1996 = vunpack.c.l.b16 %v1910
        %v1997 = vunpack.c.l.b16 %v1924
        %v1998 = vunpack.c.l.b16 %v1938
        %v1999 = vunpack.c.l.b16 %v1952
        %v2000 = vunpack.c.l.b16 %v1966
        %v2001 = vunpack.c.l.b16 %v1980
        %v2002 = vunpack.c.l.b16 %v1994
        %v2003 = vpack.c.b16 %v1996, %v1995
        %v2004 = vpack.c.b16 %v1998, %v1997
        %v2005 = vpack.c.b16 %v2000, %v1999
        %v2006 = vpack.c.b16 %v2002, %v2001
        %2007 = vrot.lane.b32.xlu0 %v2003, 16
        %v2008 = vpop.permute.xlu0 %2007
        %2009 = vrot.lane.b32.xlu0 %v2004, 16
        %v2010 = vpop.permute.xlu0 %2009
        %2011 = vrot.lane.b32.xlu0 %v2005, 16
        %v2012 = vpop.permute.xlu0 %2011
        %2013 = vrot.lane.b32.xlu0 %v2006, 16
        %v2014 = vpop.permute.xlu0 %2013
        %2019 = vst.msk [vmem:[#allocation3] sm:$0xff] %vm733, %v2008
        %2020 = vst.msk [vmem:[#allocation3 + $0x10] sm:$0xff] %vm733, %v2010
        %2021 = vst.msk [vmem:[#allocation3 + $0x20] sm:$0xff] %vm733, %v2012
        %2022 = vst.msk [vmem:[#allocation3 + $0x30] sm:$0xff] %vm733, %v2014
        %v2023 = vld [vmem:[#allocation2] sm:$0xe]
        %v2024 = vld [vmem:[#allocation2 + $0x4] sm:$0x1]
        %v2025 = vld [vmem:[#allocation2 + $0x8] sm:$0xe]
        %v2026 = vld [vmem:[#allocation2 + $0xc] sm:$0x1]
        %v2027 = vld [vmem:[#allocation2 + $0x10] sm:$0xe]
        %v2028 = vld [vmem:[#allocation2 + $0x14] sm:$0x1]
        %v2029 = vld [vmem:[#allocation2 + $0x18] sm:$0xe]
        %v2030 = vld [vmem:[#allocation2 + $0x1c] sm:$0x1]
        %v2031 = vld [vmem:[#allocation2 + $0x20] sm:$0xe]
        %v2032 = vld [vmem:[#allocation2 + $0x24] sm:$0x1]
        %v2033 = vld [vmem:[#allocation2 + $0x28] sm:$0xe]
        %v2034 = vld [vmem:[#allocation2 + $0x2c] sm:$0x1]
        %v2035 = vld [vmem:[#allocation2 + $0x30] sm:$0xe]
        %v2036 = vld [vmem:[#allocation2 + $0x34] sm:$0x1]
        %v2037 = vld [vmem:[#allocation2 + $0x38] sm:$0xe]
        %v2038 = vld [vmem:[#allocation2 + $0x3c] sm:$0x1]
        %v2055 = vrot.slane %v2023, 5
        %v2056 = vrot.slane %v2055, 4
        %v2057 = vrot.slane %v2024, 5
        %v2058 = vsel %vm772, %v2056, %v2057
        %v2059 = vrot.slane %v2025, 5
        %v2060 = vrot.slane %v2059, 4
        %v2061 = vrot.slane %v2026, 5
        %v2062 = vsel %vm772, %v2060, %v2061
        %v2063 = vrot.slane %v2027, 5
        %v2064 = vrot.slane %v2063, 4
        %v2065 = vrot.slane %v2028, 5
        %v2066 = vsel %vm772, %v2064, %v2065
        %v2067 = vrot.slane %v2029, 5
        %v2068 = vrot.slane %v2067, 4
        %v2069 = vrot.slane %v2030, 5
        %v2070 = vsel %vm772, %v2068, %v2069
        %v2071 = vrot.slane %v2031, 5
        %v2072 = vrot.slane %v2071, 4
        %v2073 = vrot.slane %v2032, 5
        %v2074 = vsel %vm772, %v2072, %v2073
        %v2075 = vrot.slane %v2033, 5
        %v2076 = vrot.slane %v2075, 4
        %v2077 = vrot.slane %v2034, 5
        %v2078 = vsel %vm772, %v2076, %v2077
        %v2079 = vrot.slane %v2035, 5
        %v2080 = vrot.slane %v2079, 4
        %v2081 = vrot.slane %v2036, 5
        %v2082 = vsel %vm772, %v2080, %v2081
        %v2083 = vrot.slane %v2037, 5
        %v2084 = vrot.slane %v2083, 4
        %v2085 = vrot.slane %v2038, 5
        %v2086 = vsel %vm772, %v2084, %v2085
        %v2087 = vunpack.c.l.b16 %v2058
        %v2088 = vunpack.c.l.b16 %v2062
        %v2089 = vunpack.c.l.b16 %v2066
        %v2090 = vunpack.c.l.b16 %v2070
        %v2091 = vunpack.c.l.b16 %v2074
        %v2092 = vunpack.c.l.b16 %v2078
        %v2093 = vunpack.c.l.b16 %v2082
        %v2094 = vunpack.c.l.b16 %v2086
        %v2095 = vpack.c.b16 %v2088, %v2087
        %v2096 = vpack.c.b16 %v2090, %v2089
        %v2097 = vpack.c.b16 %v2092, %v2091
        %v2098 = vpack.c.b16 %v2094, %v2093
        %2099 = vrot.lane.b32.xlu0 %v2095, 32
        %v2100 = vpop.permute.xlu0 %2099
        %2101 = vrot.lane.b32.xlu0 %v2096, 32
        %v2102 = vpop.permute.xlu0 %2101
        %2103 = vrot.lane.b32.xlu0 %v2097, 32
        %v2104 = vpop.permute.xlu0 %2103
        %2105 = vrot.lane.b32.xlu0 %v2098, 32
        %v2106 = vpop.permute.xlu0 %2105
        %2111 = vst.msk [vmem:[#allocation3] sm:$0xff] %vm829, %v2100
        %2112 = vst.msk [vmem:[#allocation3 + $0x10] sm:$0xff] %vm829, %v2102
        %2113 = vst.msk [vmem:[#allocation3 + $0x20] sm:$0xff] %vm829, %v2104
        %2114 = vst.msk [vmem:[#allocation3 + $0x30] sm:$0xff] %vm829, %v2106
        %v2115 = vld [vmem:[%s490] sm:$0xf]
        %v2116 = vld [vmem:[%s490 + $0x8] sm:$0xf]
        %v2117 = vld [vmem:[%s490 + $0x10] sm:$0xf]
        %v2118 = vld [vmem:[%s490 + $0x18] sm:$0xf]
        %v2119 = vld [vmem:[%s490 + $0x20] sm:$0xf]
        %v2120 = vld [vmem:[%s490 + $0x28] sm:$0xf]
        %v2121 = vld [vmem:[%s490 + $0x30] sm:$0xf]
        %v2122 = vld [vmem:[%s490 + $0x38] sm:$0xf]
        %v2131 = vunpack.c.l.b16 %v2115
        %v2132 = vunpack.c.l.b16 %v2116
        %v2133 = vunpack.c.l.b16 %v2117
        %v2134 = vunpack.c.l.b16 %v2118
        %v2135 = vunpack.c.l.b16 %v2119
        %v2136 = vunpack.c.l.b16 %v2120
        %v2137 = vunpack.c.l.b16 %v2121
        %v2138 = vunpack.c.l.b16 %v2122
        %v2139 = vpack.c.b16 %v2132, %v2131
        %v2140 = vpack.c.b16 %v2134, %v2133
        %v2141 = vpack.c.b16 %v2136, %v2135
        %v2142 = vpack.c.b16 %v2138, %v2137
        %2143 = vrot.lane.b32.xlu0 %v2139, 48
        %v2144 = vpop.permute.xlu0 %2143
        %2145 = vrot.lane.b32.xlu0 %v2140, 48
        %v2146 = vpop.permute.xlu0 %2145
        %2147 = vrot.lane.b32.xlu0 %v2141, 48
        %v2148 = vpop.permute.xlu0 %2147
        %2149 = vrot.lane.b32.xlu0 %v2142, 48
        %v2150 = vpop.permute.xlu0 %2149
        %2155 = vst.msk [vmem:[#allocation3] sm:$0xff] %vm874, %v2144
        %2156 = vst.msk [vmem:[#allocation3 + $0x10] sm:$0xff] %vm874, %v2146
        %2157 = vst.msk [vmem:[#allocation3 + $0x20] sm:$0xff] %vm874, %v2148
        %2158 = vst.msk [vmem:[#allocation3 + $0x30] sm:$0xff] %vm874, %v2150
        %v2159 = vld [vmem:[%s490] sm:$0xf]
        %v2160 = vld [vmem:[%s490 + $0x4] sm:$0x1]
        %v2161 = vld [vmem:[%s490 + $0x8] sm:$0xf]
        %v2162 = vld [vmem:[%s490 + $0xc] sm:$0x1]
        %v2163 = vld [vmem:[%s490 + $0x10] sm:$0xf]
        %v2164 = vld [vmem:[%s490 + $0x14] sm:$0x1]
        %v2165 = vld [vmem:[%s490 + $0x18] sm:$0xf]
        %v2166 = vld [vmem:[%s490 + $0x1c] sm:$0x1]
        %v2167 = vld [vmem:[%s490 + $0x20] sm:$0xf]
        %v2168 = vld [vmem:[%s490 + $0x24] sm:$0x1]
        %v2169 = vld [vmem:[%s490 + $0x28] sm:$0xf]
        %v2170 = vld [vmem:[%s490 + $0x2c] sm:$0x1]
        %v2171 = vld [vmem:[%s490 + $0x30] sm:$0xf]
        %v2172 = vld [vmem:[%s490 + $0x34] sm:$0x1]
        %v2173 = vld [vmem:[%s490 + $0x38] sm:$0xf]
        %v2174 = vld [vmem:[%s490 + $0x3c] sm:$0x1]
        %v2176 = vshrl.u32 %v2159, 16
        %v2178 = vrot.slane %v2176, 4
        %v2179 = vshll.u32 %v2159, 16
        %v2181 = vrot.slane %v2179, 5
        %v2182 = vor.u32 %v2178, %v2181
        %v2183 = vrot.slane %v2182, 4
        %v2185 = vshll.u32 %v2160, 16
        %v2187 = vrot.slane %v2185, 5
        %v2188 = vsel %vm596, %v2183, %v2187
        %v2190 = vshrl.u32 %v2161, 16
        %v2192 = vrot.slane %v2190, 4
        %v2193 = vshll.u32 %v2161, 16
        %v2195 = vrot.slane %v2193, 5
        %v2196 = vor.u32 %v2192, %v2195
        %v2197 = vrot.slane %v2196, 4
        %v2199 = vshll.u32 %v2162, 16
        %v2201 = vrot.slane %v2199, 5
        %v2202 = vsel %vm596, %v2197, %v2201
        %v2204 = vshrl.u32 %v2163, 16
        %v2206 = vrot.slane %v2204, 4
        %v2207 = vshll.u32 %v2163, 16
        %v2209 = vrot.slane %v2207, 5
        %v2210 = vor.u32 %v2206, %v2209
        %v2211 = vrot.slane %v2210, 4
        %v2213 = vshll.u32 %v2164, 16
        %v2215 = vrot.slane %v2213, 5
        %v2216 = vsel %vm596, %v2211, %v2215
        %v2218 = vshrl.u32 %v2165, 16
        %v2220 = vrot.slane %v2218, 4
        %v2221 = vshll.u32 %v2165, 16
        %v2223 = vrot.slane %v2221, 5
        %v2224 = vor.u32 %v2220, %v2223
        %v2225 = vrot.slane %v2224, 4
        %v2227 = vshll.u32 %v2166, 16
        %v2229 = vrot.slane %v2227, 5
        %v2230 = vsel %vm596, %v2225, %v2229
        %v2232 = vshrl.u32 %v2167, 16
        %v2234 = vrot.slane %v2232, 4
        %v2235 = vshll.u32 %v2167, 16
        %v2237 = vrot.slane %v2235, 5
        %v2238 = vor.u32 %v2234, %v2237
        %v2239 = vrot.slane %v2238, 4
        %v2241 = vshll.u32 %v2168, 16
        %v2243 = vrot.slane %v2241, 5
        %v2244 = vsel %vm596, %v2239, %v2243
        %v2246 = vshrl.u32 %v2169, 16
        %v2248 = vrot.slane %v2246, 4
        %v2249 = vshll.u32 %v2169, 16
        %v2251 = vrot.slane %v2249, 5
        %v2252 = vor.u32 %v2248, %v2251
        %v2253 = vrot.slane %v2252, 4
        %v2255 = vshll.u32 %v2170, 16
        %v2257 = vrot.slane %v2255, 5
        %v2258 = vsel %vm596, %v2253, %v2257
        %v2260 = vshrl.u32 %v2171, 16
        %v2262 = vrot.slane %v2260, 4
        %v2263 = vshll.u32 %v2171, 16
        %v2265 = vrot.slane %v2263, 5
        %v2266 = vor.u32 %v2262, %v2265
        %v2267 = vrot.slane %v2266, 4
        %v2269 = vshll.u32 %v2172, 16
        %v2271 = vrot.slane %v2269, 5
        %v2272 = vsel %vm596, %v2267, %v2271
        %v2274 = vshrl.u32 %v2173, 16
        %v2276 = vrot.slane %v2274, 4
        %v2277 = vshll.u32 %v2173, 16
        %v2279 = vrot.slane %v2277, 5
        %v2280 = vor.u32 %v2276, %v2279
        %v2281 = vrot.slane %v2280, 4
        %v2283 = vshll.u32 %v2174, 16
        %v2285 = vrot.slane %v2283, 5
        %v2286 = vsel %vm596, %v2281, %v2285
        %v2287 = vunpack.c.l.b16 %v2188
        %v2288 = vunpack.c.l.b16 %v2202
        %v2289 = vunpack.c.l.b16 %v2216
        %v2290 = vunpack.c.l.b16 %v2230
        %v2291 = vunpack.c.l.b16 %v2244
        %v2292 = vunpack.c.l.b16 %v2258
        %v2293 = vunpack.c.l.b16 %v2272
        %v2294 = vunpack.c.l.b16 %v2286
        %v2295 = vpack.c.b16 %v2288, %v2287
        %v2296 = vpack.c.b16 %v2290, %v2289
        %v2297 = vpack.c.b16 %v2292, %v2291
        %v2298 = vpack.c.b16 %v2294, %v2293
        %2299 = vrot.lane.b32.xlu0 %v2295, 64
        %v2300 = vpop.permute.xlu0 %2299
        %2301 = vrot.lane.b32.xlu0 %v2296, 64
        %v2302 = vpop.permute.xlu0 %2301
        %2303 = vrot.lane.b32.xlu0 %v2297, 64
        %v2304 = vpop.permute.xlu0 %2303
        %2305 = vrot.lane.b32.xlu0 %v2298, 64
        %v2306 = vpop.permute.xlu0 %2305
        %2311 = vst.msk [vmem:[#allocation3] sm:$0xff] %vm1031, %v2300
        %2312 = vst.msk [vmem:[#allocation3 + $0x10] sm:$0xff] %vm1031, %v2302
        %2313 = vst.msk [vmem:[#allocation3 + $0x20] sm:$0xff] %vm1031, %v2304
        %2314 = vst.msk [vmem:[#allocation3 + $0x30] sm:$0xff] %vm1031, %v2306
        %v2315 = vld [vmem:[%s490] sm:$0xe]
        %v2316 = vld [vmem:[%s490 + $0x4] sm:$0x1]
        %v2317 = vld [vmem:[%s490 + $0x8] sm:$0xe]
        %v2318 = vld [vmem:[%s490 + $0xc] sm:$0x1]
        %v2319 = vld [vmem:[%s490 + $0x10] sm:$0xe]
        %v2320 = vld [vmem:[%s490 + $0x14] sm:$0x1]
        %v2321 = vld [vmem:[%s490 + $0x18] sm:$0xe]
        %v2322 = vld [vmem:[%s490 + $0x1c] sm:$0x1]
        %v2323 = vld [vmem:[%s490 + $0x20] sm:$0xe]
        %v2324 = vld [vmem:[%s490 + $0x24] sm:$0x1]
        %v2325 = vld [vmem:[%s490 + $0x28] sm:$0xe]
        %v2326 = vld [vmem:[%s490 + $0x2c] sm:$0x1]
        %v2327 = vld [vmem:[%s490 + $0x30] sm:$0xe]
        %v2328 = vld [vmem:[%s490 + $0x34] sm:$0x1]
        %v2329 = vld [vmem:[%s490 + $0x38] sm:$0xe]
        %v2330 = vld [vmem:[%s490 + $0x3c] sm:$0x1]
        %v2347 = vrot.slane %v2315, 5
        %v2348 = vrot.slane %v2347, 4
        %v2349 = vrot.slane %v2316, 5
        %v2350 = vsel %vm772, %v2348, %v2349
        %v2351 = vrot.slane %v2317, 5
        %v2352 = vrot.slane %v2351, 4
        %v2353 = vrot.slane %v2318, 5
        %v2354 = vsel %vm772, %v2352, %v2353
        %v2355 = vrot.slane %v2319, 5
        %v2356 = vrot.slane %v2355, 4
        %v2357 = vrot.slane %v2320, 5
        %v2358 = vsel %vm772, %v2356, %v2357
        %v2359 = vrot.slane %v2321, 5
        %v2360 = vrot.slane %v2359, 4
        %v2361 = vrot.slane %v2322, 5
        %v2362 = vsel %vm772, %v2360, %v2361
        %v2363 = vrot.slane %v2323, 5
        %v2364 = vrot.slane %v2363, 4
        %v2365 = vrot.slane %v2324, 5
        %v2366 = vsel %vm772, %v2364, %v2365
        %v2367 = vrot.slane %v2325, 5
        %v2368 = vrot.slane %v2367, 4
        %v2369 = vrot.slane %v2326, 5
        %v2370 = vsel %vm772, %v2368, %v2369
        %v2371 = vrot.slane %v2327, 5
        %v2372 = vrot.slane %v2371, 4
        %v2373 = vrot.slane %v2328, 5
        %v2374 = vsel %vm772, %v2372, %v2373
        %v2375 = vrot.slane %v2329, 5
        %v2376 = vrot.slane %v2375, 4
        %v2377 = vrot.slane %v2330, 5
        %v2378 = vsel %vm772, %v2376, %v2377
        %v2379 = vunpack.c.l.b16 %v2350
        %v2380 = vunpack.c.l.b16 %v2354
        %v2381 = vunpack.c.l.b16 %v2358
        %v2382 = vunpack.c.l.b16 %v2362
        %v2383 = vunpack.c.l.b16 %v2366
        %v2384 = vunpack.c.l.b16 %v2370
        %v2385 = vunpack.c.l.b16 %v2374
        %v2386 = vunpack.c.l.b16 %v2378
        %v2387 = vpack.c.b16 %v2380, %v2379
        %v2388 = vpack.c.b16 %v2382, %v2381
        %v2389 = vpack.c.b16 %v2384, %v2383
        %v2390 = vpack.c.b16 %v2386, %v2385
        %2391 = vrot.lane.b32.xlu0 %v2387, 80
        %v2392 = vpop.permute.xlu0 %2391
        %2393 = vrot.lane.b32.xlu0 %v2388, 80
        %v2394 = vpop.permute.xlu0 %2393
        %2395 = vrot.lane.b32.xlu0 %v2389, 80
        %v2396 = vpop.permute.xlu0 %2395
        %2397 = vrot.lane.b32.xlu0 %v2390, 80
        %v2398 = vpop.permute.xlu0 %2397
        %2403 = vst.msk [vmem:[#allocation3] sm:$0xff] %vm1124, %v2392
        %2404 = vst.msk [vmem:[#allocation3 + $0x10] sm:$0xff] %vm1124, %v2394
        %2405 = vst.msk [vmem:[#allocation3 + $0x20] sm:$0xff] %vm1124, %v2396
        %2406 = vst.msk [vmem:[#allocation3 + $0x30] sm:$0xff] %vm1124, %v2398
        %v2407 = vld [vmem:[%s1129] sm:$0xf]
        %v2408 = vld [vmem:[%s1129 + $0x8] sm:$0xf]
        %v2409 = vld [vmem:[%s1129 + $0x10] sm:$0xf]
        %v2410 = vld [vmem:[%s1129 + $0x18] sm:$0xf]
        %v2411 = vld [vmem:[%s1129 + $0x20] sm:$0xf]
        %v2412 = vld [vmem:[%s1129 + $0x28] sm:$0xf]
        %v2413 = vld [vmem:[%s1129 + $0x30] sm:$0xf]
        %v2414 = vld [vmem:[%s1129 + $0x38] sm:$0xf]
        %v2423 = vunpack.c.l.b16 %v2407
        %v2424 = vunpack.c.l.b16 %v2408
        %v2425 = vunpack.c.l.b16 %v2409
        %v2426 = vunpack.c.l.b16 %v2410
        %v2427 = vunpack.c.l.b16 %v2411
        %v2428 = vunpack.c.l.b16 %v2412
        %v2429 = vunpack.c.l.b16 %v2413
        %v2430 = vunpack.c.l.b16 %v2414
        %v2431 = vpack.c.b16 %v2424, %v2423
        %v2432 = vpack.c.b16 %v2426, %v2425
        %v2433 = vpack.c.b16 %v2428, %v2427
        %v2434 = vpack.c.b16 %v2430, %v2429
        %2435 = vrot.lane.b32.xlu0 %v2431, 96
        %v2436 = vpop.permute.xlu0 %2435
        %2437 = vrot.lane.b32.xlu0 %v2432, 96
        %v2438 = vpop.permute.xlu0 %2437
        %2439 = vrot.lane.b32.xlu0 %v2433, 96
        %v2440 = vpop.permute.xlu0 %2439
        %2441 = vrot.lane.b32.xlu0 %v2434, 96
        %v2442 = vpop.permute.xlu0 %2441
        %2447 = vst.msk [vmem:[#allocation3] sm:$0xff] %vm1170, %v2436
        %2448 = vst.msk [vmem:[#allocation3 + $0x10] sm:$0xff] %vm1170, %v2438
        %2449 = vst.msk [vmem:[#allocation3 + $0x20] sm:$0xff] %vm1170, %v2440
        %2450 = vst.msk [vmem:[#allocation3 + $0x30] sm:$0xff] %vm1170, %v2442
        %v2451 = vld [vmem:[%s1129] sm:$0xf]
        %v2452 = vld [vmem:[%s1129 + $0x4] sm:$0x1]
        %v2453 = vld [vmem:[%s1129 + $0x8] sm:$0xf]
        %v2454 = vld [vmem:[%s1129 + $0xc] sm:$0x1]
        %v2455 = vld [vmem:[%s1129 + $0x10] sm:$0xf]
        %v2456 = vld [vmem:[%s1129 + $0x14] sm:$0x1]
        %v2457 = vld [vmem:[%s1129 + $0x18] sm:$0xf]
        %v2458 = vld [vmem:[%s1129 + $0x1c] sm:$0x1]
        %v2459 = vld [vmem:[%s1129 + $0x20] sm:$0xf]
        %v2460 = vld [vmem:[%s1129 + $0x24] sm:$0x1]
        %v2461 = vld [vmem:[%s1129 + $0x28] sm:$0xf]
        %v2462 = vld [vmem:[%s1129 + $0x2c] sm:$0x1]
        %v2463 = vld [vmem:[%s1129 + $0x30] sm:$0xf]
        %v2464 = vld [vmem:[%s1129 + $0x34] sm:$0x1]
        %v2465 = vld [vmem:[%s1129 + $0x38] sm:$0xf]
        %v2466 = vld [vmem:[%s1129 + $0x3c] sm:$0x1]
        %v2468 = vshrl.u32 %v2451, 16
        %v2470 = vrot.slane %v2468, 4
        %v2471 = vshll.u32 %v2451, 16
        %v2473 = vrot.slane %v2471, 5
        %v2474 = vor.u32 %v2470, %v2473
        %v2475 = vrot.slane %v2474, 4
        %v2477 = vshll.u32 %v2452, 16
        %v2479 = vrot.slane %v2477, 5
        %v2480 = vsel %vm596, %v2475, %v2479
        %v2482 = vshrl.u32 %v2453, 16
        %v2484 = vrot.slane %v2482, 4
        %v2485 = vshll.u32 %v2453, 16
        %v2487 = vrot.slane %v2485, 5
        %v2488 = vor.u32 %v2484, %v2487
        %v2489 = vrot.slane %v2488, 4
        %v2491 = vshll.u32 %v2454, 16
        %v2493 = vrot.slane %v2491, 5
        %v2494 = vsel %vm596, %v2489, %v2493
        %v2496 = vshrl.u32 %v2455, 16
        %v2498 = vrot.slane %v2496, 4
        %v2499 = vshll.u32 %v2455, 16
        %v2501 = vrot.slane %v2499, 5
        %v2502 = vor.u32 %v2498, %v2501
        %v2503 = vrot.slane %v2502, 4
        %v2505 = vshll.u32 %v2456, 16
        %v2507 = vrot.slane %v2505, 5
        %v2508 = vsel %vm596, %v2503, %v2507
        %v2510 = vshrl.u32 %v2457, 16
        %v2512 = vrot.slane %v2510, 4
        %v2513 = vshll.u32 %v2457, 16
        %v2515 = vrot.slane %v2513, 5
        %v2516 = vor.u32 %v2512, %v2515
        %v2517 = vrot.slane %v2516, 4
        %v2519 = vshll.u32 %v2458, 16
        %v2521 = vrot.slane %v2519, 5
        %v2522 = vsel %vm596, %v2517, %v2521
        %v2524 = vshrl.u32 %v2459, 16
        %v2526 = vrot.slane %v2524, 4
        %v2527 = vshll.u32 %v2459, 16
        %v2529 = vrot.slane %v2527, 5
        %v2530 = vor.u32 %v2526, %v2529
        %v2531 = vrot.slane %v2530, 4
        %v2533 = vshll.u32 %v2460, 16
        %v2535 = vrot.slane %v2533, 5
        %v2536 = vsel %vm596, %v2531, %v2535
        %v2538 = vshrl.u32 %v2461, 16
        %v2540 = vrot.slane %v2538, 4
        %v2541 = vshll.u32 %v2461, 16
        %v2543 = vrot.slane %v2541, 5
        %v2544 = vor.u32 %v2540, %v2543
        %v2545 = vrot.slane %v2544, 4
        %v2547 = vshll.u32 %v2462, 16
        %v2549 = vrot.slane %v2547, 5
        %v2550 = vsel %vm596, %v2545, %v2549
        %v2552 = vshrl.u32 %v2463, 16
        %v2554 = vrot.slane %v2552, 4
        %v2555 = vshll.u32 %v2463, 16
        %v2557 = vrot.slane %v2555, 5
        %v2558 = vor.u32 %v2554, %v2557
        %v2559 = vrot.slane %v2558, 4
        %v2561 = vshll.u32 %v2464, 16
        %v2563 = vrot.slane %v2561, 5
        %v2564 = vsel %vm596, %v2559, %v2563
        %v2566 = vshrl.u32 %v2465, 16
        %v2568 = vrot.slane %v2566, 4
        %v2569 = vshll.u32 %v2465, 16
        %v2571 = vrot.slane %v2569, 5
        %v2572 = vor.u32 %v2568, %v2571
        %v2573 = vrot.slane %v2572, 4
        %v2575 = vshll.u32 %v2466, 16
        %v2577 = vrot.slane %v2575, 5
        %v2578 = vsel %vm596, %v2573, %v2577
        %v2579 = vunpack.c.l.b16 %v2480
        %v2580 = vunpack.c.l.b16 %v2494
        %v2581 = vunpack.c.l.b16 %v2508
        %v2582 = vunpack.c.l.b16 %v2522
        %v2583 = vunpack.c.l.b16 %v2536
        %v2584 = vunpack.c.l.b16 %v2550
        %v2585 = vunpack.c.l.b16 %v2564
        %v2586 = vunpack.c.l.b16 %v2578
        %v2587 = vpack.c.b16 %v2580, %v2579
        %v2588 = vpack.c.b16 %v2582, %v2581
        %v2589 = vpack.c.b16 %v2584, %v2583
        %v2590 = vpack.c.b16 %v2586, %v2585
        %2591 = vrot.lane.b32.xlu0 %v2587, 112
        %v2592 = vpop.permute.xlu0 %2591
        %2593 = vrot.lane.b32.xlu0 %v2588, 112
        %v2594 = vpop.permute.xlu0 %2593
        %2595 = vrot.lane.b32.xlu0 %v2589, 112
        %v2596 = vpop.permute.xlu0 %2595
        %2597 = vrot.lane.b32.xlu0 %v2590, 112
        %v2598 = vpop.permute.xlu0 %2597
        %2603 = vst.msk [vmem:[#allocation3] sm:$0xff] %vm1327, %v2592
        %2604 = vst.msk [vmem:[#allocation3 + $0x10] sm:$0xff] %vm1327, %v2594
        %2605 = vst.msk [vmem:[#allocation3 + $0x20] sm:$0xff] %vm1327, %v2596
        %2606 = vst.msk [vmem:[#allocation3 + $0x30] sm:$0xff] %vm1327, %v2598
        %v2607 = vld [vmem:[%s1129] sm:$0xe]
        %v2608 = vld [vmem:[%s1129 + $0x4] sm:$0x1]
        %v2609 = vld [vmem:[%s1129 + $0x8] sm:$0xe]
        %v2610 = vld [vmem:[%s1129 + $0xc] sm:$0x1]
        %v2611 = vld [vmem:[%s1129 + $0x10] sm:$0xe]
        %v2612 = vld [vmem:[%s1129 + $0x14] sm:$0x1]
        %v2613 = vld [vmem:[%s1129 + $0x18] sm:$0xe]
        %v2614 = vld [vmem:[%s1129 + $0x1c] sm:$0x1]
        %v2615 = vld [vmem:[%s1129 + $0x20] sm:$0xe]
        %v2616 = vld [vmem:[%s1129 + $0x24] sm:$0x1]
        %v2617 = vld [vmem:[%s1129 + $0x28] sm:$0xe]
        %v2618 = vld [vmem:[%s1129 + $0x2c] sm:$0x1]
        %v2619 = vld [vmem:[%s1129 + $0x30] sm:$0xe]
        %v2620 = vld [vmem:[%s1129 + $0x34] sm:$0x1]
        %v2621 = vld [vmem:[%s1129 + $0x38] sm:$0xe]
        %v2622 = vld [vmem:[%s1129 + $0x3c] sm:$0x1]
        %v2639 = vrot.slane %v2607, 5
        %v2640 = vrot.slane %v2639, 4
        %v2641 = vrot.slane %v2608, 5
        %v2642 = vsel %vm772, %v2640, %v2641
        %v2643 = vrot.slane %v2609, 5
        %v2644 = vrot.slane %v2643, 4
        %v2645 = vrot.slane %v2610, 5
        %v2646 = vsel %vm772, %v2644, %v2645
        %v2647 = vrot.slane %v2611, 5
        %v2648 = vrot.slane %v2647, 4
        %v2649 = vrot.slane %v2612, 5
        %v2650 = vsel %vm772, %v2648, %v2649
        %v2651 = vrot.slane %v2613, 5
        %v2652 = vrot.slane %v2651, 4
        %v2653 = vrot.slane %v2614, 5
        %v2654 = vsel %vm772, %v2652, %v2653
        %v2655 = vrot.slane %v2615, 5
        %v2656 = vrot.slane %v2655, 4
        %v2657 = vrot.slane %v2616, 5
        %v2658 = vsel %vm772, %v2656, %v2657
        %v2659 = vrot.slane %v2617, 5
        %v2660 = vrot.slane %v2659, 4
        %v2661 = vrot.slane %v2618, 5
        %v2662 = vsel %vm772, %v2660, %v2661
        %v2663 = vrot.slane %v2619, 5
        %v2664 = vrot.slane %v2663, 4
        %v2665 = vrot.slane %v2620, 5
        %v2666 = vsel %vm772, %v2664, %v2665
        %v2667 = vrot.slane %v2621, 5
        %v2668 = vrot.slane %v2667, 4
        %v2669 = vrot.slane %v2622, 5
        %v2670 = vsel %vm772, %v2668, %v2669
        %v2671 = vunpack.c.l.b16 %v2642
        %v2672 = vunpack.c.l.b16 %v2646
        %v2673 = vunpack.c.l.b16 %v2650
        %v2674 = vunpack.c.l.b16 %v2654
        %v2675 = vunpack.c.l.b16 %v2658
        %v2676 = vunpack.c.l.b16 %v2662
        %v2677 = vunpack.c.l.b16 %v2666
        %v2678 = vunpack.c.l.b16 %v2670
        %v2679 = vpack.c.b16 %v2672, %v2671
        %v2680 = vpack.c.b16 %v2674, %v2673
        %v2681 = vpack.c.b16 %v2676, %v2675
        %v2682 = vpack.c.b16 %v2678, %v2677
        %2687 = vst.msk [vmem:[#allocation3 + $0x8] sm:$0xff] %vm573, %v2679
        %2688 = vst.msk [vmem:[#allocation3 + $0x18] sm:$0xff] %vm573, %v2680
        %2689 = vst.msk [vmem:[#allocation3 + $0x28] sm:$0xff] %vm573, %v2681
        %2690 = vst.msk [vmem:[#allocation3 + $0x38] sm:$0xff] %vm573, %v2682
        %v2691 = vld [vmem:[#allocation3] sm:$0xff]
        %v2692 = vld [vmem:[#allocation3 + $0x8] sm:$0xff]
        %v2693 = vld [vmem:[#allocation3 + $0x10] sm:$0xff]
        %v2694 = vld [vmem:[#allocation3 + $0x18] sm:$0xff]
        %v2695 = vld [vmem:[#allocation3 + $0x20] sm:$0xff]
        %v2696 = vld [vmem:[#allocation3 + $0x28] sm:$0xff]
        %v2697 = vld [vmem:[#allocation3 + $0x30] sm:$0xff]
        %v2698 = vld [vmem:[#allocation3 + $0x38] sm:$0xff]
        %v2699 = vld [vmem:[#allocation11] sm:$0xf]
        %v2700 = vld [vmem:[#allocation11 + $0x4] sm:$0xf]
        %v2701 = vld [vmem:[#allocation11 + $0x8] sm:$0xf]
        %v2702 = vld [vmem:[#allocation11 + $0xc] sm:$0xf]
        %v2703 = vld [vmem:[#allocation11 + $0x10] sm:$0xf]
        %v2704 = vld [vmem:[#allocation11 + $0x14] sm:$0xf]
        %v2705 = vld [vmem:[#allocation11 + $0x18] sm:$0xf]
        %v2706 = vld [vmem:[#allocation11 + $0x1c] sm:$0xf]
        %v2707 = vld [vmem:[#allocation11 + $0x20] sm:$0xf]
        %v2708 = vld [vmem:[#allocation11 + $0x24] sm:$0xf]
        %v2709 = vld [vmem:[#allocation11 + $0x28] sm:$0xf]
        %v2710 = vld [vmem:[#allocation11 + $0x2c] sm:$0xf]
        %v2711 = vld [vmem:[#allocation11 + $0x30] sm:$0xf]
        %v2712 = vld [vmem:[#allocation11 + $0x34] sm:$0xf]
        %v2713 = vld [vmem:[#allocation11 + $0x38] sm:$0xf]
        %v2714 = vld [vmem:[#allocation11 + $0x3c] sm:$0xf]
        %v2715 = vld [vmem:[#allocation11 + $0x40] sm:$0xf]
        %v2716 = vld [vmem:[#allocation11 + $0x44] sm:$0xf]
        %v2735 = vunpack.c.l.b16 %v2699
        %v2736 = vunpack.c.l.b16 %v2700
        %v2737 = vunpack.c.l.b16 %v2701
        %v2738 = vunpack.c.l.b16 %v2702
        %v2739 = vunpack.c.l.b16 %v2703
        %v2740 = vunpack.c.l.b16 %v2704
        %v2741 = vunpack.c.l.b16 %v2705
        %v2742 = vunpack.c.l.b16 %v2706
        %v2743 = vunpack.c.l.b16 %v2707
        %v2744 = vunpack.c.l.b16 %v2708
        %v2745 = vunpack.c.l.b16 %v2709
        %v2746 = vunpack.c.l.b16 %v2710
        %v2747 = vunpack.c.l.b16 %v2711
        %v2748 = vunpack.c.l.b16 %v2712
        %v2749 = vunpack.c.l.b16 %v2713
        %v2750 = vunpack.c.l.b16 %v2714
        %v2751 = vunpack.c.l.b16 %v2715
        %v2752 = vunpack.c.l.b16 %v2716
        %v2753 = vpack.c.b16 %v2736, %v2735
        %v2754 = vpack.c.b16 %v2738, %v2737
        %v2755 = vpack.c.b16 %v2740, %v2739
        %v2756 = vpack.c.b16 %v2742, %v2741
        %v2757 = vpack.c.b16 %v2744, %v2743
        %v2758 = vpack.c.b16 %v2746, %v2745
        %v2759 = vpack.c.b16 %v2748, %v2747
        %v2760 = vpack.c.b16 %v2750, %v2749
        %v2761 = vpack.c.b16 %v2752, %v2751
        %v2772 = vsel %vm573, %v2692, 0
        %v2775 = vsel %vm573, %v2694, 0
        %v2778 = vsel %vm573, %v2696, 0
        %v2781 = vsel %vm573, %v2698, 0
        %2783 = vmatprep.subr.bf16.mxu0 0
        %2784 = vmatpush1.bf16.msra.mxu0 %v2753
        %2785 = vmatprep.subr.bf16.mxu0 0
        %2786 = vmatpush1.bf16.msra.mxu0 %v2754
        %2787 = vmatprep.subr.bf16.mxu0 0
        %2788 = vmatpush1.bf16.msra.mxu0 %v2755
        %2789 = vmatprep.subr.bf16.mxu0 0
        %2790 = vmatpush1.bf16.msra.mxu0 %v2756
        %2791 = vmatprep.subr.bf16.mxu0 0
        %2792 = vmatpush1.bf16.msra.mxu0 %v2757
        %2793 = vmatprep.subr.bf16.mxu0 0
        %2794 = vmatpush1.bf16.msra.mxu0 %v2758
        %2795 = vmatprep.subr.bf16.mxu0 0
        %2796 = vmatpush1.bf16.msra.mxu0 %v2759
        %2797 = vmatprep.subr.bf16.mxu0 0
        %2798 = vmatpush1.bf16.msra.mxu0 %v2760
        %2799 = vmatprep.subr.bf16.mxu0 0
        %2800 = vmatpush1.bf16.msra.mxu0 %v2761
        %2801 = vmatprep.subr.bf16.mxu0 0
        %2802 = vmatpush1.bf16.msra.mxu0 0
        %2803 = vmatprep.subr.bf16.mxu0 0
        %2804 = vmatpush1.bf16.msra.mxu0 0
        %2805 = vmatprep.subr.bf16.mxu0 0
        %2806 = vmatpush1.bf16.msra.mxu0 0
        %2807 = vmatprep.subr.bf16.mxu0 0
        %2808 = vmatpush1.bf16.msra.mxu0 0
        %2809 = vmatprep.subr.bf16.mxu0 0
        %2810 = vmatpush1.bf16.msra.mxu0 0
        %2811 = vmatprep.subr.bf16.mxu0 0
        %2812 = vmatpush1.bf16.msra.mxu0 0
        %2813 = vmatprep.subr.bf16.mxu0 0
        %2814 = vmatpush1.bf16.msra.mxu0 0
        %2815 = vmatprep.mubr.bf16.mxu0 %v2772
        %2816 = vmatmul.mubr.bf16.gmra.mrb[0].mxu0 %v2691
        %v2817 = vpop.f32.mrb[0].mxu0
        %v2818 = vadd.f32 0.0, %v2817
        %v2819 = vpop.f32.mrb[0].mxu0
        %v2820 = vpop.f32.mrb[0].mxu0
        %v2821 = vadd.f32 0.0, %v2820
        %v2822 = vpop.f32.mrb[0].mxu0
        %2823 = vmatprep.mubr.bf16.mxu0 %v2775
        %2824 = vmatmul.mubr.bf16.gmra.mrb[0].mxu0 %v2693
        %v2825 = vpop.f32.mrb[0].mxu0
        %v2826 = vadd.f32 0.0, %v2825
        %v2827 = vpop.f32.mrb[0].mxu0
        %v2828 = vpop.f32.mrb[0].mxu0
        %v2829 = vadd.f32 0.0, %v2828
        %v2830 = vpop.f32.mrb[0].mxu0
        %2831 = vmatprep.mubr.bf16.mxu0 %v2778
        %2832 = vmatmul.mubr.bf16.gmra.mrb[0].mxu0 %v2695
        %v2833 = vpop.f32.mrb[0].mxu0
        %v2834 = vadd.f32 0.0, %v2833
        %v2835 = vpop.f32.mrb[0].mxu0
        %v2836 = vpop.f32.mrb[0].mxu0
        %v2837 = vadd.f32 0.0, %v2836
        %v2838 = vpop.f32.mrb[0].mxu0
        %2839 = vmatprep.mubr.bf16.mxu0 %v2781
        %2840 = vmatmul.mubr.bf16.gmra.mrb[0].mxu0 %v2697
        %v2841 = vpop.f32.mrb[0].mxu0
        %v2842 = vadd.f32 0.0, %v2841
        %v2843 = vpop.f32.mrb[0].mxu0
        %v2844 = vpop.f32.mrb[0].mxu0
        %v2845 = vadd.f32 0.0, %v2844
        %v2846 = vpop.f32.mrb[0].mxu0
        %2847 = vdwg.mxu0
        %v2848 = vsel %vm573, %v2818, 0.0
        %v2849 = vsel %vm573, %v2821, 0.0
        %v2850 = vadd.f32 %v2848, %v2849
        %v2851 = vsel %vm573, %v2826, 0.0
        %v2852 = vadd.f32 %v2850, %v2851
        %v2853 = vsel %vm573, %v2829, 0.0
        %v2854 = vadd.f32 %v2852, %v2853
        %v2855 = vsel %vm573, %v2834, 0.0
        %v2856 = vadd.f32 %v2854, %v2855
        %v2857 = vsel %vm573, %v2837, 0.0
        %v2858 = vadd.f32 %v2856, %v2857
        %v2859 = vsel %vm573, %v2842, 0.0
        %v2860 = vadd.f32 %v2858, %v2859
        %v2861 = vsel %vm573, %v2845, 0.0
        %v2862 = vadd.f32 %v2860, %v2861
        %v2863 = vrot.slane %v2862, 4
        %v2864 = vadd.f32 %v2862, %v2863
        %v2865 = vrot.slane %v2864, 2
        %v2866 = vadd.f32 %v2864, %v2865
        %v2867 = vrot.slane %v2866, 1
        %v2868 = vadd.f32 %v2866, %v2867
        %v2869 = vmul.f32 %v2868, %v1594
        %v2870 = vmul.f32 %v2818, %v2818
        %v2871 = vmul.f32 %v2821, %v2821
        %v2872 = vmul.f32 %v2826, %v2826
        %v2873 = vmul.f32 %v2829, %v2829
        %v2874 = vmul.f32 %v2834, %v2834
        %v2875 = vmul.f32 %v2837, %v2837
        %v2876 = vmul.f32 %v2842, %v2842
        %v2877 = vmul.f32 %v2845, %v2845
        %v2878 = vsel %vm573, %v2870, 0.0
        %v2879 = vsel %vm573, %v2871, 0.0
        %v2880 = vadd.f32 %v2878, %v2879
        %v2881 = vsel %vm573, %v2872, 0.0
        %v2882 = vadd.f32 %v2880, %v2881
        %v2883 = vsel %vm573, %v2873, 0.0
        %v2884 = vadd.f32 %v2882, %v2883
        %v2885 = vsel %vm573, %v2874, 0.0
        %v2886 = vadd.f32 %v2884, %v2885
        %v2887 = vsel %vm573, %v2875, 0.0
        %v2888 = vadd.f32 %v2886, %v2887
        %v2889 = vsel %vm573, %v2876, 0.0
        %v2890 = vadd.f32 %v2888, %v2889
        %v2891 = vsel %vm573, %v2877, 0.0
        %v2892 = vadd.f32 %v2890, %v2891
        %v2893 = vrot.slane %v2892, 4
        %v2894 = vadd.f32 %v2892, %v2893
        %v2895 = vrot.slane %v2894, 2
        %v2896 = vadd.f32 %v2894, %v2895
        %v2897 = vrot.slane %v2896, 1
        %v2898 = vadd.f32 %v2896, %v2897
        %v2899 = vmul.f32 %v2898, %v1594
        %v2900 = vmul.f32 %v2869, %v2869
        %v2901 = vsub.f32 %v2899, %v2900
        %v2902 = vmax.f32 %v2901, 0.0
        %v2903 = vsub.f32 %v2818, %v2869
        %v2904 = vsub.f32 %v2821, %v2869
        %v2905 = vsub.f32 %v2826, %v2869
        %v2906 = vsub.f32 %v2829, %v2869
        %v2907 = vsub.f32 %v2834, %v2869
        %v2908 = vsub.f32 %v2837, %v2869
        %v2909 = vsub.f32 %v2842, %v2869
        %v2910 = vsub.f32 %v2845, %v2869
        %v2911 = vadd.f32 %v2902, 1e-05
        %v2912 = vrsqrt.pop %v2911
        %v2913 = vmul.f32 %v2903, %v2912
        %v2914 = vmul.f32 %v2904, %v2912
        %v2915 = vmul.f32 %v2905, %v2912
        %v2916 = vmul.f32 %v2906, %v2912
        %v2917 = vmul.f32 %v2907, %v2912
        %v2918 = vmul.f32 %v2908, %v2912
        %v2919 = vmul.f32 %v2909, %v2912
        %v2920 = vmul.f32 %v2910, %v2912
        %v2921 = vld [vmem:[#allocation12] sm:$0x1]
        %v2923 = vlaneseq
        %v2924 = vshrl.u32 %v2923, 7
        %v2925 = vsub.s32 0, %v2924
        %v2926 = vrot.slane %v2921, %v2925
        %v2928 = vmul.f32 %v2913, %v2926
        %v2929 = vmul.f32 %v2914, %v2926
        %v2930 = vmul.f32 %v2915, %v2926
        %v2931 = vmul.f32 %v2916, %v2926
        %v2932 = vmul.f32 %v2917, %v2926
        %v2933 = vmul.f32 %v2918, %v2926
        %v2934 = vmul.f32 %v2919, %v2926
        %v2935 = vmul.f32 %v2920, %v2926
        %v2936 = vadd.f32 %v2928, %v298
        %v2937 = vadd.f32 %v2929, %v299
        %v2938 = vadd.f32 %v2930, %v300
        %v2939 = vadd.f32 %v2931, %v301
        %v2940 = vadd.f32 %v2932, %v302
        %v2941 = vadd.f32 %v2933, %v303
        %v2942 = vadd.f32 %v2934, %v304
        %v2943 = vadd.f32 %v2935, %v305
        %2944 = vst.msk [vmem:[#allocation4] sm:$0xff] %vm573, 0.0
        %2945 = vst.msk [vmem:[#allocation4 + $0x8] sm:$0xf] %vm306, 0.0
        %2946 = vst.msk [vmem:[#allocation4 + $0x10] sm:$0xff] %vm573, 0.0
        %2947 = vst.msk [vmem:[#allocation4 + $0x18] sm:$0xf] %vm306, 0.0
        %s2948 = scalar_lea.vmem [#allocation4], 160
        %2949 = vst.msk [vmem:[%s2948] sm:$0xff] %vm573, 0.0
        %2950 = vst.msk [vmem:[%s2948 + $0x8] sm:$0xf] %vm306, 0.0
        %2951 = vst.msk [vmem:[%s2948 + $0x10] sm:$0xff] %vm573, 0.0
        %2952 = vst.msk [vmem:[%s2948 + $0x18] sm:$0xf] %vm306, 0.0
        %vm2953 = vcmask 123904
        %2954 = vst.msk [vmem:[#allocation4] sm:$0x3] %vm2953, 0.0
        %2955 = vst.msk [vmem:[#allocation4 + $0x10] sm:$0x3] %vm2953, 0.0
        %2956 = vst.msk [vmem:[#allocation4 + $0x20] sm:$0x3] %vm2953, 0.0
        %2957 = vst.msk [vmem:[#allocation4 + $0x30] sm:$0x3] %vm2953, 0.0
        %2958 = vst.msk [vmem:[#allocation4 + $0x40] sm:$0x3] %vm2953, 0.0
        %2959 = vst.msk [vmem:[#allocation4 + $0x50] sm:$0x3] %vm2953, 0.0
        %2960 = vst.msk [vmem:[#allocation4 + $0x60] sm:$0x3] %vm2953, 0.0
        %2961 = vst.msk [vmem:[#allocation4 + $0x70] sm:$0x3] %vm2953, 0.0
        %2962 = vst.msk [vmem:[#allocation4 + $0x80] sm:$0x3] %vm2953, 0.0
        %2963 = vst.msk [vmem:[#allocation4 + $0x90] sm:$0x3] %vm2953, 0.0
        %2964 = vst.msk [vmem:[#allocation4 + $0xa0] sm:$0x3] %vm2953, 0.0
        %2965 = vst.msk [vmem:[#allocation4 + $0xb0] sm:$0x3] %vm2953, 0.0
        %2966 = vst.msk [vmem:[#allocation4 + $0xa] sm:$0x3] %vm2953, 0.0
        %2967 = vst.msk [vmem:[#allocation4 + $0x1a] sm:$0x3] %vm2953, 0.0
        %2968 = vst.msk [vmem:[#allocation4 + $0x2a] sm:$0x3] %vm2953, 0.0
        %2969 = vst.msk [vmem:[#allocation4 + $0x3a] sm:$0x3] %vm2953, 0.0
        %2970 = vst.msk [vmem:[#allocation4 + $0x4a] sm:$0x3] %vm2953, 0.0
        %2971 = vst.msk [vmem:[#allocation4 + $0x5a] sm:$0x3] %vm2953, 0.0
        %2972 = vst.msk [vmem:[#allocation4 + $0x6a] sm:$0x3] %vm2953, 0.0
        %2973 = vst.msk [vmem:[#allocation4 + $0x7a] sm:$0x3] %vm2953, 0.0
        %2974 = vst.msk [vmem:[#allocation4 + $0x8a] sm:$0x3] %vm2953, 0.0
        %2975 = vst.msk [vmem:[#allocation4 + $0x9a] sm:$0x3] %vm2953, 0.0
        %2976 = vst.msk [vmem:[#allocation4 + $0xaa] sm:$0x3] %vm2953, 0.0
        %2977 = vst.msk [vmem:[#allocation4 + $0xba] sm:$0x3] %vm2953, 0.0
        %s2978 = scalar_lea.vmem [#allocation4], 32
        %2979 = vst.msk [vmem:[%s2978 + $0x2] sm:$0xff] %vm573, %v2936
        %2980 = vst.msk [vmem:[%s2978 + $0x12] sm:$0xff] %vm573, %v2937
        %2981 = vst.msk [vmem:[%s2978 + $0x22] sm:$0xff] %vm573, %v2938
        %2982 = vst.msk [vmem:[%s2978 + $0x32] sm:$0xff] %vm573, %v2939
        %2983 = vst.msk [vmem:[%s2978 + $0x42] sm:$0xff] %vm573, %v2940
        %2984 = vst.msk [vmem:[%s2978 + $0x52] sm:$0xff] %vm573, %v2941
        %2985 = vst.msk [vmem:[%s2978 + $0x62] sm:$0xff] %vm573, %v2942
        %2986 = vst.msk [vmem:[%s2978 + $0x72] sm:$0xff] %vm573, %v2943
        %s2987 = sld [smem:[#allocation14]]
        %v2988 = vld [vmem:[#allocation4] sm:$0xff]
        %v2989 = vld [vmem:[#allocation4 + $0x8] sm:$0xf]
        %v2990 = vld [vmem:[#allocation4 + $0x10] sm:$0xff]
        %v2991 = vld [vmem:[#allocation4 + $0x18] sm:$0xf]
        %v2992 = vld [vmem:[#allocation4 + $0x20] sm:$0xff]
        %v2993 = vld [vmem:[#allocation4 + $0x28] sm:$0xf]
        %v2994 = vld [vmem:[#allocation4 + $0x30] sm:$0xff]
        %v2995 = vld [vmem:[#allocation4 + $0x38] sm:$0xf]
        %v2996 = vld [vmem:[#allocation4 + $0x40] sm:$0xff]
        %v2997 = vld [vmem:[#allocation4 + $0x48] sm:$0xf]
        %v2998 = vld [vmem:[#allocation4 + $0x50] sm:$0xff]
        %v2999 = vld [vmem:[#allocation4 + $0x58] sm:$0xf]
        %v3000 = vld [vmem:[#allocation4 + $0x60] sm:$0xff]
        %v3001 = vld [vmem:[#allocation4 + $0x68] sm:$0xf]
        %v3002 = vld [vmem:[#allocation4 + $0x70] sm:$0xff]
        %v3003 = vld [vmem:[#allocation4 + $0x78] sm:$0xf]
        %v3004 = vstv %s2987
        %v3005 = vmul.f32 %v3004, %v2988
        %v3006 = vmul.f32 %v3004, %v2989
        %v3007 = vmul.f32 %v3004, %v2990
        %v3008 = vmul.f32 %v3004, %v2991
        %v3009 = vmul.f32 %v3004, %v2992
        %v3010 = vmul.f32 %v3004, %v2993
        %v3011 = vmul.f32 %v3004, %v2994
        %v3012 = vmul.f32 %v3004, %v2995
        %v3013 = vmul.f32 %v3004, %v2996
        %v3014 = vmul.f32 %v3004, %v2997
        %v3015 = vmul.f32 %v3004, %v2998
        %v3016 = vmul.f32 %v3004, %v2999
        %v3017 = vmul.f32 %v3004, %v3000
        %v3018 = vmul.f32 %v3004, %v3001
        %v3019 = vmul.f32 %v3004, %v3002
        %v3020 = vmul.f32 %v3004, %v3003
        %s3021 = sld [smem:[#allocation14 + $0x1]]
        %s3022 = scalar_lea.vmem [#allocation4], 16
        %v3023 = vld [vmem:[%s3022] sm:$0xff]
        %v3024 = vld [vmem:[%s3022 + $0x8] sm:$0xf]
        %v3025 = vld [vmem:[%s3022 + $0x10] sm:$0xff]
        %v3026 = vld [vmem:[%s3022 + $0x18] sm:$0xf]
        %v3027 = vld [vmem:[%s3022 + $0x20] sm:$0xff]
        %v3028 = vld [vmem:[%s3022 + $0x28] sm:$0xf]
        %v3029 = vld [vmem:[%s3022 + $0x30] sm:$0xff]
        %v3030 = vld [vmem:[%s3022 + $0x38] sm:$0xf]
        %v3031 = vld [vmem:[%s3022 + $0x40] sm:$0xff]
        %v3032 = vld [vmem:[%s3022 + $0x48] sm:$0xf]
        %v3033 = vld [vmem:[%s3022 + $0x50] sm:$0xff]
        %v3034 = vld [vmem:[%s3022 + $0x58] sm:$0xf]
        %v3035 = vld [vmem:[%s3022 + $0x60] sm:$0xff]
        %v3036 = vld [vmem:[%s3022 + $0x68] sm:$0xf]
        %v3037 = vld [vmem:[%s3022 + $0x70] sm:$0xff]
        %v3038 = vld [vmem:[%s3022 + $0x78] sm:$0xf]
        %v3039 = vstv %s3021
        %v3040 = vmul.f32 %v3039, %v3023
        %v3041 = vmul.f32 %v3039, %v3024
        %v3042 = vmul.f32 %v3039, %v3025
        %v3043 = vmul.f32 %v3039, %v3026
        %v3044 = vmul.f32 %v3039, %v3027
        %v3045 = vmul.f32 %v3039, %v3028
        %v3046 = vmul.f32 %v3039, %v3029
        %v3047 = vmul.f32 %v3039, %v3030
        %v3048 = vmul.f32 %v3039, %v3031
        %v3049 = vmul.f32 %v3039, %v3032
        %v3050 = vmul.f32 %v3039, %v3033
        %v3051 = vmul.f32 %v3039, %v3034
        %v3052 = vmul.f32 %v3039, %v3035
        %v3053 = vmul.f32 %v3039, %v3036
        %v3054 = vmul.f32 %v3039, %v3037
        %v3055 = vmul.f32 %v3039, %v3038
        %v3056 = vadd.f32 %v3005, %v3040
        %v3057 = vadd.f32 %v3006, %v3041
        %v3058 = vadd.f32 %v3007, %v3042
        %v3059 = vadd.f32 %v3008, %v3043
        %v3060 = vadd.f32 %v3009, %v3044
        %v3061 = vadd.f32 %v3010, %v3045
        %v3062 = vadd.f32 %v3011, %v3046
        %v3063 = vadd.f32 %v3012, %v3047
        %v3064 = vadd.f32 %v3013, %v3048
        %v3065 = vadd.f32 %v3014, %v3049
        %v3066 = vadd.f32 %v3015, %v3050
        %v3067 = vadd.f32 %v3016, %v3051
        %v3068 = vadd.f32 %v3017, %v3052
        %v3069 = vadd.f32 %v3018, %v3053
        %v3070 = vadd.f32 %v3019, %v3054
        %v3071 = vadd.f32 %v3020, %v3055
        %s3072 = sld [smem:[#allocation14 + $0x2]]
        %v3073 = vld [vmem:[%s2978] sm:$0xff]
        %v3074 = vld [vmem:[%s2978 + $0x8] sm:$0xf]
        %v3075 = vld [vmem:[%s2978 + $0x10] sm:$0xff]
        %v3076 = vld [vmem:[%s2978 + $0x18] sm:$0xf]
        %v3077 = vld [vmem:[%s2978 + $0x20] sm:$0xff]
        %v3078 = vld [vmem:[%s2978 + $0x28] sm:$0xf]
        %v3079 = vld [vmem:[%s2978 + $0x30] sm:$0xff]
        %v3080 = vld [vmem:[%s2978 + $0x38] sm:$0xf]
        %v3081 = vld [vmem:[%s2978 + $0x40] sm:$0xff]
        %v3082 = vld [vmem:[%s2978 + $0x48] sm:$0xf]
        %v3083 = vld [vmem:[%s2978 + $0x50] sm:$0xff]
        %v3084 = vld [vmem:[%s2978 + $0x58] sm:$0xf]
        %v3085 = vld [vmem:[%s2978 + $0x60] sm:$0xff]
        %v3086 = vld [vmem:[%s2978 + $0x68] sm:$0xf]
        %v3087 = vld [vmem:[%s2978 + $0x70] sm:$0xff]
        %v3088 = vld [vmem:[%s2978 + $0x78] sm:$0xf]
        %v3089 = vstv %s3072
        %v3090 = vmul.f32 %v3089, %v3073
        %v3091 = vmul.f32 %v3089, %v3074
        %v3092 = vmul.f32 %v3089, %v3075
        %v3093 = vmul.f32 %v3089, %v3076
        %v3094 = vmul.f32 %v3089, %v3077
        %v3095 = vmul.f32 %v3089, %v3078
        %v3096 = vmul.f32 %v3089, %v3079
        %v3097 = vmul.f32 %v3089, %v3080
        %v3098 = vmul.f32 %v3089, %v3081
        %v3099 = vmul.f32 %v3089, %v3082
        %v3100 = vmul.f32 %v3089, %v3083
        %v3101 = vmul.f32 %v3089, %v3084
        %v3102 = vmul.f32 %v3089, %v3085
        %v3103 = vmul.f32 %v3089, %v3086
        %v3104 = vmul.f32 %v3089, %v3087
        %v3105 = vmul.f32 %v3089, %v3088
        %v3106 = vadd.f32 %v3056, %v3090
        %v3107 = vadd.f32 %v3057, %v3091
        %v3108 = vadd.f32 %v3058, %v3092
        %v3109 = vadd.f32 %v3059, %v3093
        %v3110 = vadd.f32 %v3060, %v3094
        %v3111 = vadd.f32 %v3061, %v3095
        %v3112 = vadd.f32 %v3062, %v3096
        %v3113 = vadd.f32 %v3063, %v3097
        %v3114 = vadd.f32 %v3064, %v3098
        %v3115 = vadd.f32 %v3065, %v3099
        %v3116 = vadd.f32 %v3066, %v3100
        %v3117 = vadd.f32 %v3067, %v3101
        %v3118 = vadd.f32 %v3068, %v3102
        %v3119 = vadd.f32 %v3069, %v3103
        %v3120 = vadd.f32 %v3070, %v3104
        %v3121 = vadd.f32 %v3071, %v3105
        %s3122 = sld [smem:[#allocation14 + $0x3]]
        %s3123 = scalar_lea.vmem [#allocation4], 48
        %v3124 = vld [vmem:[%s3123] sm:$0xff]
        %v3125 = vld [vmem:[%s3123 + $0x8] sm:$0xf]
        %v3126 = vld [vmem:[%s3123 + $0x10] sm:$0xff]
        %v3127 = vld [vmem:[%s3123 + $0x18] sm:$0xf]
        %v3128 = vld [vmem:[%s3123 + $0x20] sm:$0xff]
        %v3129 = vld [vmem:[%s3123 + $0x28] sm:$0xf]
        %v3130 = vld [vmem:[%s3123 + $0x30] sm:$0xff]
        %v3131 = vld [vmem:[%s3123 + $0x38] sm:$0xf]
        %v3132 = vld [vmem:[%s3123 + $0x40] sm:$0xff]
        %v3133 = vld [vmem:[%s3123 + $0x48] sm:$0xf]
        %v3134 = vld [vmem:[%s3123 + $0x50] sm:$0xff]
        %v3135 = vld [vmem:[%s3123 + $0x58] sm:$0xf]
        %v3136 = vld [vmem:[%s3123 + $0x60] sm:$0xff]
        %v3137 = vld [vmem:[%s3123 + $0x68] sm:$0xf]
        %v3138 = vld [vmem:[%s3123 + $0x70] sm:$0xff]
        %v3139 = vld [vmem:[%s3123 + $0x78] sm:$0xf]
        %v3140 = vstv %s3122
        %v3141 = vmul.f32 %v3140, %v3124
        %v3142 = vmul.f32 %v3140, %v3125
        %v3143 = vmul.f32 %v3140, %v3126
        %v3144 = vmul.f32 %v3140, %v3127
        %v3145 = vmul.f32 %v3140, %v3128
        %v3146 = vmul.f32 %v3140, %v3129
        %v3147 = vmul.f32 %v3140, %v3130
        %v3148 = vmul.f32 %v3140, %v3131
        %v3149 = vmul.f32 %v3140, %v3132
        %v3150 = vmul.f32 %v3140, %v3133
        %v3151 = vmul.f32 %v3140, %v3134
        %v3152 = vmul.f32 %v3140, %v3135
        %v3153 = vmul.f32 %v3140, %v3136
        %v3154 = vmul.f32 %v3140, %v3137
        %v3155 = vmul.f32 %v3140, %v3138
        %v3156 = vmul.f32 %v3140, %v3139
        %v3157 = vadd.f32 %v3106, %v3141
        %v3158 = vadd.f32 %v3107, %v3142
        %v3159 = vadd.f32 %v3108, %v3143
        %v3160 = vadd.f32 %v3109, %v3144
        %v3161 = vadd.f32 %v3110, %v3145
        %v3162 = vadd.f32 %v3111, %v3146
        %v3163 = vadd.f32 %v3112, %v3147
        %v3164 = vadd.f32 %v3113, %v3148
        %v3165 = vadd.f32 %v3114, %v3149
        %v3166 = vadd.f32 %v3115, %v3150
        %v3167 = vadd.f32 %v3116, %v3151
        %v3168 = vadd.f32 %v3117, %v3152
        %v3169 = vadd.f32 %v3118, %v3153
        %v3170 = vadd.f32 %v3119, %v3154
        %v3171 = vadd.f32 %v3120, %v3155
        %v3172 = vadd.f32 %v3121, %v3156
        %s3173 = sld [smem:[#allocation14 + $0x4]]
        %s3174 = scalar_lea.vmem [#allocation4], 64
        %v3175 = vld [vmem:[%s3174] sm:$0xff]
        %v3176 = vld [vmem:[%s3174 + $0x8] sm:$0xf]
        %v3177 = vld [vmem:[%s3174 + $0x10] sm:$0xff]
        %v3178 = vld [vmem:[%s3174 + $0x18] sm:$0xf]
        %v3179 = vld [vmem:[%s3174 + $0x20] sm:$0xff]
        %v3180 = vld [vmem:[%s3174 + $0x28] sm:$0xf]
        %v3181 = vld [vmem:[%s3174 + $0x30] sm:$0xff]
        %v3182 = vld [vmem:[%s3174 + $0x38] sm:$0xf]
        %v3183 = vld [vmem:[%s3174 + $0x40] sm:$0xff]
        %v3184 = vld [vmem:[%s3174 + $0x48] sm:$0xf]
        %v3185 = vld [vmem:[%s3174 + $0x50] sm:$0xff]
        %v3186 = vld [vmem:[%s3174 + $0x58] sm:$0xf]
        %v3187 = vld [vmem:[%s3174 + $0x60] sm:$0xff]
        %v3188 = vld [vmem:[%s3174 + $0x68] sm:$0xf]
        %v3189 = vld [vmem:[%s3174 + $0x70] sm:$0xff]
        %v3190 = vld [vmem:[%s3174 + $0x78] sm:$0xf]
        %v3191 = vstv %s3173
        %v3192 = vmul.f32 %v3191, %v3175
        %v3193 = vmul.f32 %v3191, %v3176
        %v3194 = vmul.f32 %v3191, %v3177
        %v3195 = vmul.f32 %v3191, %v3178
        %v3196 = vmul.f32 %v3191, %v3179
        %v3197 = vmul.f32 %v3191, %v3180
        %v3198 = vmul.f32 %v3191, %v3181
        %v3199 = vmul.f32 %v3191, %v3182
        %v3200 = vmul.f32 %v3191, %v3183
        %v3201 = vmul.f32 %v3191, %v3184
        %v3202 = vmul.f32 %v3191, %v3185
        %v3203 = vmul.f32 %v3191, %v3186
        %v3204 = vmul.f32 %v3191, %v3187
        %v3205 = vmul.f32 %v3191, %v3188
        %v3206 = vmul.f32 %v3191, %v3189
        %v3207 = vmul.f32 %v3191, %v3190
        %v3208 = vadd.f32 %v3157, %v3192
        %v3209 = vadd.f32 %v3158, %v3193
        %v3210 = vadd.f32 %v3159, %v3194
        %v3211 = vadd.f32 %v3160, %v3195
        %v3212 = vadd.f32 %v3161, %v3196
        %v3213 = vadd.f32 %v3162, %v3197
        %v3214 = vadd.f32 %v3163, %v3198
        %v3215 = vadd.f32 %v3164, %v3199
        %v3216 = vadd.f32 %v3165, %v3200
        %v3217 = vadd.f32 %v3166, %v3201
        %v3218 = vadd.f32 %v3167, %v3202
        %v3219 = vadd.f32 %v3168, %v3203
        %v3220 = vadd.f32 %v3169, %v3204
        %v3221 = vadd.f32 %v3170, %v3205
        %v3222 = vadd.f32 %v3171, %v3206
        %v3223 = vadd.f32 %v3172, %v3207
        %v3224 = vmul.f32 %v3004, %v3208
        %v3225 = vmul.f32 %v3004, %v3210
        %v3226 = vmul.f32 %v3004, %v3212
        %v3227 = vmul.f32 %v3004, %v3214
        %v3228 = vmul.f32 %v3004, %v3216
        %v3229 = vmul.f32 %v3004, %v3218
        %v3230 = vmul.f32 %v3004, %v3220
        %v3231 = vmul.f32 %v3004, %v3222
        %v3232 = vmul.f32 %v3039, %v3208
        %v3233 = vmul.f32 %v3039, %v3209
        %v3234 = vmul.f32 %v3039, %v3210
        %v3235 = vmul.f32 %v3039, %v3211
        %v3236 = vmul.f32 %v3039, %v3212
        %v3237 = vmul.f32 %v3039, %v3213
        %v3238 = vmul.f32 %v3039, %v3214
        %v3239 = vmul.f32 %v3039, %v3215
        %v3240 = vmul.f32 %v3039, %v3216
        %v3241 = vmul.f32 %v3039, %v3217
        %v3242 = vmul.f32 %v3039, %v3218
        %v3243 = vmul.f32 %v3039, %v3219
        %v3244 = vmul.f32 %v3039, %v3220
        %v3245 = vmul.f32 %v3039, %v3221
        %v3246 = vmul.f32 %v3039, %v3222
        %v3247 = vmul.f32 %v3039, %v3223
        %vm3264 = vcmask 1046528
        %v3265 = vrot.slane %v3232, 1
        %v3266 = vrot.slane %v3233, 1
        %v3267 = vsel %vm3264, %v3265, %v3266
        %v3268 = vrot.slane %v3234, 1
        %v3269 = vrot.slane %v3235, 1
        %v3270 = vsel %vm3264, %v3268, %v3269
        %v3271 = vrot.slane %v3236, 1
        %v3272 = vrot.slane %v3237, 1
        %v3273 = vsel %vm3264, %v3271, %v3272
        %v3274 = vrot.slane %v3238, 1
        %v3275 = vrot.slane %v3239, 1
        %v3276 = vsel %vm3264, %v3274, %v3275
        %v3277 = vrot.slane %v3240, 1
        %v3278 = vrot.slane %v3241, 1
        %v3279 = vsel %vm3264, %v3277, %v3278
        %v3280 = vrot.slane %v3242, 1
        %v3281 = vrot.slane %v3243, 1
        %v3282 = vsel %vm3264, %v3280, %v3281
        %v3283 = vrot.slane %v3244, 1
        %v3284 = vrot.slane %v3245, 1
        %v3285 = vsel %vm3264, %v3283, %v3284
        %v3286 = vrot.slane %v3246, 1
        %v3287 = vrot.slane %v3247, 1
        %v3288 = vsel %vm3264, %v3286, %v3287
        %v3297 = vadd.f32 %v3224, %v3267
        %v3298 = vadd.f32 %v3225, %v3270
        %v3299 = vadd.f32 %v3226, %v3273
        %v3300 = vadd.f32 %v3227, %v3276
        %v3301 = vadd.f32 %v3228, %v3279
        %v3302 = vadd.f32 %v3229, %v3282
        %v3303 = vadd.f32 %v3230, %v3285
        %v3304 = vadd.f32 %v3231, %v3288
        %v3305 = vmul.f32 %v3089, %v3208
        %v3306 = vmul.f32 %v3089, %v3209
        %v3307 = vmul.f32 %v3089, %v3210
        %v3308 = vmul.f32 %v3089, %v3211
        %v3309 = vmul.f32 %v3089, %v3212
        %v3310 = vmul.f32 %v3089, %v3213
        %v3311 = vmul.f32 %v3089, %v3214
        %v3312 = vmul.f32 %v3089, %v3215
        %v3313 = vmul.f32 %v3089, %v3216
        %v3314 = vmul.f32 %v3089, %v3217
        %v3315 = vmul.f32 %v3089, %v3218
        %v3316 = vmul.f32 %v3089, %v3219
        %v3317 = vmul.f32 %v3089, %v3220
        %v3318 = vmul.f32 %v3089, %v3221
        %v3319 = vmul.f32 %v3089, %v3222
        %v3320 = vmul.f32 %v3089, %v3223
        %vm3337 = vcmask 1045504
        %v3338 = vrot.slane %v3305, 2
        %v3339 = vrot.slane %v3306, 2
        %v3340 = vsel %vm3337, %v3338, %v3339
        %v3341 = vrot.slane %v3307, 2
        %v3342 = vrot.slane %v3308, 2
        %v3343 = vsel %vm3337, %v3341, %v3342
        %v3344 = vrot.slane %v3309, 2
        %v3345 = vrot.slane %v3310, 2
        %v3346 = vsel %vm3337, %v3344, %v3345
        %v3347 = vrot.slane %v3311, 2
        %v3348 = vrot.slane %v3312, 2
        %v3349 = vsel %vm3337, %v3347, %v3348
        %v3350 = vrot.slane %v3313, 2
        %v3351 = vrot.slane %v3314, 2
        %v3352 = vsel %vm3337, %v3350, %v3351
        %v3353 = vrot.slane %v3315, 2
        %v3354 = vrot.slane %v3316, 2
        %v3355 = vsel %vm3337, %v3353, %v3354
        %v3356 = vrot.slane %v3317, 2
        %v3357 = vrot.slane %v3318, 2
        %v3358 = vsel %vm3337, %v3356, %v3357
        %v3359 = vrot.slane %v3319, 2
        %v3360 = vrot.slane %v3320, 2
        %v3361 = vsel %vm3337, %v3359, %v3360
        %v3370 = vadd.f32 %v3297, %v3340
        %v3371 = vadd.f32 %v3298, %v3343
        %v3372 = vadd.f32 %v3299, %v3346
        %v3373 = vadd.f32 %v3300, %v3349
        %v3374 = vadd.f32 %v3301, %v3352
        %v3375 = vadd.f32 %v3302, %v3355
        %v3376 = vadd.f32 %v3303, %v3358
        %v3377 = vadd.f32 %v3304, %v3361
        %v3378 = vmul.f32 %v3140, %v3208
        %v3379 = vmul.f32 %v3140, %v3209
        %v3380 = vmul.f32 %v3140, %v3210
        %v3381 = vmul.f32 %v3140, %v3211
        %v3382 = vmul.f32 %v3140, %v3212
        %v3383 = vmul.f32 %v3140, %v3213
        %v3384 = vmul.f32 %v3140, %v3214
        %v3385 = vmul.f32 %v3140, %v3215
        %v3386 = vmul.f32 %v3140, %v3216
        %v3387 = vmul.f32 %v3140, %v3217
        %v3388 = vmul.f32 %v3140, %v3218
        %v3389 = vmul.f32 %v3140, %v3219
        %v3390 = vmul.f32 %v3140, %v3220
        %v3391 = vmul.f32 %v3140, %v3221
        %v3392 = vmul.f32 %v3140, %v3222
        %v3393 = vmul.f32 %v3140, %v3223
        %vm3410 = vcmask 1044480
        %v3411 = vrot.slane %v3378, 3
        %v3412 = vrot.slane %v3379, 3
        %v3413 = vsel %vm3410, %v3411, %v3412
        %v3414 = vrot.slane %v3380, 3
        %v3415 = vrot.slane %v3381, 3
        %v3416 = vsel %vm3410, %v3414, %v3415
        %v3417 = vrot.slane %v3382, 3
        %v3418 = vrot.slane %v3383, 3
        %v3419 = vsel %vm3410, %v3417, %v3418
        %v3420 = vrot.slane %v3384, 3
        %v3421 = vrot.slane %v3385, 3
        %v3422 = vsel %vm3410, %v3420, %v3421
        %v3423 = vrot.slane %v3386, 3
        %v3424 = vrot.slane %v3387, 3
        %v3425 = vsel %vm3410, %v3423, %v3424
        %v3426 = vrot.slane %v3388, 3
        %v3427 = vrot.slane %v3389, 3
        %v3428 = vsel %vm3410, %v3426, %v3427
        %v3429 = vrot.slane %v3390, 3
        %v3430 = vrot.slane %v3391, 3
        %v3431 = vsel %vm3410, %v3429, %v3430
        %v3432 = vrot.slane %v3392, 3
        %v3433 = vrot.slane %v3393, 3
        %v3434 = vsel %vm3410, %v3432, %v3433
        %v3443 = vadd.f32 %v3370, %v3413
        %v3444 = vadd.f32 %v3371, %v3416
        %v3445 = vadd.f32 %v3372, %v3419
        %v3446 = vadd.f32 %v3373, %v3422
        %v3447 = vadd.f32 %v3374, %v3425
        %v3448 = vadd.f32 %v3375, %v3428
        %v3449 = vadd.f32 %v3376, %v3431
        %v3450 = vadd.f32 %v3377, %v3434
        %v3451 = vmul.f32 %v3191, %v3208
        %v3452 = vmul.f32 %v3191, %v3209
        %v3453 = vmul.f32 %v3191, %v3210
        %v3454 = vmul.f32 %v3191, %v3211
        %v3455 = vmul.f32 %v3191, %v3212
        %v3456 = vmul.f32 %v3191, %v3213
        %v3457 = vmul.f32 %v3191, %v3214
        %v3458 = vmul.f32 %v3191, %v3215
        %v3459 = vmul.f32 %v3191, %v3216
        %v3460 = vmul.f32 %v3191, %v3217
        %v3461 = vmul.f32 %v3191, %v3218
        %v3462 = vmul.f32 %v3191, %v3219
        %v3463 = vmul.f32 %v3191, %v3220
        %v3464 = vmul.f32 %v3191, %v3221
        %v3465 = vmul.f32 %v3191, %v3222
        %v3466 = vmul.f32 %v3191, %v3223
        %vm3483 = vcmask 1043456
        %v3484 = vrot.slane %v3451, 4
        %v3485 = vrot.slane %v3452, 4
        %v3486 = vsel %vm3483, %v3484, %v3485
        %v3487 = vrot.slane %v3453, 4
        %v3488 = vrot.slane %v3454, 4
        %v3489 = vsel %vm3483, %v3487, %v3488
        %v3490 = vrot.slane %v3455, 4
        %v3491 = vrot.slane %v3456, 4
        %v3492 = vsel %vm3483, %v3490, %v3491
        %v3493 = vrot.slane %v3457, 4
        %v3494 = vrot.slane %v3458, 4
        %v3495 = vsel %vm3483, %v3493, %v3494
        %v3496 = vrot.slane %v3459, 4
        %v3497 = vrot.slane %v3460, 4
        %v3498 = vsel %vm3483, %v3496, %v3497
        %v3499 = vrot.slane %v3461, 4
        %v3500 = vrot.slane %v3462, 4
        %v3501 = vsel %vm3483, %v3499, %v3500
        %v3502 = vrot.slane %v3463, 4
        %v3503 = vrot.slane %v3464, 4
        %v3504 = vsel %vm3483, %v3502, %v3503
        %v3505 = vrot.slane %v3465, 4
        %v3506 = vrot.slane %v3466, 4
        %v3507 = vsel %vm3483, %v3505, %v3506
        %v3516 = vadd.f32 %v3443, %v3486
        %v3517 = vadd.f32 %v3444, %v3489
        %v3518 = vadd.f32 %v3445, %v3492
        %v3519 = vadd.f32 %v3446, %v3495
        %v3520 = vadd.f32 %v3447, %v3498
        %v3521 = vadd.f32 %v3448, %v3501
        %v3522 = vadd.f32 %v3449, %v3504
        %v3523 = vadd.f32 %v3450, %v3507
        %vm3524 = vcmp.gt.f32.partialorder %v3516, 0.0
        %vm3525 = vcmp.gt.f32.partialorder %v3517, 0.0
        %vm3526 = vcmp.gt.f32.partialorder %v3518, 0.0
        %vm3527 = vcmp.gt.f32.partialorder %v3519, 0.0
        %vm3528 = vcmp.gt.f32.partialorder %v3520, 0.0
        %vm3529 = vcmp.gt.f32.partialorder %v3521, 0.0
        %vm3530 = vcmp.gt.f32.partialorder %v3522, 0.0
        %vm3531 = vcmp.gt.f32.partialorder %v3523, 0.0
        %v3532 = vmul.f32 %v3516, 0.2
        %v3533 = vmul.f32 %v3517, 0.2
        %v3534 = vmul.f32 %v3518, 0.2
        %v3535 = vmul.f32 %v3519, 0.2
        %v3536 = vmul.f32 %v3520, 0.2
        %v3537 = vmul.f32 %v3521, 0.2
        %v3538 = vmul.f32 %v3522, 0.2
        %v3539 = vmul.f32 %v3523, 0.2
        %v3540 = vsel %vm3524, %v3516, %v3532
        %v3541 = vsel %vm3525, %v3517, %v3533
        %v3542 = vsel %vm3526, %v3518, %v3534
        %v3543 = vsel %vm3527, %v3519, %v3535
        %v3544 = vsel %vm3528, %v3520, %v3536
        %v3545 = vsel %vm3529, %v3521, %v3537
        %v3546 = vsel %vm3530, %v3522, %v3538
        %v3547 = vsel %vm3531, %v3523, %v3539
        %3548 = vst.msk [vmem:[%s296] sm:$0xff] %vm573, %v3540
        %3549 = vst.msk [vmem:[%s296 + $0x8] sm:$0xff] %vm573, %v3541
        %3550 = vst.msk [vmem:[%s296 + $0x10] sm:$0xff] %vm573, %v3542
        %3551 = vst.msk [vmem:[%s296 + $0x18] sm:$0xff] %vm573, %v3543
        %3552 = vst.msk [vmem:[%s296 + $0x20] sm:$0xff] %vm573, %v3544
        %3553 = vst.msk [vmem:[%s296 + $0x28] sm:$0xff] %vm573, %v3545
        %3554 = vst.msk [vmem:[%s296 + $0x30] sm:$0xff] %vm573, %v3546
        %3555 = vst.msk [vmem:[%s296 + $0x38] sm:$0xff] %vm573, %v3547
        %s3556 = sand.u32 %s143, 1
        %s3557 = scalar_lea.sflag [#allocation7], %s3556
        %s3558 = sand.u32 %s143, 1
        %s3559 = smul.addr %s3558, 64
        %s3560 = scalar_lea.vmem [#allocation15], %s3559
        // Predicated region
        $region61: #{encoder_block_forward.3} parent=39 // pred_check
          %p3561 = pneg %p153
        $region62: #{encoder_block_forward.3} parent=39 // pred_check_branch
          %3563 = sbr.rel (%p3561) target = $region64
        $region63: #{encoder_block_forward.3} parent=39 // pred_region
          %s3565 = ssub.s32 1024, 1024
          %3566 = vsyncadd %s3557, %s3565
          %s3567 = smul.addr %s25, 8
          %s3568 = smul.addr %s3567, 128
          %s3569 = scalar_lea.hbm %s5, %s3568
          %s3570 = sshll.u32 %s3560, 4
          %s3571 = int_to_ptr.vmem [resolvable:$true] %s3570
          %3576 = dma.vmem_to_hbm [thread:$0]  %s3571, 1024, %s3569, %s3557, 128, 128, 8
        $region64: #{encoder_block_forward.3} parent=39 // pred_fallthru
          _
      $region40: #{encoder_block_forward.3} parent=5 // pred_fallthru
        _
      %p3577 = scmp.le.s32.totalorder 2, %s20
      // Predicated region
      $region65: #{encoder_block_forward.3} parent=5 // pred_check
        %p3578 = pneg %p3577
      $region66: #{encoder_block_forward.3} parent=5 // pred_check_branch
        %3580 = sbr.rel (%p3578) target = $region68
      $region67: #{encoder_block_forward.3} parent=5 // pred_region
        %s3581 = ssub.s32 %s20, 2
        // Predicated region
        $region69: #{encoder_block_forward.3} parent=67 // pred_check
          %p3582 = pneg %p159
        $region70: #{encoder_block_forward.3} parent=67 // pred_check_branch
          %3584 = sbr.rel (%p3582) target = $region72
        $region71: #{encoder_block_forward.3} parent=67 // pred_region
          %s3585 = sand.u32 %s144, 1
          %s3586 = scalar_lea.sflag [#allocation7], %s3585
          %s3587 = sand.u32 %s144, 1
          %s3588 = smul.addr %s3587, 64
          %s3589 = scalar_lea.vmem [#allocation15], %s3588
          %3590 = dma.done %s3586, 1024
        $region72: #{encoder_block_forward.3} parent=67 // pred_fallthru
          _
      $region68: #{encoder_block_forward.3} parent=5 // pred_fallthru
        _
    $region6: #{encoder_block_forward.3} parent=1 // loop_footer
      %s24 = sadd.s32 1, %s20
    $region7: #{encoder_block_forward.3} parent=1 // loop_footer_branch
      %19 = sbr.rel target = $region3
    $region8: #{encoder_block_forward.3} parent=1 // loop_exit
      _
    %3591 = vsyncpa [#allocation6], 1
    %s3592 = scalar_lea.sflag [#allocation6], 1
    %3593 = vsyncpa %s3592, 1
    %3594 = vsyncpa [#allocation10], 1
    %3595 = vsyncpa [#allocation13], 1
    %3596 = vsyncpa [#allocation7], 1
    %s3597 = scalar_lea.sflag [#allocation7], 1
    %3598 = vsyncpa %s3597, 1
    %3599 = vsyncpa [#allocation8], 1
    %s3600 = scalar_lea.sflag [#allocation8], 1
    %3601 = vsyncpa %s3600, 1

</llo_original>
